<compile_context>
chip_gen: v7x
topology: tpu7x:2x2x1
jax: 0.10.0
libtpu: 0.0.40
codegen_flags: <defaults>
</compile_context>

<pallas_src>
import functools
import math

import jax
import jax.numpy as jnp
from jax.experimental import pallas as pl
from jax.experimental.pallas import tpu as pltpu


# ----------------------------- safe elementwise ------------------------------ #

def _sigmoid(v):
    return 1.0 / (1.0 + jnp.exp(-v))


def _silu(v):
    return v * _sigmoid(v)


def _softplus(v):
    # stable log(1 + exp(v)) using only exp/log/abs/max
    return jnp.maximum(v, 0.0) + jnp.log(1.0 + jnp.exp(-jnp.abs(v)))


def _erf(v):
    # Abramowitz & Stegun 7.1.26, |error| <= 1.5e-7
    a1, a2, a3, a4, a5 = 0.254829592, -0.284496736, 1.421413741, -1.453152027, 1.061405429
    t = 1.0 / (1.0 + 0.3275911 * jnp.abs(v))
    poly = ((((a5 * t + a4) * t + a3) * t + a2) * t + a1) * t
    e = 1.0 - poly * jnp.exp(-(v * v))
    return jnp.where(v >= 0.0, e, -e)


# ------------------------------- Pallas kernel ------------------------------- #

def _ssmamba_kernel(x_ref,        # (C, R)   raw windowed tokens (shortcut)
                    ln_ref,       # (4, C, 1)  n1_g | n1_b | n2_g | n2_b
                    bw_ref,       # (3, 4*D2, C)  fused [inp | <<1 | >>1 | D] proj
                    taps_ref,     # (3, 4, R)     conv taps [w_left,w_ctr,w_right,bias]
                    clw_ref,      # (3, D2, D2)   conv_linear
                    s6w_ref,      # (3, D2+2N, D2)  fused fc1|fc2|fc3
                    opw_ref,      # (3, C, D2)    out_proj
                    bv_ref,       # (3, P, 1)     consolidated per-block biases
                    m1w_ref,      # (Hid, C)
                    m2w_ref,      # (C, Hid)
                    mb_ref,       # (Hid + C, 1)  mlp biases
                    o_ref,        # (C, R)
                    *, d_model, state_size, hidden, compute_dtype):
    eps = 1e-5
    C = d_model
    D2 = 2 * C
    N = state_size
    cd = compute_dtype

    def mm(w, a):  # (out, in) @ (in, R) -> (out, R), f32 accumulation
        return jnp.dot(w.astype(cd), a.astype(cd), preferred_element_type=jnp.float32)

    def layernorm(t, g, b):  # normalize over channels (axis 0), single pass
        mu = jnp.mean(t, axis=0, keepdims=True)
        var = jnp.mean(t * t, axis=0, keepdims=True) - mu * mu
        return (t - mu) * jax.lax.rsqrt(var + eps) * g + b

    # static row offsets inside the consolidated per-block bias vector
    o_rms = 0
    o_big = o_rms + C
    o_cl = o_big + 4 * D2
    o_s6 = o_cl + D2
    o_op = o_s6 + (D2 + 2 * N)

    sc = x_ref[...]                                       # (C, R) shortcut
    x = layernorm(sc, ln_ref[0], ln_ref[1])               # norm1

    for b in range(3):                                    # 3 MambaBlocks (unrolled)
        bv = bv_ref[b]                                    # (P, 1)
        # RMSNorm over channels
        xn = x * jax.lax.rsqrt(jnp.mean(x * x, axis=0, keepdims=True) + eps) * bv[o_rms:o_big]

        # Fused projection rows: [ inp_proj | inp_proj shifted -1 | +1 | D ]
        # (the +-1 feature shifts of the grouped conv are folded into the
        #  weights via exact 0/1 shift matrices in the wrapper)
        big = mm(bw_ref[b], xn) + bv[o_big:o_cl]          # (4*D2, R)
        xp = big[0 * D2:1 * D2]
        left = big[1 * D2:2 * D2]                         # previous feature (zero-padded)
        right = big[2 * D2:3 * D2]                        # next feature (zero-padded)
        dres = big[3 * D2:4 * D2]                         # D(x)

        # Conv1d(seq_len, seq_len, k=3, pad=1, groups=seq_len): depthwise conv
        # along the FEATURE axis with per-token-position taps, + SiLU.
        taps = taps_ref[b]                                # (4, R)
        xc = taps[0:1] * left + taps[1:2] * xp + taps[2:3] * right + taps[3:4]
        xc = _silu(xc)

        xco = mm(clw_ref[b], xc) + bv[o_cl:o_s6]          # conv_linear -> (D2, R)

        # S6 with fused fc1|fc2|fc3 (h starts at zeros -> exp(delta*A)*h == 0)
        s6 = mm(s6w_ref[b], xco) + bv[o_s6:o_op]          # (D2 + 2N, R)
        delta = _softplus(s6[:D2])
        Bm = s6[D2:D2 + N]
        Cm = s6[D2 + N:D2 + 2 * N]
        y = xco * delta * jnp.sum(Bm * Cm, axis=0, keepdims=True)

        comb = _silu(y) * _silu(dres)                     # SiLU gating
        x = mm(opw_ref[b], comb) + bv[o_op:o_op + C]      # out_proj -> (C, R)

    # Fused tail: norm2 + residual + MLP (exact GELU) + residual
    mb = mb_ref[...]
    t = sc + layernorm(x, ln_ref[2], ln_ref[3])
    h = mm(m1w_ref[...], t) + mb[:hidden]
    h = 0.5 * h * (1.0 + _erf(h * (1.0 / math.sqrt(2.0))))
    o_ref[...] = t + mm(m2w_ref[...], h) + mb[hidden:hidden + C]


# -------------------------------- JAX wrapper -------------------------------- #

def _rep_spec(a):
    nd = a.ndim
    return pl.BlockSpec(a.shape, lambda i, _nd=nd: (0,) * _nd)


def _ceil_div(a, b):
    return -(-a // b)


def ssmamba_forward(x, params, window_size, shift_size=0,
                    compute_dtype=jnp.float32, rows_per_block=None):
    B, C, H, W = x.shape
    ws = window_size
    p = params
    D2 = 2 * C
    N = p['f2_w'].shape[-1]
    Hid = p['mlp1_w'].shape[-1]
    L = ws * ws

    # ---- fused / transposed weights (tiny, traced once) ----
    eye_up = jnp.eye(D2, k=1, dtype=jnp.float32)    # column j picks feature j-1
    eye_dn = jnp.eye(D2, k=-1, dtype=jnp.float32)   # column j picks feature j+1
    big_w = jnp.concatenate(
        [p['ip_w'],
         jnp.einsum('bij,jk->bik', p['ip_w'], eye_up),
         jnp.einsum('bij,jk->bik', p['ip_w'], eye_dn),
         p['d_w']], axis=-1)                                        # (3, C, 4*D2)
    big_b = jnp.concatenate(
        [p['ip_b'],
         jnp.einsum('bij,jk->bik', p['ip_b'], eye_up),
         jnp.einsum('bij,jk->bik', p['ip_b'], eye_dn),
         p['d_b']], axis=-1)                                        # (3, 1, 4*D2)
    s6_w = jnp.concatenate([p['f1_w'], p['f2_w'], p['f3_w']], axis=-1)   # (3, D2, D2+2N)
    s6_b = jnp.concatenate([p['f1_b'], p['f2_b'], p['f3_b']], axis=-1)   # (3, 1, D2+2N)

    big_w_t = jnp.transpose(big_w, (0, 2, 1))                       # (3, 4*D2, C)
    cl_w_t = jnp.transpose(p['cl_w'], (0, 2, 1))                    # (3, D2, D2)
    s6_w_t = jnp.transpose(s6_w, (0, 2, 1))                         # (3, D2+2N, D2)
    op_w_t = jnp.transpose(p['op_w'], (0, 2, 1))                    # (3, C, D2)
    m1_w_t = p['mlp1_w'].T                                          # (Hid, C)
    m2_w_t = p['mlp2_w'].T                                          # (C, Hid)

    # consolidated per-block bias/gain column vector (rows: rms|big|cl|s6|op)
    bvec = jnp.concatenate(
        [jnp.transpose(p['rms_w'], (0, 2, 1)),                      # (3, C, 1)
         jnp.transpose(big_b, (0, 2, 1)),                           # (3, 4*D2, 1)
         jnp.transpose(p['cl_b'], (0, 2, 1)),                       # (3, D2, 1)
         jnp.transpose(s6_b, (0, 2, 1)),                            # (3, D2+2N, 1)
         jnp.transpose(p['op_b'], (0, 2, 1))], axis=1)              # (3, P, 1)

    ln = jnp.stack([p['n1_g'][0], p['n1_b'][0],
                    p['n2_g'][0], p['n2_b'][0]])[..., None]         # (4, C, 1)
    mbias = jnp.concatenate([p['mlp1_b'][0], p['mlp2_b'][0]])[:, None]  # (Hid+C, 1)

    # ---- window partition (pad + optional shift) ----
    xhw = jnp.transpose(x, (0, 2, 3, 1))                            # (B, H, W, C)
    pad_r = (ws - W % ws) % ws
    pad_b = (ws - H % ws) % ws
    xpad = jnp.pad(xhw, ((0, 0), (0, pad_b), (0, pad_r), (0, 0)))
    Hp, Wp = H + pad_b, W + pad_r
    if shift_size > 0:
        xpad = jnp.roll(xpad, (-shift_size, -shift_size), axis=(1, 2))
    xw = xpad.reshape(B, Hp // ws, ws, Wp // ws, ws, C)
    xw = xw.transpose(0, 1, 3, 2, 4, 5).reshape(-1, L, C)           # (NW, L, C)
    NW = xw.shape[0]

    # ---- block sizing: Wb windows (= Wb*L lane-dense token columns) / step ----
    if rows_per_block is None:
        kind = ""
        try:
            kind = jax.devices()[0].device_kind.lower()
        except Exception:
            pass
        rows_per_block = 4096 if "v7" in kind else 8192             # v7x: 64 MiB VMEM

    g = 128 // math.gcd(L, 128)            # Wb granularity so R = Wb*L is %128==0
    Wb = max(g, (rows_per_block // L) // g * g)
    Wb = min(Wb, _ceil_div(NW, g) * g)     # keep padding minimal for small problems
    NWp = _ceil_div(NW, Wb) * Wb
    R = Wb * L
    G = NWp // Wb

    # tokens transposed to lane-dense (C, T) layout
    xtok_t = xw.reshape(NW * L, C).T                                # (C, NW*L)
    if NWp != NW:
        xtok_t = jnp.pad(xtok_t, ((0, 0), (0, (NWp - NW) * L)))

    # per-window-position conv taps, packed lane-dense: (3, 4, R)
    taps = jnp.concatenate([p['conv_w'], p['conv_b']], axis=-1)     # (3, L, 4)
    taps_t = jnp.tile(jnp.transpose(taps, (0, 2, 1)), (1, 1, Wb))   # (3, 4, R)

    weights = (ln, big_w_t, taps_t, cl_w_t, s6_w_t, op_w_t, bvec,
               m1_w_t, m2_w_t, mbias)

    kern = functools.partial(_ssmamba_kernel, d_model=C, state_size=N,
                             hidden=Hid, compute_dtype=compute_dtype)

    out_t = pl.pallas_call(
        kern,
        out_shape=jax.ShapeDtypeStruct((C, NWp * L), jnp.float32),
        grid_spec=pltpu.PrefetchScalarGridSpec(
            num_scalar_prefetch=0,
            grid=(G,),
            in_specs=[pl.BlockSpec((C, R), lambda i: (0, i))]
                     + [_rep_spec(a) for a in weights],
            out_specs=pl.BlockSpec((C, R), lambda i: (0, i)),
        ),
        compiler_params=pltpu.CompilerParams(
            dimension_semantics=("parallel",),
            vmem_limit_bytes=32 * 1024 * 1024,
        ),
    )(xtok_t, *weights)

    # ---- window reverse (+ unshift, crop) and back to NCHW ----
    out_tok = out_t[:, :NW * L].T                                   # (NW*L, C)
    out = out_tok.reshape(B, Hp // ws, Wp // ws, ws, ws, C)
    out = out.transpose(0, 1, 3, 2, 4, 5).reshape(B, Hp, Wp, C)
    if shift_size > 0:
        out = jnp.roll(out, (shift_size, shift_size), axis=(1, 2))
    out = out[:, :H, :W, :]
    return out.transpose(0, 3, 1, 2)


# --------------------------- parameter construction -------------------------- #
# Linear weights are stored pre-transposed as (in_features, out_features).

def init_params(key, dim, window_size, state_size, mlp_ratio=4.0):
    C, D2, N = dim, 2 * dim, state_size
    L = window_size * window_size
    Hid = int(dim * mlp_ratio)
    keys = list(jax.random.split(key, 24))

    def rnd(shape, scale=0.1):
        return (scale * jax.random.normal(keys.pop(), shape)).astype(jnp.float32)

    p = {}
    p['n1_g'] = jnp.ones((1, C), jnp.float32)
    p['n1_b'] = jnp.zeros((1, C), jnp.float32)
    p['n2_g'] = jnp.ones((1, C), jnp.float32)
    p['n2_b'] = jnp.zeros((1, C), jnp.float32)
    p['rms_w'] = jnp.ones((3, 1, C), jnp.float32)          # RMSNorm weight = ones
    p['ip_w'] = rnd((3, C, D2));  p['ip_b'] = rnd((3, 1, D2))
    p['conv_w'] = rnd((3, L, 3), 0.3); p['conv_b'] = rnd((3, L, 1))
    p['cl_w'] = rnd((3, D2, D2)); p['cl_b'] = rnd((3, 1, D2))
    p['f1_w'] = rnd((3, D2, D2)); p['f1_b'] = rnd((3, 1, D2))
    p['f2_w'] = rnd((3, D2, N));  p['f2_b'] = rnd((3, 1, N))
    p['f3_w'] = rnd((3, D2, N));  p['f3_b'] = rnd((3, 1, N))
    p['d_w'] = rnd((3, C, D2));   p['d_b'] = rnd((3, 1, D2))
    p['op_w'] = rnd((3, D2, C))
    p['op_b'] = jnp.ones((3, 1, C), jnp.float32)           # nn.init.constant_(out_proj.bias, 1.0)
    p['mlp1_w'] = rnd((C, Hid));  p['mlp1_b'] = rnd((1, Hid))
    p['mlp2_w'] = rnd((Hid, C));  p['mlp2_b'] = rnd((1, C))
    return p


# ----------------------------- pure-JAX reference ---------------------------- #

def reference_forward(x, p, ws):
    B, C, H, W = x.shape

    def layernorm(t, g, b):
        mu = t.mean(-1, keepdims=True)
        var = ((t - mu) ** 2).mean(-1, keepdims=True)
        return (t - mu) / jnp.sqrt(var + 1e-5) * g + b

    def rmsnorm(t, w):
        return t * jax.lax.rsqrt((t * t).mean(-1, keepdims=True) + 1e-5) * w

    def silu(t):
        return t * jax.nn.sigmoid(t)

    xhw = jnp.transpose(x, (0, 2, 3, 1)).reshape(B, H * W, C)
    xn = layernorm(xhw, p['n1_g'][0], p['n1_b'][0]).reshape(B, H, W, C)
    xw = xn.reshape(B, H // ws, ws, W // ws, ws, C).transpose(0, 1, 3, 2, 4, 5)
    xcur = xw.reshape(-1, ws * ws, C)
    for b in range(3):
        t = rmsnorm(xcur, p['rms_w'][b])
        xp_ = t @ p['ip_w'][b] + p['ip_b'][b]
        padded = jnp.pad(xp_, ((0, 0), (0, 0), (1, 1)))
        w = p['conv_w'][b]
        xc = (w[None, :, 0:1] * padded[:, :, :-2] + w[None, :, 1:2] * padded[:, :, 1:-1]
              + w[None, :, 2:3] * padded[:, :, 2:]) + p['conv_b'][b][None]
        xc = silu(xc)
        xco = xc @ p['cl_w'][b] + p['cl_b'][b]
        Bm = xco @ p['f2_w'][b] + p['f2_b'][b]
        Cm = xco @ p['f3_w'][b] + p['f3_b'][b]
        delta = jax.nn.softplus(xco @ p['f1_w'][b] + p['f1_b'][b])
        dB = jnp.einsum('wld,wln->wldn', delta, Bm)
        h = xco[..., None] * dB
        y = jnp.einsum('wln,wldn->wld', Cm, h)
        x_res = silu(t @ p['d_w'][b] + p['d_b'][b])
        xcur = (silu(y) * x_res) @ p['op_w'][b] + p['op_b'][b]
    xr = xcur.reshape(B, H // ws, W // ws, ws, ws, C).transpose(0, 1, 3, 2, 4, 5)
    xr = xr.reshape(B, H, W, C)
    sc = jnp.transpose(x, (0, 2, 3, 1))
    t = sc + layernorm(xr.reshape(B, H * W, C), p['n2_g'][0], p['n2_b'][0]).reshape(B, H, W, C)
    tok = t.reshape(B * H * W, C)
    hm = tok @ p['mlp1_w'] + p['mlp1_b']
    hm = 0.5 * hm * (1.0 + jax.lax.erf(hm / math.sqrt(2.0)))
    om = hm @ p['mlp2_w'] + p['mlp2_b']
    return (tok + om).reshape(B, H, W, C).transpose(0, 3, 1, 2)


# ------------------------------------ main ------------------------------------ #

if __name__ == "__main__":
    dim = 8            # channels C = d_model
    window_size = 4    # -> seq_len L = 16
    B, H, W = 2, 8, 8  # divisible by window_size -> no pad, shift_size = 0

    key = jax.random.PRNGKey(0)
    kx, kp = jax.random.split(key)
    x = jax.random.normal(kx, (B, dim, H, W), dtype=jnp.float32)
    params = init_params(kp, dim, window_size, state_size=dim, mlp_ratio=4.0)

    fwd = jax.jit(functools.partial(ssmamba_forward,
                                    window_size=window_size, shift_size=0))
    out = jax.block_until_ready(fwd(x, params))
    assert out.shape == (B, dim, H, W)

    ref = reference_forward(x, params, window_size)
    max_err = float(jnp.max(jnp.abs(out - ref)))
    if not (max_err < 2e-3):
        raise AssertionError(f"mismatch vs reference: max_err={max_err}")

    print("KERNEL_OK")
</pallas_src>

<mosaic_0001>
module attributes {stable_mosaic.version = 11 : i64} {
  func.func @_ssmamba_kernel(%arg0: i32, %arg1: memref<8x128xf32, #tpu.memory_space<vmem>>, %arg2: memref<4x8x1xf32, #tpu.memory_space<vmem>>, %arg3: memref<3x64x8xf32, #tpu.memory_space<vmem>>, %arg4: memref<3x4x128xf32, #tpu.memory_space<vmem>>, %arg5: memref<3x16x16xf32, #tpu.memory_space<vmem>>, %arg6: memref<3x32x16xf32, #tpu.memory_space<vmem>>, %arg7: memref<3x8x16xf32, #tpu.memory_space<vmem>>, %arg8: memref<3x128x1xf32, #tpu.memory_space<vmem>>, %arg9: memref<32x8xf32, #tpu.memory_space<vmem>>, %arg10: memref<8x32xf32, #tpu.memory_space<vmem>>, %arg11: memref<40x1xf32, #tpu.memory_space<vmem>>, %arg12: memref<8x128xf32, #tpu.memory_space<vmem>>) attributes {dimension_semantics = [#tpu.dimension_semantics<parallel>], iteration_bounds = array<i64: 1>, scalar_prefetch = 0 : i64, scratch_operands = 0 : i64, tpu.core_type = #tpu.core_type<tc>, window_params = [{transform_indices = @transform_0, window_bounds = array<i64: 8, 128>}, {pipeline_mode = #tpu.pipeline_mode<synchronous>, transform_indices = @transform_1, window_bounds = array<i64: 4, 8, 1>}, {pipeline_mode = #tpu.pipeline_mode<synchronous>, transform_indices = @transform_2, window_bounds = array<i64: 3, 64, 8>}, {pipeline_mode = #tpu.pipeline_mode<synchronous>, transform_indices = @transform_3, window_bounds = array<i64: 3, 4, 128>}, {pipeline_mode = #tpu.pipeline_mode<synchronous>, transform_indices = @transform_4, window_bounds = array<i64: 3, 16, 16>}, {pipeline_mode = #tpu.pipeline_mode<synchronous>, transform_indices = @transform_5, window_bounds = array<i64: 3, 32, 16>}, {pipeline_mode = #tpu.pipeline_mode<synchronous>, transform_indices = @transform_6, window_bounds = array<i64: 3, 8, 16>}, {pipeline_mode = #tpu.pipeline_mode<synchronous>, transform_indices = @transform_7, window_bounds = array<i64: 3, 128, 1>}, {pipeline_mode = #tpu.pipeline_mode<synchronous>, transform_indices = @transform_8, window_bounds = array<i64: 32, 8>}, {pipeline_mode = #tpu.pipeline_mode<synchronous>, transform_indices = @transform_9, window_bounds = array<i64: 8, 32>}, {pipeline_mode = #tpu.pipeline_mode<synchronous>, transform_indices = @transform_10, window_bounds = array<i64: 40, 1>}, {transform_indices = @transform_11, window_bounds = array<i64: 8, 128>}]} {
    %c0 = arith.constant 0 : index
    %c0_0 = arith.constant 0 : index
    %0 = vector.load %arg1[%c0, %c0_0] : memref<8x128xf32, #tpu.memory_space<vmem>>, vector<8x128xf32>
    %c0_1 = arith.constant 0 : index
    %c0_2 = arith.constant 0 : index
    %c0_3 = arith.constant 0 : index
    %1 = vector.load %arg2[%c0_1, %c0_2, %c0_3] : memref<4x8x1xf32, #tpu.memory_space<vmem>>, vector<1x8x1xf32>
    %2 = vector.shape_cast %1 : vector<1x8x1xf32> to vector<8x1xf32>
    %c1 = arith.constant 1 : index
    %c0_4 = arith.constant 0 : index
    %c0_5 = arith.constant 0 : index
    %3 = vector.load %arg2[%c1, %c0_4, %c0_5] : memref<4x8x1xf32, #tpu.memory_space<vmem>>, vector<1x8x1xf32>
    %4 = vector.shape_cast %3 : vector<1x8x1xf32> to vector<8x1xf32>
    %cst = arith.constant dense<0.000000e+00> : vector<128xf32>
    %5 = vector.multi_reduction <add>, %0, %cst [0] : vector<8x128xf32> to vector<128xf32>
    %6 = vector.shape_cast %5 : vector<128xf32> to vector<1x128xf32>
    %cst_6 = arith.constant 8.000000e+00 : f32
    %7 = vector.broadcast %cst_6 : f32 to vector<1x128xf32>
    %8 = arith.divf %6, %7 : vector<1x128xf32>
    %9 = arith.mulf %0, %0 : vector<8x128xf32>
    %cst_7 = arith.constant dense<0.000000e+00> : vector<128xf32>
    %10 = vector.multi_reduction <add>, %9, %cst_7 [0] : vector<8x128xf32> to vector<128xf32>
    %11 = vector.shape_cast %10 : vector<128xf32> to vector<1x128xf32>
    %cst_8 = arith.constant 8.000000e+00 : f32
    %12 = vector.broadcast %cst_8 : f32 to vector<1x128xf32>
    %13 = arith.divf %11, %12 : vector<1x128xf32>
    %14 = arith.mulf %8, %8 : vector<1x128xf32>
    %15 = arith.subf %13, %14 : vector<1x128xf32>
    %16 = vector.broadcast %8 : vector<1x128xf32> to vector<8x128xf32>
    %17 = arith.subf %0, %16 : vector<8x128xf32>
    %cst_9 = arith.constant 9.99999974E-6 : f32
    %18 = vector.broadcast %cst_9 : f32 to vector<1x128xf32>
    %19 = arith.addf %15, %18 : vector<1x128xf32>
    %20 = math.rsqrt %19 : vector<1x128xf32>
    %21 = vector.broadcast %20 : vector<1x128xf32> to vector<8x128xf32>
    %22 = arith.mulf %17, %21 : vector<8x128xf32>
    %23 = vector.broadcast %2 : vector<8x1xf32> to vector<8x128xf32>
    %24 = arith.mulf %22, %23 : vector<8x128xf32>
    %25 = vector.broadcast %4 : vector<8x1xf32> to vector<8x128xf32>
    %26 = arith.addf %24, %25 : vector<8x128xf32>
    %c0_10 = arith.constant 0 : index
    %c0_11 = arith.constant 0 : index
    %c0_12 = arith.constant 0 : index
    %27 = vector.load %arg8[%c0_10, %c0_11, %c0_12] : memref<3x128x1xf32, #tpu.memory_space<vmem>>, vector<1x128x1xf32>
    %28 = vector.shape_cast %27 : vector<1x128x1xf32> to vector<128x1xf32>
    %29 = arith.mulf %26, %26 : vector<8x128xf32>
    %cst_13 = arith.constant dense<0.000000e+00> : vector<128xf32>
    %30 = vector.multi_reduction <add>, %29, %cst_13 [0] : vector<8x128xf32> to vector<128xf32>
    %31 = vector.shape_cast %30 : vector<128xf32> to vector<1x128xf32>
    %cst_14 = arith.constant 8.000000e+00 : f32
    %32 = vector.broadcast %cst_14 : f32 to vector<1x128xf32>
    %33 = arith.divf %31, %32 : vector<1x128xf32>
    %cst_15 = arith.constant 9.99999974E-6 : f32
    %34 = vector.broadcast %cst_15 : f32 to vector<1x128xf32>
    %35 = arith.addf %33, %34 : vector<1x128xf32>
    %36 = math.rsqrt %35 : vector<1x128xf32>
    %37 = vector.broadcast %36 : vector<1x128xf32> to vector<8x128xf32>
    %38 = arith.mulf %26, %37 : vector<8x128xf32>
    %39 = vector.extract_strided_slice %28 {offsets = [0, 0], sizes = [8, 1], strides = [1, 1]} : vector<128x1xf32> to vector<8x1xf32>
    %40 = vector.broadcast %39 : vector<8x1xf32> to vector<8x128xf32>
    %41 = arith.mulf %38, %40 : vector<8x128xf32>
    %c0_16 = arith.constant 0 : index
    %c0_17 = arith.constant 0 : index
    %c0_18 = arith.constant 0 : index
    %42 = vector.load %arg3[%c0_16, %c0_17, %c0_18] : memref<3x64x8xf32, #tpu.memory_space<vmem>>, vector<1x64x8xf32>
    %43 = vector.shape_cast %42 : vector<1x64x8xf32> to vector<64x8xf32>
    %cst_19 = arith.constant dense<0.000000e+00> : vector<64x128xf32>
    %44 = tpu.matmul %43, %41, %cst_19 {dimension_numbers = #tpu.dot_dimension_numbers<[1], [0], [0], [1], [0, 0, 1, 1], [], []>} : vector<64x8xf32>, vector<8x128xf32>, vector<64x128xf32> -> vector<64x128xf32>
    %45 = vector.extract_strided_slice %28 {offsets = [8, 0], sizes = [64, 1], strides = [1, 1]} : vector<128x1xf32> to vector<64x1xf32>
    %46 = vector.broadcast %45 : vector<64x1xf32> to vector<64x128xf32>
    %47 = arith.addf %44, %46 : vector<64x128xf32>
    %48 = vector.extract_strided_slice %47 {offsets = [0, 0], sizes = [16, 128], strides = [1, 1]} : vector<64x128xf32> to vector<16x128xf32>
    %49 = vector.extract_strided_slice %47 {offsets = [16, 0], sizes = [16, 128], strides = [1, 1]} : vector<64x128xf32> to vector<16x128xf32>
    %50 = vector.extract_strided_slice %47 {offsets = [32, 0], sizes = [16, 128], strides = [1, 1]} : vector<64x128xf32> to vector<16x128xf32>
    %51 = vector.extract_strided_slice %47 {offsets = [48, 0], sizes = [16, 128], strides = [1, 1]} : vector<64x128xf32> to vector<16x128xf32>
    %c0_20 = arith.constant 0 : index
    %c0_21 = arith.constant 0 : index
    %c0_22 = arith.constant 0 : index
    %52 = vector.load %arg4[%c0_20, %c0_21, %c0_22] : memref<3x4x128xf32, #tpu.memory_space<vmem>>, vector<1x4x128xf32>
    %53 = vector.shape_cast %52 : vector<1x4x128xf32> to vector<4x128xf32>
    %54 = vector.extract_strided_slice %53 {offsets = [0, 0], sizes = [1, 128], strides = [1, 1]} : vector<4x128xf32> to vector<1x128xf32>
    %55 = vector.broadcast %54 : vector<1x128xf32> to vector<16x128xf32>
    %56 = arith.mulf %55, %49 : vector<16x128xf32>
    %57 = vector.extract_strided_slice %53 {offsets = [1, 0], sizes = [1, 128], strides = [1, 1]} : vector<4x128xf32> to vector<1x128xf32>
    %58 = vector.broadcast %57 : vector<1x128xf32> to vector<16x128xf32>
    %59 = arith.mulf %58, %48 : vector<16x128xf32>
    %60 = arith.addf %56, %59 : vector<16x128xf32>
    %61 = vector.extract_strided_slice %53 {offsets = [2, 0], sizes = [1, 128], strides = [1, 1]} : vector<4x128xf32> to vector<1x128xf32>
    %62 = vector.broadcast %61 : vector<1x128xf32> to vector<16x128xf32>
    %63 = arith.mulf %62, %50 : vector<16x128xf32>
    %64 = arith.addf %60, %63 : vector<16x128xf32>
    %65 = vector.extract_strided_slice %53 {offsets = [3, 0], sizes = [1, 128], strides = [1, 1]} : vector<4x128xf32> to vector<1x128xf32>
    %66 = vector.broadcast %65 : vector<1x128xf32> to vector<16x128xf32>
    %67 = arith.addf %64, %66 : vector<16x128xf32>
    %cst_23 = arith.constant 0.000000e+00 : f32
    %68 = vector.broadcast %cst_23 : f32 to vector<16x128xf32>
    %69 = arith.subf %68, %67 : vector<16x128xf32>
    %70 = math.exp %69 : vector<16x128xf32>
    %cst_24 = arith.constant 1.000000e+00 : f32
    %71 = vector.broadcast %cst_24 : f32 to vector<16x128xf32>
    %72 = arith.addf %71, %70 : vector<16x128xf32>
    %cst_25 = arith.constant 1.000000e+00 : f32
    %73 = vector.broadcast %cst_25 : f32 to vector<16x128xf32>
    %74 = arith.divf %73, %72 : vector<16x128xf32>
    %75 = arith.mulf %67, %74 : vector<16x128xf32>
    %c0_26 = arith.constant 0 : index
    %c0_27 = arith.constant 0 : index
    %c0_28 = arith.constant 0 : index
    %76 = vector.load %arg5[%c0_26, %c0_27, %c0_28] : memref<3x16x16xf32, #tpu.memory_space<vmem>>, vector<1x16x16xf32>
    %77 = vector.shape_cast %76 : vector<1x16x16xf32> to vector<16x16xf32>
    %cst_29 = arith.constant dense<0.000000e+00> : vector<16x128xf32>
    %78 = tpu.matmul %77, %75, %cst_29 {dimension_numbers = #tpu.dot_dimension_numbers<[1], [0], [0], [1], [0, 0, 1, 1], [], []>} : vector<16x16xf32>, vector<16x128xf32>, vector<16x128xf32> -> vector<16x128xf32>
    %79 = vector.extract_strided_slice %28 {offsets = [72, 0], sizes = [16, 1], strides = [1, 1]} : vector<128x1xf32> to vector<16x1xf32>
    %80 = vector.broadcast %79 : vector<16x1xf32> to vector<16x128xf32>
    %81 = arith.addf %78, %80 : vector<16x128xf32>
    %c0_30 = arith.constant 0 : index
    %c0_31 = arith.constant 0 : index
    %c0_32 = arith.constant 0 : index
    %82 = vector.load %arg6[%c0_30, %c0_31, %c0_32] : memref<3x32x16xf32, #tpu.memory_space<vmem>>, vector<1x32x16xf32>
    %83 = vector.shape_cast %82 : vector<1x32x16xf32> to vector<32x16xf32>
    %cst_33 = arith.constant dense<0.000000e+00> : vector<32x128xf32>
    %84 = tpu.matmul %83, %81, %cst_33 {dimension_numbers = #tpu.dot_dimension_numbers<[1], [0], [0], [1], [0, 0, 1, 1], [], []>} : vector<32x16xf32>, vector<16x128xf32>, vector<32x128xf32> -> vector<32x128xf32>
    %85 = vector.extract_strided_slice %28 {offsets = [88, 0], sizes = [32, 1], strides = [1, 1]} : vector<128x1xf32> to vector<32x1xf32>
    %86 = vector.broadcast %85 : vector<32x1xf32> to vector<32x128xf32>
    %87 = arith.addf %84, %86 : vector<32x128xf32>
    %88 = vector.extract_strided_slice %87 {offsets = [0, 0], sizes = [16, 128], strides = [1, 1]} : vector<32x128xf32> to vector<16x128xf32>
    %cst_34 = arith.constant 0.000000e+00 : f32
    %89 = vector.broadcast %cst_34 : f32 to vector<16x128xf32>
    %90 = arith.maximumf %88, %89 : vector<16x128xf32>
    %91 = math.absf %88 : vector<16x128xf32>
    %cst_35 = arith.constant 0.000000e+00 : f32
    %92 = vector.broadcast %cst_35 : f32 to vector<16x128xf32>
    %93 = arith.subf %92, %91 : vector<16x128xf32>
    %94 = math.exp %93 : vector<16x128xf32>
    %cst_36 = arith.constant 1.000000e+00 : f32
    %95 = vector.broadcast %cst_36 : f32 to vector<16x128xf32>
    %96 = arith.addf %95, %94 : vector<16x128xf32>
    %97 = math.log %96 : vector<16x128xf32>
    %98 = arith.addf %90, %97 : vector<16x128xf32>
    %99 = vector.extract_strided_slice %87 {offsets = [16, 0], sizes = [8, 128], strides = [1, 1]} : vector<32x128xf32> to vector<8x128xf32>
    %100 = vector.extract_strided_slice %87 {offsets = [24, 0], sizes = [8, 128], strides = [1, 1]} : vector<32x128xf32> to vector<8x128xf32>
    %101 = arith.mulf %81, %98 : vector<16x128xf32>
    %102 = arith.mulf %99, %100 : vector<8x128xf32>
    %cst_37 = arith.constant dense<0.000000e+00> : vector<128xf32>
    %103 = vector.multi_reduction <add>, %102, %cst_37 [0] : vector<8x128xf32> to vector<128xf32>
    %104 = vector.shape_cast %103 : vector<128xf32> to vector<1x128xf32>
    %105 = vector.broadcast %104 : vector<1x128xf32> to vector<16x128xf32>
    %106 = arith.mulf %101, %105 : vector<16x128xf32>
    %cst_38 = arith.constant 0.000000e+00 : f32
    %107 = vector.broadcast %cst_38 : f32 to vector<16x128xf32>
    %108 = arith.subf %107, %106 : vector<16x128xf32>
    %109 = math.exp %108 : vector<16x128xf32>
    %cst_39 = arith.constant 1.000000e+00 : f32
    %110 = vector.broadcast %cst_39 : f32 to vector<16x128xf32>
    %111 = arith.addf %110, %109 : vector<16x128xf32>
    %cst_40 = arith.constant 1.000000e+00 : f32
    %112 = vector.broadcast %cst_40 : f32 to vector<16x128xf32>
    %113 = arith.divf %112, %111 : vector<16x128xf32>
    %114 = arith.mulf %106, %113 : vector<16x128xf32>
    %cst_41 = arith.constant 0.000000e+00 : f32
    %115 = vector.broadcast %cst_41 : f32 to vector<16x128xf32>
    %116 = arith.subf %115, %51 : vector<16x128xf32>
    %117 = math.exp %116 : vector<16x128xf32>
    %cst_42 = arith.constant 1.000000e+00 : f32
    %118 = vector.broadcast %cst_42 : f32 to vector<16x128xf32>
    %119 = arith.addf %118, %117 : vector<16x128xf32>
    %cst_43 = arith.constant 1.000000e+00 : f32
    %120 = vector.broadcast %cst_43 : f32 to vector<16x128xf32>
    %121 = arith.divf %120, %119 : vector<16x128xf32>
    %122 = arith.mulf %51, %121 : vector<16x128xf32>
    %123 = arith.mulf %114, %122 : vector<16x128xf32>
    %c0_44 = arith.constant 0 : index
    %c0_45 = arith.constant 0 : index
    %c0_46 = arith.constant 0 : index
    %124 = vector.load %arg7[%c0_44, %c0_45, %c0_46] : memref<3x8x16xf32, #tpu.memory_space<vmem>>, vector<1x8x16xf32>
    %125 = vector.shape_cast %124 : vector<1x8x16xf32> to vector<8x16xf32>
    %cst_47 = arith.constant dense<0.000000e+00> : vector<8x128xf32>
    %126 = tpu.matmul %125, %123, %cst_47 {dimension_numbers = #tpu.dot_dimension_numbers<[1], [0], [0], [1], [0, 0, 1, 1], [], []>} : vector<8x16xf32>, vector<16x128xf32>, vector<8x128xf32> -> vector<8x128xf32>
    %127 = vector.extract_strided_slice %28 {offsets = [120, 0], sizes = [8, 1], strides = [1, 1]} : vector<128x1xf32> to vector<8x1xf32>
    %128 = vector.broadcast %127 : vector<8x1xf32> to vector<8x128xf32>
    %129 = arith.addf %126, %128 : vector<8x128xf32>
    %c1_48 = arith.constant 1 : index
    %c0_49 = arith.constant 0 : index
    %c0_50 = arith.constant 0 : index
    %130 = vector.load %arg8[%c1_48, %c0_49, %c0_50] : memref<3x128x1xf32, #tpu.memory_space<vmem>>, vector<1x128x1xf32>
    %131 = vector.shape_cast %130 : vector<1x128x1xf32> to vector<128x1xf32>
    %132 = arith.mulf %129, %129 : vector<8x128xf32>
    %cst_51 = arith.constant dense<0.000000e+00> : vector<128xf32>
    %133 = vector.multi_reduction <add>, %132, %cst_51 [0] : vector<8x128xf32> to vector<128xf32>
    %134 = vector.shape_cast %133 : vector<128xf32> to vector<1x128xf32>
    %cst_52 = arith.constant 8.000000e+00 : f32
    %135 = vector.broadcast %cst_52 : f32 to vector<1x128xf32>
    %136 = arith.divf %134, %135 : vector<1x128xf32>
    %cst_53 = arith.constant 9.99999974E-6 : f32
    %137 = vector.broadcast %cst_53 : f32 to vector<1x128xf32>
    %138 = arith.addf %136, %137 : vector<1x128xf32>
    %139 = math.rsqrt %138 : vector<1x128xf32>
    %140 = vector.broadcast %139 : vector<1x128xf32> to vector<8x128xf32>
    %141 = arith.mulf %129, %140 : vector<8x128xf32>
    %142 = vector.extract_strided_slice %131 {offsets = [0, 0], sizes = [8, 1], strides = [1, 1]} : vector<128x1xf32> to vector<8x1xf32>
    %143 = vector.broadcast %142 : vector<8x1xf32> to vector<8x128xf32>
    %144 = arith.mulf %141, %143 : vector<8x128xf32>
    %c1_54 = arith.constant 1 : index
    %c0_55 = arith.constant 0 : index
    %c0_56 = arith.constant 0 : index
    %145 = vector.load %arg3[%c1_54, %c0_55, %c0_56] : memref<3x64x8xf32, #tpu.memory_space<vmem>>, vector<1x64x8xf32>
    %146 = vector.shape_cast %145 : vector<1x64x8xf32> to vector<64x8xf32>
    %cst_57 = arith.constant dense<0.000000e+00> : vector<64x128xf32>
    %147 = tpu.matmul %146, %144, %cst_57 {dimension_numbers = #tpu.dot_dimension_numbers<[1], [0], [0], [1], [0, 0, 1, 1], [], []>} : vector<64x8xf32>, vector<8x128xf32>, vector<64x128xf32> -> vector<64x128xf32>
    %148 = vector.extract_strided_slice %131 {offsets = [8, 0], sizes = [64, 1], strides = [1, 1]} : vector<128x1xf32> to vector<64x1xf32>
    %149 = vector.broadcast %148 : vector<64x1xf32> to vector<64x128xf32>
    %150 = arith.addf %147, %149 : vector<64x128xf32>
    %151 = vector.extract_strided_slice %150 {offsets = [0, 0], sizes = [16, 128], strides = [1, 1]} : vector<64x128xf32> to vector<16x128xf32>
    %152 = vector.extract_strided_slice %150 {offsets = [16, 0], sizes = [16, 128], strides = [1, 1]} : vector<64x128xf32> to vector<16x128xf32>
    %153 = vector.extract_strided_slice %150 {offsets = [32, 0], sizes = [16, 128], strides = [1, 1]} : vector<64x128xf32> to vector<16x128xf32>
    %154 = vector.extract_strided_slice %150 {offsets = [48, 0], sizes = [16, 128], strides = [1, 1]} : vector<64x128xf32> to vector<16x128xf32>
    %c1_58 = arith.constant 1 : index
    %c0_59 = arith.constant 0 : index
    %c0_60 = arith.constant 0 : index
    %155 = vector.load %arg4[%c1_58, %c0_59, %c0_60] : memref<3x4x128xf32, #tpu.memory_space<vmem>>, vector<1x4x128xf32>
    %156 = vector.shape_cast %155 : vector<1x4x128xf32> to vector<4x128xf32>
    %157 = vector.extract_strided_slice %156 {offsets = [0, 0], sizes = [1, 128], strides = [1, 1]} : vector<4x128xf32> to vector<1x128xf32>
    %158 = vector.broadcast %157 : vector<1x128xf32> to vector<16x128xf32>
    %159 = arith.mulf %158, %152 : vector<16x128xf32>
    %160 = vector.extract_strided_slice %156 {offsets = [1, 0], sizes = [1, 128], strides = [1, 1]} : vector<4x128xf32> to vector<1x128xf32>
    %161 = vector.broadcast %160 : vector<1x128xf32> to vector<16x128xf32>
    %162 = arith.mulf %161, %151 : vector<16x128xf32>
    %163 = arith.addf %159, %162 : vector<16x128xf32>
    %164 = vector.extract_strided_slice %156 {offsets = [2, 0], sizes = [1, 128], strides = [1, 1]} : vector<4x128xf32> to vector<1x128xf32>
    %165 = vector.broadcast %164 : vector<1x128xf32> to vector<16x128xf32>
    %166 = arith.mulf %165, %153 : vector<16x128xf32>
    %167 = arith.addf %163, %166 : vector<16x128xf32>
    %168 = vector.extract_strided_slice %156 {offsets = [3, 0], sizes = [1, 128], strides = [1, 1]} : vector<4x128xf32> to vector<1x128xf32>
    %169 = vector.broadcast %168 : vector<1x128xf32> to vector<16x128xf32>
    %170 = arith.addf %167, %169 : vector<16x128xf32>
    %cst_61 = arith.constant 0.000000e+00 : f32
    %171 = vector.broadcast %cst_61 : f32 to vector<16x128xf32>
    %172 = arith.subf %171, %170 : vector<16x128xf32>
    %173 = math.exp %172 : vector<16x128xf32>
    %cst_62 = arith.constant 1.000000e+00 : f32
    %174 = vector.broadcast %cst_62 : f32 to vector<16x128xf32>
    %175 = arith.addf %174, %173 : vector<16x128xf32>
    %cst_63 = arith.constant 1.000000e+00 : f32
    %176 = vector.broadcast %cst_63 : f32 to vector<16x128xf32>
    %177 = arith.divf %176, %175 : vector<16x128xf32>
    %178 = arith.mulf %170, %177 : vector<16x128xf32>
    %c1_64 = arith.constant 1 : index
    %c0_65 = arith.constant 0 : index
    %c0_66 = arith.constant 0 : index
    %179 = vector.load %arg5[%c1_64, %c0_65, %c0_66] : memref<3x16x16xf32, #tpu.memory_space<vmem>>, vector<1x16x16xf32>
    %180 = vector.shape_cast %179 : vector<1x16x16xf32> to vector<16x16xf32>
    %cst_67 = arith.constant dense<0.000000e+00> : vector<16x128xf32>
    %181 = tpu.matmul %180, %178, %cst_67 {dimension_numbers = #tpu.dot_dimension_numbers<[1], [0], [0], [1], [0, 0, 1, 1], [], []>} : vector<16x16xf32>, vector<16x128xf32>, vector<16x128xf32> -> vector<16x128xf32>
    %182 = vector.extract_strided_slice %131 {offsets = [72, 0], sizes = [16, 1], strides = [1, 1]} : vector<128x1xf32> to vector<16x1xf32>
    %183 = vector.broadcast %182 : vector<16x1xf32> to vector<16x128xf32>
    %184 = arith.addf %181, %183 : vector<16x128xf32>
    %c1_68 = arith.constant 1 : index
    %c0_69 = arith.constant 0 : index
    %c0_70 = arith.constant 0 : index
    %185 = vector.load %arg6[%c1_68, %c0_69, %c0_70] : memref<3x32x16xf32, #tpu.memory_space<vmem>>, vector<1x32x16xf32>
    %186 = vector.shape_cast %185 : vector<1x32x16xf32> to vector<32x16xf32>
    %cst_71 = arith.constant dense<0.000000e+00> : vector<32x128xf32>
    %187 = tpu.matmul %186, %184, %cst_71 {dimension_numbers = #tpu.dot_dimension_numbers<[1], [0], [0], [1], [0, 0, 1, 1], [], []>} : vector<32x16xf32>, vector<16x128xf32>, vector<32x128xf32> -> vector<32x128xf32>
    %188 = vector.extract_strided_slice %131 {offsets = [88, 0], sizes = [32, 1], strides = [1, 1]} : vector<128x1xf32> to vector<32x1xf32>
    %189 = vector.broadcast %188 : vector<32x1xf32> to vector<32x128xf32>
    %190 = arith.addf %187, %189 : vector<32x128xf32>
    %191 = vector.extract_strided_slice %190 {offsets = [0, 0], sizes = [16, 128], strides = [1, 1]} : vector<32x128xf32> to vector<16x128xf32>
    %cst_72 = arith.constant 0.000000e+00 : f32
    %192 = vector.broadcast %cst_72 : f32 to vector<16x128xf32>
    %193 = arith.maximumf %191, %192 : vector<16x128xf32>
    %194 = math.absf %191 : vector<16x128xf32>
    %cst_73 = arith.constant 0.000000e+00 : f32
    %195 = vector.broadcast %cst_73 : f32 to vector<16x128xf32>
    %196 = arith.subf %195, %194 : vector<16x128xf32>
    %197 = math.exp %196 : vector<16x128xf32>
    %cst_74 = arith.constant 1.000000e+00 : f32
    %198 = vector.broadcast %cst_74 : f32 to vector<16x128xf32>
    %199 = arith.addf %198, %197 : vector<16x128xf32>
    %200 = math.log %199 : vector<16x128xf32>
    %201 = arith.addf %193, %200 : vector<16x128xf32>
    %202 = vector.extract_strided_slice %190 {offsets = [16, 0], sizes = [8, 128], strides = [1, 1]} : vector<32x128xf32> to vector<8x128xf32>
    %203 = vector.extract_strided_slice %190 {offsets = [24, 0], sizes = [8, 128], strides = [1, 1]} : vector<32x128xf32> to vector<8x128xf32>
    %204 = arith.mulf %184, %201 : vector<16x128xf32>
    %205 = arith.mulf %202, %203 : vector<8x128xf32>
    %cst_75 = arith.constant dense<0.000000e+00> : vector<128xf32>
    %206 = vector.multi_reduction <add>, %205, %cst_75 [0] : vector<8x128xf32> to vector<128xf32>
    %207 = vector.shape_cast %206 : vector<128xf32> to vector<1x128xf32>
    %208 = vector.broadcast %207 : vector<1x128xf32> to vector<16x128xf32>
    %209 = arith.mulf %204, %208 : vector<16x128xf32>
    %cst_76 = arith.constant 0.000000e+00 : f32
    %210 = vector.broadcast %cst_76 : f32 to vector<16x128xf32>
    %211 = arith.subf %210, %209 : vector<16x128xf32>
    %212 = math.exp %211 : vector<16x128xf32>
    %cst_77 = arith.constant 1.000000e+00 : f32
    %213 = vector.broadcast %cst_77 : f32 to vector<16x128xf32>
    %214 = arith.addf %213, %212 : vector<16x128xf32>
    %cst_78 = arith.constant 1.000000e+00 : f32
    %215 = vector.broadcast %cst_78 : f32 to vector<16x128xf32>
    %216 = arith.divf %215, %214 : vector<16x128xf32>
    %217 = arith.mulf %209, %216 : vector<16x128xf32>
    %cst_79 = arith.constant 0.000000e+00 : f32
    %218 = vector.broadcast %cst_79 : f32 to vector<16x128xf32>
    %219 = arith.subf %218, %154 : vector<16x128xf32>
    %220 = math.exp %219 : vector<16x128xf32>
    %cst_80 = arith.constant 1.000000e+00 : f32
    %221 = vector.broadcast %cst_80 : f32 to vector<16x128xf32>
    %222 = arith.addf %221, %220 : vector<16x128xf32>
    %cst_81 = arith.constant 1.000000e+00 : f32
    %223 = vector.broadcast %cst_81 : f32 to vector<16x128xf32>
    %224 = arith.divf %223, %222 : vector<16x128xf32>
    %225 = arith.mulf %154, %224 : vector<16x128xf32>
    %226 = arith.mulf %217, %225 : vector<16x128xf32>
    %c1_82 = arith.constant 1 : index
    %c0_83 = arith.constant 0 : index
    %c0_84 = arith.constant 0 : index
    %227 = vector.load %arg7[%c1_82, %c0_83, %c0_84] : memref<3x8x16xf32, #tpu.memory_space<vmem>>, vector<1x8x16xf32>
    %228 = vector.shape_cast %227 : vector<1x8x16xf32> to vector<8x16xf32>
    %cst_85 = arith.constant dense<0.000000e+00> : vector<8x128xf32>
    %229 = tpu.matmul %228, %226, %cst_85 {dimension_numbers = #tpu.dot_dimension_numbers<[1], [0], [0], [1], [0, 0, 1, 1], [], []>} : vector<8x16xf32>, vector<16x128xf32>, vector<8x128xf32> -> vector<8x128xf32>
    %230 = vector.extract_strided_slice %131 {offsets = [120, 0], sizes = [8, 1], strides = [1, 1]} : vector<128x1xf32> to vector<8x1xf32>
    %231 = vector.broadcast %230 : vector<8x1xf32> to vector<8x128xf32>
    %232 = arith.addf %229, %231 : vector<8x128xf32>
    %c2 = arith.constant 2 : index
    %c0_86 = arith.constant 0 : index
    %c0_87 = arith.constant 0 : index
    %233 = vector.load %arg8[%c2, %c0_86, %c0_87] : memref<3x128x1xf32, #tpu.memory_space<vmem>>, vector<1x128x1xf32>
    %234 = vector.shape_cast %233 : vector<1x128x1xf32> to vector<128x1xf32>
    %235 = arith.mulf %232, %232 : vector<8x128xf32>
    %cst_88 = arith.constant dense<0.000000e+00> : vector<128xf32>
    %236 = vector.multi_reduction <add>, %235, %cst_88 [0] : vector<8x128xf32> to vector<128xf32>
    %237 = vector.shape_cast %236 : vector<128xf32> to vector<1x128xf32>
    %cst_89 = arith.constant 8.000000e+00 : f32
    %238 = vector.broadcast %cst_89 : f32 to vector<1x128xf32>
    %239 = arith.divf %237, %238 : vector<1x128xf32>
    %cst_90 = arith.constant 9.99999974E-6 : f32
    %240 = vector.broadcast %cst_90 : f32 to vector<1x128xf32>
    %241 = arith.addf %239, %240 : vector<1x128xf32>
    %242 = math.rsqrt %241 : vector<1x128xf32>
    %243 = vector.broadcast %242 : vector<1x128xf32> to vector<8x128xf32>
    %244 = arith.mulf %232, %243 : vector<8x128xf32>
    %245 = vector.extract_strided_slice %234 {offsets = [0, 0], sizes = [8, 1], strides = [1, 1]} : vector<128x1xf32> to vector<8x1xf32>
    %246 = vector.broadcast %245 : vector<8x1xf32> to vector<8x128xf32>
    %247 = arith.mulf %244, %246 : vector<8x128xf32>
    %c2_91 = arith.constant 2 : index
    %c0_92 = arith.constant 0 : index
    %c0_93 = arith.constant 0 : index
    %248 = vector.load %arg3[%c2_91, %c0_92, %c0_93] : memref<3x64x8xf32, #tpu.memory_space<vmem>>, vector<1x64x8xf32>
    %249 = vector.shape_cast %248 : vector<1x64x8xf32> to vector<64x8xf32>
    %cst_94 = arith.constant dense<0.000000e+00> : vector<64x128xf32>
    %250 = tpu.matmul %249, %247, %cst_94 {dimension_numbers = #tpu.dot_dimension_numbers<[1], [0], [0], [1], [0, 0, 1, 1], [], []>} : vector<64x8xf32>, vector<8x128xf32>, vector<64x128xf32> -> vector<64x128xf32>
    %251 = vector.extract_strided_slice %234 {offsets = [8, 0], sizes = [64, 1], strides = [1, 1]} : vector<128x1xf32> to vector<64x1xf32>
    %252 = vector.broadcast %251 : vector<64x1xf32> to vector<64x128xf32>
    %253 = arith.addf %250, %252 : vector<64x128xf32>
    %254 = vector.extract_strided_slice %253 {offsets = [0, 0], sizes = [16, 128], strides = [1, 1]} : vector<64x128xf32> to vector<16x128xf32>
    %255 = vector.extract_strided_slice %253 {offsets = [16, 0], sizes = [16, 128], strides = [1, 1]} : vector<64x128xf32> to vector<16x128xf32>
    %256 = vector.extract_strided_slice %253 {offsets = [32, 0], sizes = [16, 128], strides = [1, 1]} : vector<64x128xf32> to vector<16x128xf32>
    %257 = vector.extract_strided_slice %253 {offsets = [48, 0], sizes = [16, 128], strides = [1, 1]} : vector<64x128xf32> to vector<16x128xf32>
    %c2_95 = arith.constant 2 : index
    %c0_96 = arith.constant 0 : index
    %c0_97 = arith.constant 0 : index
    %258 = vector.load %arg4[%c2_95, %c0_96, %c0_97] : memref<3x4x128xf32, #tpu.memory_space<vmem>>, vector<1x4x128xf32>
    %259 = vector.shape_cast %258 : vector<1x4x128xf32> to vector<4x128xf32>
    %260 = vector.extract_strided_slice %259 {offsets = [0, 0], sizes = [1, 128], strides = [1, 1]} : vector<4x128xf32> to vector<1x128xf32>
    %261 = vector.broadcast %260 : vector<1x128xf32> to vector<16x128xf32>
    %262 = arith.mulf %261, %255 : vector<16x128xf32>
    %263 = vector.extract_strided_slice %259 {offsets = [1, 0], sizes = [1, 128], strides = [1, 1]} : vector<4x128xf32> to vector<1x128xf32>
    %264 = vector.broadcast %263 : vector<1x128xf32> to vector<16x128xf32>
    %265 = arith.mulf %264, %254 : vector<16x128xf32>
    %266 = arith.addf %262, %265 : vector<16x128xf32>
    %267 = vector.extract_strided_slice %259 {offsets = [2, 0], sizes = [1, 128], strides = [1, 1]} : vector<4x128xf32> to vector<1x128xf32>
    %268 = vector.broadcast %267 : vector<1x128xf32> to vector<16x128xf32>
    %269 = arith.mulf %268, %256 : vector<16x128xf32>
    %270 = arith.addf %266, %269 : vector<16x128xf32>
    %271 = vector.extract_strided_slice %259 {offsets = [3, 0], sizes = [1, 128], strides = [1, 1]} : vector<4x128xf32> to vector<1x128xf32>
    %272 = vector.broadcast %271 : vector<1x128xf32> to vector<16x128xf32>
    %273 = arith.addf %270, %272 : vector<16x128xf32>
    %cst_98 = arith.constant 0.000000e+00 : f32
    %274 = vector.broadcast %cst_98 : f32 to vector<16x128xf32>
    %275 = arith.subf %274, %273 : vector<16x128xf32>
    %276 = math.exp %275 : vector<16x128xf32>
    %cst_99 = arith.constant 1.000000e+00 : f32
    %277 = vector.broadcast %cst_99 : f32 to vector<16x128xf32>
    %278 = arith.addf %277, %276 : vector<16x128xf32>
    %cst_100 = arith.constant 1.000000e+00 : f32
    %279 = vector.broadcast %cst_100 : f32 to vector<16x128xf32>
    %280 = arith.divf %279, %278 : vector<16x128xf32>
    %281 = arith.mulf %273, %280 : vector<16x128xf32>
    %c2_101 = arith.constant 2 : index
    %c0_102 = arith.constant 0 : index
    %c0_103 = arith.constant 0 : index
    %282 = vector.load %arg5[%c2_101, %c0_102, %c0_103] : memref<3x16x16xf32, #tpu.memory_space<vmem>>, vector<1x16x16xf32>
    %283 = vector.shape_cast %282 : vector<1x16x16xf32> to vector<16x16xf32>
    %cst_104 = arith.constant dense<0.000000e+00> : vector<16x128xf32>
    %284 = tpu.matmul %283, %281, %cst_104 {dimension_numbers = #tpu.dot_dimension_numbers<[1], [0], [0], [1], [0, 0, 1, 1], [], []>} : vector<16x16xf32>, vector<16x128xf32>, vector<16x128xf32> -> vector<16x128xf32>
    %285 = vector.extract_strided_slice %234 {offsets = [72, 0], sizes = [16, 1], strides = [1, 1]} : vector<128x1xf32> to vector<16x1xf32>
    %286 = vector.broadcast %285 : vector<16x1xf32> to vector<16x128xf32>
    %287 = arith.addf %284, %286 : vector<16x128xf32>
    %c2_105 = arith.constant 2 : index
    %c0_106 = arith.constant 0 : index
    %c0_107 = arith.constant 0 : index
    %288 = vector.load %arg6[%c2_105, %c0_106, %c0_107] : memref<3x32x16xf32, #tpu.memory_space<vmem>>, vector<1x32x16xf32>
    %289 = vector.shape_cast %288 : vector<1x32x16xf32> to vector<32x16xf32>
    %cst_108 = arith.constant dense<0.000000e+00> : vector<32x128xf32>
    %290 = tpu.matmul %289, %287, %cst_108 {dimension_numbers = #tpu.dot_dimension_numbers<[1], [0], [0], [1], [0, 0, 1, 1], [], []>} : vector<32x16xf32>, vector<16x128xf32>, vector<32x128xf32> -> vector<32x128xf32>
    %291 = vector.extract_strided_slice %234 {offsets = [88, 0], sizes = [32, 1], strides = [1, 1]} : vector<128x1xf32> to vector<32x1xf32>
    %292 = vector.broadcast %291 : vector<32x1xf32> to vector<32x128xf32>
    %293 = arith.addf %290, %292 : vector<32x128xf32>
    %294 = vector.extract_strided_slice %293 {offsets = [0, 0], sizes = [16, 128], strides = [1, 1]} : vector<32x128xf32> to vector<16x128xf32>
    %cst_109 = arith.constant 0.000000e+00 : f32
    %295 = vector.broadcast %cst_109 : f32 to vector<16x128xf32>
    %296 = arith.maximumf %294, %295 : vector<16x128xf32>
    %297 = math.absf %294 : vector<16x128xf32>
    %cst_110 = arith.constant 0.000000e+00 : f32
    %298 = vector.broadcast %cst_110 : f32 to vector<16x128xf32>
    %299 = arith.subf %298, %297 : vector<16x128xf32>
    %300 = math.exp %299 : vector<16x128xf32>
    %cst_111 = arith.constant 1.000000e+00 : f32
    %301 = vector.broadcast %cst_111 : f32 to vector<16x128xf32>
    %302 = arith.addf %301, %300 : vector<16x128xf32>
    %303 = math.log %302 : vector<16x128xf32>
    %304 = arith.addf %296, %303 : vector<16x128xf32>
    %305 = vector.extract_strided_slice %293 {offsets = [16, 0], sizes = [8, 128], strides = [1, 1]} : vector<32x128xf32> to vector<8x128xf32>
    %306 = vector.extract_strided_slice %293 {offsets = [24, 0], sizes = [8, 128], strides = [1, 1]} : vector<32x128xf32> to vector<8x128xf32>
    %307 = arith.mulf %287, %304 : vector<16x128xf32>
    %308 = arith.mulf %305, %306 : vector<8x128xf32>
    %cst_112 = arith.constant dense<0.000000e+00> : vector<128xf32>
    %309 = vector.multi_reduction <add>, %308, %cst_112 [0] : vector<8x128xf32> to vector<128xf32>
    %310 = vector.shape_cast %309 : vector<128xf32> to vector<1x128xf32>
    %311 = vector.broadcast %310 : vector<1x128xf32> to vector<16x128xf32>
    %312 = arith.mulf %307, %311 : vector<16x128xf32>
    %cst_113 = arith.constant 0.000000e+00 : f32
    %313 = vector.broadcast %cst_113 : f32 to vector<16x128xf32>
    %314 = arith.subf %313, %312 : vector<16x128xf32>
    %315 = math.exp %314 : vector<16x128xf32>
    %cst_114 = arith.constant 1.000000e+00 : f32
    %316 = vector.broadcast %cst_114 : f32 to vector<16x128xf32>
    %317 = arith.addf %316, %315 : vector<16x128xf32>
    %cst_115 = arith.constant 1.000000e+00 : f32
    %318 = vector.broadcast %cst_115 : f32 to vector<16x128xf32>
    %319 = arith.divf %318, %317 : vector<16x128xf32>
    %320 = arith.mulf %312, %319 : vector<16x128xf32>
    %cst_116 = arith.constant 0.000000e+00 : f32
    %321 = vector.broadcast %cst_116 : f32 to vector<16x128xf32>
    %322 = arith.subf %321, %257 : vector<16x128xf32>
    %323 = math.exp %322 : vector<16x128xf32>
    %cst_117 = arith.constant 1.000000e+00 : f32
    %324 = vector.broadcast %cst_117 : f32 to vector<16x128xf32>
    %325 = arith.addf %324, %323 : vector<16x128xf32>
    %cst_118 = arith.constant 1.000000e+00 : f32
    %326 = vector.broadcast %cst_118 : f32 to vector<16x128xf32>
    %327 = arith.divf %326, %325 : vector<16x128xf32>
    %328 = arith.mulf %257, %327 : vector<16x128xf32>
    %329 = arith.mulf %320, %328 : vector<16x128xf32>
    %c2_119 = arith.constant 2 : index
    %c0_120 = arith.constant 0 : index
    %c0_121 = arith.constant 0 : index
    %330 = vector.load %arg7[%c2_119, %c0_120, %c0_121] : memref<3x8x16xf32, #tpu.memory_space<vmem>>, vector<1x8x16xf32>
    %331 = vector.shape_cast %330 : vector<1x8x16xf32> to vector<8x16xf32>
    %cst_122 = arith.constant dense<0.000000e+00> : vector<8x128xf32>
    %332 = tpu.matmul %331, %329, %cst_122 {dimension_numbers = #tpu.dot_dimension_numbers<[1], [0], [0], [1], [0, 0, 1, 1], [], []>} : vector<8x16xf32>, vector<16x128xf32>, vector<8x128xf32> -> vector<8x128xf32>
    %333 = vector.extract_strided_slice %234 {offsets = [120, 0], sizes = [8, 1], strides = [1, 1]} : vector<128x1xf32> to vector<8x1xf32>
    %334 = vector.broadcast %333 : vector<8x1xf32> to vector<8x128xf32>
    %335 = arith.addf %332, %334 : vector<8x128xf32>
    %c0_123 = arith.constant 0 : index
    %c0_124 = arith.constant 0 : index
    %336 = vector.load %arg11[%c0_123, %c0_124] : memref<40x1xf32, #tpu.memory_space<vmem>>, vector<40x1xf32>
    %c2_125 = arith.constant 2 : index
    %c0_126 = arith.constant 0 : index
    %c0_127 = arith.constant 0 : index
    %337 = vector.load %arg2[%c2_125, %c0_126, %c0_127] : memref<4x8x1xf32, #tpu.memory_space<vmem>>, vector<1x8x1xf32>
    %338 = vector.shape_cast %337 : vector<1x8x1xf32> to vector<8x1xf32>
    %c3 = arith.constant 3 : index
    %c0_128 = arith.constant 0 : index
    %c0_129 = arith.constant 0 : index
    %339 = vector.load %arg2[%c3, %c0_128, %c0_129] : memref<4x8x1xf32, #tpu.memory_space<vmem>>, vector<1x8x1xf32>
    %340 = vector.shape_cast %339 : vector<1x8x1xf32> to vector<8x1xf32>
    %cst_130 = arith.constant dense<0.000000e+00> : vector<128xf32>
    %341 = vector.multi_reduction <add>, %335, %cst_130 [0] : vector<8x128xf32> to vector<128xf32>
    %342 = vector.shape_cast %341 : vector<128xf32> to vector<1x128xf32>
    %cst_131 = arith.constant 8.000000e+00 : f32
    %343 = vector.broadcast %cst_131 : f32 to vector<1x128xf32>
    %344 = arith.divf %342, %343 : vector<1x128xf32>
    %345 = arith.mulf %335, %335 : vector<8x128xf32>
    %cst_132 = arith.constant dense<0.000000e+00> : vector<128xf32>
    %346 = vector.multi_reduction <add>, %345, %cst_132 [0] : vector<8x128xf32> to vector<128xf32>
    %347 = vector.shape_cast %346 : vector<128xf32> to vector<1x128xf32>
    %cst_133 = arith.constant 8.000000e+00 : f32
    %348 = vector.broadcast %cst_133 : f32 to vector<1x128xf32>
    %349 = arith.divf %347, %348 : vector<1x128xf32>
    %350 = arith.mulf %344, %344 : vector<1x128xf32>
    %351 = arith.subf %349, %350 : vector<1x128xf32>
    %352 = vector.broadcast %344 : vector<1x128xf32> to vector<8x128xf32>
    %353 = arith.subf %335, %352 : vector<8x128xf32>
    %cst_134 = arith.constant 9.99999974E-6 : f32
    %354 = vector.broadcast %cst_134 : f32 to vector<1x128xf32>
    %355 = arith.addf %351, %354 : vector<1x128xf32>
    %356 = math.rsqrt %355 : vector<1x128xf32>
    %357 = vector.broadcast %356 : vector<1x128xf32> to vector<8x128xf32>
    %358 = arith.mulf %353, %357 : vector<8x128xf32>
    %359 = vector.broadcast %338 : vector<8x1xf32> to vector<8x128xf32>
    %360 = arith.mulf %358, %359 : vector<8x128xf32>
    %361 = vector.broadcast %340 : vector<8x1xf32> to vector<8x128xf32>
    %362 = arith.addf %360, %361 : vector<8x128xf32>
    %363 = arith.addf %0, %362 : vector<8x128xf32>
    %c0_135 = arith.constant 0 : index
    %c0_136 = arith.constant 0 : index
    %364 = vector.load %arg9[%c0_135, %c0_136] : memref<32x8xf32, #tpu.memory_space<vmem>>, vector<32x8xf32>
    %cst_137 = arith.constant dense<0.000000e+00> : vector<32x128xf32>
    %365 = tpu.matmul %364, %363, %cst_137 {dimension_numbers = #tpu.dot_dimension_numbers<[1], [0], [0], [1], [0, 0, 1, 1], [], []>} : vector<32x8xf32>, vector<8x128xf32>, vector<32x128xf32> -> vector<32x128xf32>
    %366 = vector.extract_strided_slice %336 {offsets = [0, 0], sizes = [32, 1], strides = [1, 1]} : vector<40x1xf32> to vector<32x1xf32>
    %367 = vector.broadcast %366 : vector<32x1xf32> to vector<32x128xf32>
    %368 = arith.addf %365, %367 : vector<32x128xf32>
    %cst_138 = arith.constant 5.000000e-01 : f32
    %369 = vector.broadcast %cst_138 : f32 to vector<32x128xf32>
    %370 = arith.mulf %369, %368 : vector<32x128xf32>
    %cst_139 = arith.constant 0.707106769 : f32
    %371 = vector.broadcast %cst_139 : f32 to vector<32x128xf32>
    %372 = arith.mulf %368, %371 : vector<32x128xf32>
    %373 = math.absf %372 : vector<32x128xf32>
    %cst_140 = arith.constant 0.327591091 : f32
    %374 = vector.broadcast %cst_140 : f32 to vector<32x128xf32>
    %375 = arith.mulf %374, %373 : vector<32x128xf32>
    %cst_141 = arith.constant 1.000000e+00 : f32
    %376 = vector.broadcast %cst_141 : f32 to vector<32x128xf32>
    %377 = arith.addf %376, %375 : vector<32x128xf32>
    %cst_142 = arith.constant 1.000000e+00 : f32
    %378 = vector.broadcast %cst_142 : f32 to vector<32x128xf32>
    %379 = arith.divf %378, %377 : vector<32x128xf32>
    %cst_143 = arith.constant 1.06140542 : f32
    %380 = vector.broadcast %cst_143 : f32 to vector<32x128xf32>
    %381 = arith.mulf %380, %379 : vector<32x128xf32>
    %cst_144 = arith.constant -1.45315206 : f32
    %382 = vector.broadcast %cst_144 : f32 to vector<32x128xf32>
    %383 = arith.addf %381, %382 : vector<32x128xf32>
    %384 = arith.mulf %383, %379 : vector<32x128xf32>
    %cst_145 = arith.constant 1.42141378 : f32
    %385 = vector.broadcast %cst_145 : f32 to vector<32x128xf32>
    %386 = arith.addf %384, %385 : vector<32x128xf32>
    %387 = arith.mulf %386, %379 : vector<32x128xf32>
    %cst_146 = arith.constant -0.284496725 : f32
    %388 = vector.broadcast %cst_146 : f32 to vector<32x128xf32>
    %389 = arith.addf %387, %388 : vector<32x128xf32>
    %390 = arith.mulf %389, %379 : vector<32x128xf32>
    %cst_147 = arith.constant 0.254829586 : f32
    %391 = vector.broadcast %cst_147 : f32 to vector<32x128xf32>
    %392 = arith.addf %390, %391 : vector<32x128xf32>
    %393 = arith.mulf %392, %379 : vector<32x128xf32>
    %394 = arith.mulf %372, %372 : vector<32x128xf32>
    %cst_148 = arith.constant 0.000000e+00 : f32
    %395 = vector.broadcast %cst_148 : f32 to vector<32x128xf32>
    %396 = arith.subf %395, %394 : vector<32x128xf32>
    %397 = math.exp %396 : vector<32x128xf32>
    %398 = arith.mulf %393, %397 : vector<32x128xf32>
    %cst_149 = arith.constant 1.000000e+00 : f32
    %399 = vector.broadcast %cst_149 : f32 to vector<32x128xf32>
    %400 = arith.subf %399, %398 : vector<32x128xf32>
    %cst_150 = arith.constant 0.000000e+00 : f32
    %401 = vector.broadcast %cst_150 : f32 to vector<32x128xf32>
    %402 = arith.cmpf oge, %372, %401 : vector<32x128xf32>
    %cst_151 = arith.constant 0.000000e+00 : f32
    %403 = vector.broadcast %cst_151 : f32 to vector<32x128xf32>
    %404 = arith.subf %403, %400 : vector<32x128xf32>
    %405 = arith.select %402, %400, %404 : vector<32x128xi1>, vector<32x128xf32>
    %cst_152 = arith.constant 1.000000e+00 : f32
    %406 = vector.broadcast %cst_152 : f32 to vector<32x128xf32>
    %407 = arith.addf %406, %405 : vector<32x128xf32>
    %408 = arith.mulf %370, %407 : vector<32x128xf32>
    %c0_153 = arith.constant 0 : index
    %c0_154 = arith.constant 0 : index
    %409 = vector.load %arg10[%c0_153, %c0_154] : memref<8x32xf32, #tpu.memory_space<vmem>>, vector<8x32xf32>
    %cst_155 = arith.constant dense<0.000000e+00> : vector<8x128xf32>
    %410 = tpu.matmul %409, %408, %cst_155 {dimension_numbers = #tpu.dot_dimension_numbers<[1], [0], [0], [1], [0, 0, 1, 1], [], []>} : vector<8x32xf32>, vector<32x128xf32>, vector<8x128xf32> -> vector<8x128xf32>
    %411 = arith.addf %363, %410 : vector<8x128xf32>
    %412 = vector.extract_strided_slice %336 {offsets = [32, 0], sizes = [8, 1], strides = [1, 1]} : vector<40x1xf32> to vector<8x1xf32>
    %413 = vector.broadcast %412 : vector<8x1xf32> to vector<8x128xf32>
    %414 = arith.addf %411, %413 : vector<8x128xf32>
    %c0_156 = arith.constant 0 : index
    %c0_157 = arith.constant 0 : index
    %415 = vector.load %arg12[%c0_156, %c0_157] : memref<8x128xf32, #tpu.memory_space<vmem>>, vector<8x128xf32>
    tpu.vector_store %arg12[%c0_156, %c0_157], %414 {strides = array<i32>} : memref<8x128xf32, #tpu.memory_space<vmem>>, vector<8x128xf32>,
    return
  }
  func.func @transform_0(%arg0: i32) -> (i32, i32) {
    %c0_i32 = arith.constant 0 : i32
    %c0_i32_0 = arith.constant 0 : i32
    return %c0_i32, %arg0 : i32, i32
  }
  func.func @transform_1(%arg0: i32) -> (i32, i32, i32) {
    %c0_i32 = arith.constant 0 : i32
    %c0_i32_0 = arith.constant 0 : i32
    %c0_i32_1 = arith.constant 0 : i32
    %c0_i32_2 = arith.constant 0 : i32
    return %c0_i32, %c0_i32_0, %c0_i32_1 : i32, i32, i32
  }
  func.func @transform_2(%arg0: i32) -> (i32, i32, i32) {
    %c0_i32 = arith.constant 0 : i32
    %c0_i32_0 = arith.constant 0 : i32
    %c0_i32_1 = arith.constant 0 : i32
    %c0_i32_2 = arith.constant 0 : i32
    return %c0_i32, %c0_i32_0, %c0_i32_1 : i32, i32, i32
  }
  func.func @transform_3(%arg0: i32) -> (i32, i32, i32) {
    %c0_i32 = arith.constant 0 : i32
    %c0_i32_0 = arith.constant 0 : i32
    %c0_i32_1 = arith.constant 0 : i32
    %c0_i32_2 = arith.constant 0 : i32
    return %c0_i32, %c0_i32_0, %c0_i32_1 : i32, i32, i32
  }
  func.func @transform_4(%arg0: i32) -> (i32, i32, i32) {
    %c0_i32 = arith.constant 0 : i32
    %c0_i32_0 = arith.constant 0 : i32
    %c0_i32_1 = arith.constant 0 : i32
    %c0_i32_2 = arith.constant 0 : i32
    return %c0_i32, %c0_i32_0, %c0_i32_1 : i32, i32, i32
  }
  func.func @transform_5(%arg0: i32) -> (i32, i32, i32) {
    %c0_i32 = arith.constant 0 : i32
    %c0_i32_0 = arith.constant 0 : i32
    %c0_i32_1 = arith.constant 0 : i32
    %c0_i32_2 = arith.constant 0 : i32
    return %c0_i32, %c0_i32_0, %c0_i32_1 : i32, i32, i32
  }
  func.func @transform_6(%arg0: i32) -> (i32, i32, i32) {
    %c0_i32 = arith.constant 0 : i32
    %c0_i32_0 = arith.constant 0 : i32
    %c0_i32_1 = arith.constant 0 : i32
    %c0_i32_2 = arith.constant 0 : i32
    return %c0_i32, %c0_i32_0, %c0_i32_1 : i32, i32, i32
  }
  func.func @transform_7(%arg0: i32) -> (i32, i32, i32) {
    %c0_i32 = arith.constant 0 : i32
    %c0_i32_0 = arith.constant 0 : i32
    %c0_i32_1 = arith.constant 0 : i32
    %c0_i32_2 = arith.constant 0 : i32
    return %c0_i32, %c0_i32_0, %c0_i32_1 : i32, i32, i32
  }
  func.func @transform_8(%arg0: i32) -> (i32, i32) {
    %c0_i32 = arith.constant 0 : i32
    %c0_i32_0 = arith.constant 0 : i32
    %c0_i32_1 = arith.constant 0 : i32
    return %c0_i32, %c0_i32_0 : i32, i32
  }
  func.func @transform_9(%arg0: i32) -> (i32, i32) {
    %c0_i32 = arith.constant 0 : i32
    %c0_i32_0 = arith.constant 0 : i32
    %c0_i32_1 = arith.constant 0 : i32
    return %c0_i32, %c0_i32_0 : i32, i32
  }
  func.func @transform_10(%arg0: i32) -> (i32, i32) {
    %c0_i32 = arith.constant 0 : i32
    %c0_i32_0 = arith.constant 0 : i32
    %c0_i32_1 = arith.constant 0 : i32
    return %c0_i32, %c0_i32_0 : i32, i32
  }
  func.func @transform_11(%arg0: i32) -> (i32, i32) {
    %c0_i32 = arith.constant 0 : i32
    %c0_i32_0 = arith.constant 0 : i32
    return %c0_i32, %arg0 : i32, i32
  }
}

</mosaic_0001>

<llo_original>
// kernel: tile.9
$region0: #{tile.9}
  %s0 = inlined_call_operand.vmem [shape: f32[3,4,8,16], index: 0, kind: input, shape index: {}]
  %s1 = inlined_call_operand.vmem [shape: f32[3,4,128], index: 1, kind: output, shape index: {}]
  $region1: #{tile.9} parent=0
    #allocation0 [shape = 'u8[12288]{0}', space=vmem, size = 0x3000, scoped, tag = 'scoped mem for output reshape']
    %v2 = vld [vmem:[%s0] ss:$8 sm:$0xf]
    %v3 = vld [vmem:[%s0] ss:$8 sm:$0xf0]
    %vm4 = vcmask 1047556
    %v5 = vsel %vm4, %v3, %v2
    %vm6 = vcmask 130048
    %7 = vst.msk [vmem:[#allocation0] sm:$0xf] %vm6, %v5
    %s8 = scalar_lea.vmem [#allocation0], 4
    %9 = vst.msk [vmem:[%s8] sm:$0xf0] %vm6, %v5
    %s10 = scalar_lea.vmem %s0, 64
    %v11 = vld [vmem:[%s10] ss:$8 sm:$0xf]
    %vm12 = vcmask 130048
    %s13 = scalar_lea.vmem [#allocation0], 16
    %14 = vst.msk [vmem:[%s13] sm:$0xf] %vm12, %v11
    %s15 = scalar_lea.vmem %s0, 7
    %v16 = vld [vmem:[%s15] ss:$8 sm:$0xf]
    %s17 = scalar_lea.vmem %s0, 7
    %v18 = vld [vmem:[%s17] ss:$8 sm:$0xf0]
    %vm19 = vcmask 1047556
    %v20 = vsel %vm19, %v18, %v16
    %21 = vrot.lane.b32.xlu0 %v20, 112
    %v22 = vpop.permute.xlu0 %21
    %vm23 = vcmask 1048448
    %24 = vst.msk [vmem:[#allocation0] sm:$0xf] %vm23, %v22
    %s25 = scalar_lea.vmem [#allocation0], 4
    %26 = vst.msk [vmem:[%s25] sm:$0xf0] %vm23, %v22
    %s27 = scalar_lea.vmem %s0, 71
    %v28 = vld [vmem:[%s27] ss:$8 sm:$0xf]
    %29 = vrot.lane.b32.xlu0 %v28, 112
    %v30 = vpop.permute.xlu0 %29
    %vm31 = vcmask 1048448
    %s32 = scalar_lea.vmem [#allocation0], 16
    %33 = vst.msk [vmem:[%s32] sm:$0xf] %vm31, %v30
    %s34 = scalar_lea.vmem %s0, 6
    %v35 = vld [vmem:[%s34] ss:$8 sm:$0xf]
    %s36 = scalar_lea.vmem %s0, 6
    %v37 = vld [vmem:[%s36] ss:$8 sm:$0xf0]
    %vm38 = vcmask 1047556
    %v39 = vsel %vm38, %v37, %v35
    %40 = vrot.lane.b32.xlu0 %v39, 96
    %v41 = vpop.permute.xlu0 %40
    %vm42 = vcmask 917248
    %43 = vst.msk [vmem:[#allocation0] sm:$0xf] %vm42, %v41
    %s44 = scalar_lea.vmem [#allocation0], 4
    %45 = vst.msk [vmem:[%s44] sm:$0xf0] %vm42, %v41
    %s46 = scalar_lea.vmem %s0, 70
    %v47 = vld [vmem:[%s46] ss:$8 sm:$0xf]
    %48 = vrot.lane.b32.xlu0 %v47, 96
    %v49 = vpop.permute.xlu0 %48
    %vm50 = vcmask 917248
    %s51 = scalar_lea.vmem [#allocation0], 16
    %52 = vst.msk [vmem:[%s51] sm:$0xf] %vm50, %v49
    %s53 = scalar_lea.vmem %s0, 5
    %v54 = vld [vmem:[%s53] ss:$8 sm:$0xf]
    %s55 = scalar_lea.vmem %s0, 5
    %v56 = vld [vmem:[%s55] ss:$8 sm:$0xf0]
    %vm57 = vcmask 1047556
    %v58 = vsel %vm57, %v56, %v54
    %59 = vrot.lane.b32.xlu0 %v58, 80
    %v60 = vpop.permute.xlu0 %59
    %vm61 = vcmask 786048
    %62 = vst.msk [vmem:[#allocation0] sm:$0xf] %vm61, %v60
    %s63 = scalar_lea.vmem [#allocation0], 4
    %64 = vst.msk [vmem:[%s63] sm:$0xf0] %vm61, %v60
    %s65 = scalar_lea.vmem %s0, 69
    %v66 = vld [vmem:[%s65] ss:$8 sm:$0xf]
    %67 = vrot.lane.b32.xlu0 %v66, 80
    %v68 = vpop.permute.xlu0 %67
    %vm69 = vcmask 786048
    %s70 = scalar_lea.vmem [#allocation0], 16
    %71 = vst.msk [vmem:[%s70] sm:$0xf] %vm69, %v68
    %s72 = scalar_lea.vmem %s0, 4
    %v73 = vld [vmem:[%s72] ss:$8 sm:$0xf]
    %s74 = scalar_lea.vmem %s0, 4
    %v75 = vld [vmem:[%s74] ss:$8 sm:$0xf0]
    %vm76 = vcmask 1047556
    %v77 = vsel %vm76, %v75, %v73
    %78 = vrot.lane.b32.xlu0 %v77, 64
    %v79 = vpop.permute.xlu0 %78
    %vm80 = vcmask 654848
    %81 = vst.msk [vmem:[#allocation0] sm:$0xf] %vm80, %v79
    %s82 = scalar_lea.vmem [#allocation0], 4
    %83 = vst.msk [vmem:[%s82] sm:$0xf0] %vm80, %v79
    %s84 = scalar_lea.vmem %s0, 68
    %v85 = vld [vmem:[%s84] ss:$8 sm:$0xf]
    %86 = vrot.lane.b32.xlu0 %v85, 64
    %v87 = vpop.permute.xlu0 %86
    %vm88 = vcmask 654848
    %s89 = scalar_lea.vmem [#allocation0], 16
    %90 = vst.msk [vmem:[%s89] sm:$0xf] %vm88, %v87
    %s91 = scalar_lea.vmem %s0, 3
    %v92 = vld [vmem:[%s91] ss:$8 sm:$0xf]
    %s93 = scalar_lea.vmem %s0, 3
    %v94 = vld [vmem:[%s93] ss:$8 sm:$0xf0]
    %vm95 = vcmask 1047556
    %v96 = vsel %vm95, %v94, %v92
    %97 = vrot.lane.b32.xlu0 %v96, 48
    %v98 = vpop.permute.xlu0 %97
    %vm99 = vcmask 523648
    %100 = vst.msk [vmem:[#allocation0] sm:$0xf] %vm99, %v98
    %s101 = scalar_lea.vmem [#allocation0], 4
    %102 = vst.msk [vmem:[%s101] sm:$0xf0] %vm99, %v98
    %s103 = scalar_lea.vmem %s0, 67
    %v104 = vld [vmem:[%s103] ss:$8 sm:$0xf]
    %105 = vrot.lane.b32.xlu0 %v104, 48
    %v106 = vpop.permute.xlu0 %105
    %vm107 = vcmask 523648
    %s108 = scalar_lea.vmem [#allocation0], 16
    %109 = vst.msk [vmem:[%s108] sm:$0xf] %vm107, %v106
    %s110 = scalar_lea.vmem %s0, 2
    %v111 = vld [vmem:[%s110] ss:$8 sm:$0xf]
    %s112 = scalar_lea.vmem %s0, 2
    %v113 = vld [vmem:[%s112] ss:$8 sm:$0xf0]
    %vm114 = vcmask 1047556
    %v115 = vsel %vm114, %v113, %v111
    %116 = vrot.lane.b32.xlu0 %v115, 32
    %v117 = vpop.permute.xlu0 %116
    %vm118 = vcmask 392448
    %119 = vst.msk [vmem:[#allocation0] sm:$0xf] %vm118, %v117
    %s120 = scalar_lea.vmem [#allocation0], 4
    %121 = vst.msk [vmem:[%s120] sm:$0xf0] %vm118, %v117
    %s122 = scalar_lea.vmem %s0, 66
    %v123 = vld [vmem:[%s122] ss:$8 sm:$0xf]
    %124 = vrot.lane.b32.xlu0 %v123, 32
    %v125 = vpop.permute.xlu0 %124
    %vm126 = vcmask 392448
    %s127 = scalar_lea.vmem [#allocation0], 16
    %128 = vst.msk [vmem:[%s127] sm:$0xf] %vm126, %v125
    %s129 = scalar_lea.vmem %s0, 1
    %v130 = vld [vmem:[%s129] ss:$8 sm:$0xf]
    %s131 = scalar_lea.vmem %s0, 1
    %v132 = vld [vmem:[%s131] ss:$8 sm:$0xf0]
    %vm133 = vcmask 1047556
    %v134 = vsel %vm133, %v132, %v130
    %135 = vrot.lane.b32.xlu0 %v134, 16
    %v136 = vpop.permute.xlu0 %135
    %vm137 = vcmask 261248
    %138 = vst.msk [vmem:[#allocation0] sm:$0xf] %vm137, %v136
    %s139 = scalar_lea.vmem [#allocation0], 4
    %140 = vst.msk [vmem:[%s139] sm:$0xf0] %vm137, %v136
    %s141 = scalar_lea.vmem %s0, 65
    %v142 = vld [vmem:[%s141] ss:$8 sm:$0xf]
    %143 = vrot.lane.b32.xlu0 %v142, 16
    %v144 = vpop.permute.xlu0 %143
    %vm145 = vcmask 261248
    %s146 = scalar_lea.vmem [#allocation0], 16
    %147 = vst.msk [vmem:[%s146] sm:$0xf] %vm145, %v144
    %s149 = sshllo.u32 0, 4
    %v151 = vld [vmem:[#allocation0] sm:%s149]
    %s152 = sshllo.u32 0, 4
    %153 = vst [vmem:[%s1] sm:%s152] %v151
    %s154 = scalar_lea.vmem [#allocation0], 8
    %v155 = vld [vmem:[%s154] sm:%s149]
    %s156 = sshllo.u32 0, 4
    %s157 = scalar_lea.vmem %s1, 4
    %158 = vst [vmem:[%s157] sm:%s156] %v155
    %s159 = scalar_lea.vmem [#allocation0], 16
    %v160 = vld [vmem:[%s159] sm:%s149]
    %s161 = sshllo.u32 0, 4
    %s162 = smul.addr 4, 2
    %s163 = scalar_lea.vmem %s1, %s162
    %164 = vst [vmem:[%s163] sm:%s161] %v160

// kernel: ssmamba_forward.1
$region0: #{ssmamba_forward.1}
  #allocation0 [shape = 'u32[]', space=smem, size = 0x4, offset = 0x4, fixed_abs, tag = 'smem constant byte address 0x4 - core index']
  #allocation1 [shape = 'u32[144,128]{1,0:T(1,128)}', space=vmem, size = 0x12000, scoped, tag = 'internal scratch']
  %s0 = inlined_call_operand.vmem [shape: f32[8,128], index: 0, kind: input, shape index: {}]
  %s1 = inlined_call_operand.vmem [shape: f32[4,8,1], index: 1, kind: input, shape index: {}]
  %s2 = inlined_call_operand.vmem [shape: f32[3,64,8], index: 2, kind: input, shape index: {}]
  %s3 = inlined_call_operand.vmem [shape: f32[3,4,128], index: 3, kind: input, shape index: {}]
  %s4 = inlined_call_operand.vmem [shape: f32[3,16,16], index: 4, kind: input, shape index: {}]
  %s5 = inlined_call_operand.vmem [shape: f32[3,32,16], index: 5, kind: input, shape index: {}]
  %s6 = inlined_call_operand.vmem [shape: f32[3,8,16], index: 6, kind: input, shape index: {}]
  %s7 = inlined_call_operand.vmem [shape: f32[3,128,1], index: 7, kind: input, shape index: {}]
  %s8 = inlined_call_operand.vmem [shape: f32[32,8], index: 8, kind: input, shape index: {}]
  %s9 = inlined_call_operand.vmem [shape: f32[8,32], index: 9, kind: input, shape index: {}]
  %s10 = inlined_call_operand.vmem [shape: f32[40,1], index: 10, kind: input, shape index: {}]
  %s11 = inlined_call_operand.vmem [shape: f32[8,128], index: 11, kind: output, shape index: {}]
  %s12 = sld [smem:[#allocation0]]
  $region54: #{ssmamba_forward.1} parent=0
    _
  %s14 = ssub.s32 1, %s12
  %s15 = scalar_select 0, %s14, %s12
  // Predicated region
  $region2: #{ssmamba_forward.1} parent=0 // pred_check
    _
  $region3: #{ssmamba_forward.1} parent=0 // pred_check_branch
    %17 = sbr.rel (0) target = $region5
  $region4: #{ssmamba_forward.1} parent=0 // pred_region
    _
  $region5: #{ssmamba_forward.1} parent=0 // pred_fallthru
    _
  // Predicated region
  $region6: #{ssmamba_forward.1} parent=0 // pred_check
    _
  $region7: #{ssmamba_forward.1} parent=0 // pred_check_branch
    %19 = sbr.rel (0) target = $region9
  $region8: #{ssmamba_forward.1} parent=0 // pred_region
    _
  $region9: #{ssmamba_forward.1} parent=0 // pred_fallthru
    _
  // Predicated region
  $region10: #{ssmamba_forward.1} parent=0 // pred_check
    _
  $region11: #{ssmamba_forward.1} parent=0 // pred_check_branch
    %21 = sbr.rel (0) target = $region13
  $region12: #{ssmamba_forward.1} parent=0 // pred_region
    _
  $region13: #{ssmamba_forward.1} parent=0 // pred_fallthru
    _
  // Predicated region
  $region14: #{ssmamba_forward.1} parent=0 // pred_check
    _
  $region15: #{ssmamba_forward.1} parent=0 // pred_check_branch
    %23 = sbr.rel (0) target = $region17
  $region16: #{ssmamba_forward.1} parent=0 // pred_region
    _
  $region17: #{ssmamba_forward.1} parent=0 // pred_fallthru
    _
  // Predicated region
  $region18: #{ssmamba_forward.1} parent=0 // pred_check
    _
  $region19: #{ssmamba_forward.1} parent=0 // pred_check_branch
    %25 = sbr.rel (0) target = $region21
  $region20: #{ssmamba_forward.1} parent=0 // pred_region
    _
  $region21: #{ssmamba_forward.1} parent=0 // pred_fallthru
    _
  // Predicated region
  $region22: #{ssmamba_forward.1} parent=0 // pred_check
    _
  $region23: #{ssmamba_forward.1} parent=0 // pred_check_branch
    %27 = sbr.rel (0) target = $region25
  $region24: #{ssmamba_forward.1} parent=0 // pred_region
    _
  $region25: #{ssmamba_forward.1} parent=0 // pred_fallthru
    _
  // Predicated region
  $region26: #{ssmamba_forward.1} parent=0 // pred_check
    _
  $region27: #{ssmamba_forward.1} parent=0 // pred_check_branch
    %29 = sbr.rel (0) target = $region29
  $region28: #{ssmamba_forward.1} parent=0 // pred_region
    _
  $region29: #{ssmamba_forward.1} parent=0 // pred_fallthru
    _
  // Predicated region
  $region30: #{ssmamba_forward.1} parent=0 // pred_check
    _
  $region31: #{ssmamba_forward.1} parent=0 // pred_check_branch
    %31 = sbr.rel (0) target = $region33
  $region32: #{ssmamba_forward.1} parent=0 // pred_region
    _
  $region33: #{ssmamba_forward.1} parent=0 // pred_fallthru
    _
  // Predicated region
  $region34: #{ssmamba_forward.1} parent=0 // pred_check
    _
  $region35: #{ssmamba_forward.1} parent=0 // pred_check_branch
    %33 = sbr.rel (0) target = $region37
  $region36: #{ssmamba_forward.1} parent=0 // pred_region
    _
  $region37: #{ssmamba_forward.1} parent=0 // pred_fallthru
    _
  // Predicated region
  $region38: #{ssmamba_forward.1} parent=0 // pred_check
    _
  $region39: #{ssmamba_forward.1} parent=0 // pred_check_branch
    %35 = sbr.rel (0) target = $region41
  $region40: #{ssmamba_forward.1} parent=0 // pred_region
    _
  $region41: #{ssmamba_forward.1} parent=0 // pred_fallthru
    _
  // Predicated region
  $region42: #{ssmamba_forward.1} parent=0 // pred_check
    _
  $region43: #{ssmamba_forward.1} parent=0 // pred_check_branch
    %37 = sbr.rel (0) target = $region45
  $region44: #{ssmamba_forward.1} parent=0 // pred_region
    _
  $region45: #{ssmamba_forward.1} parent=0 // pred_fallthru
    _
  %v38 = vld [vmem:[%s0] sm:$0xff]
  %v39 = vld [vmem:[%s1] sm:$0xff]
  %s40 = scalar_lea.vmem %s1, 8
  %v41 = vld [vmem:[%s40] sm:$0xff]
  %v42 = vrot.slane %v38, 4
  %v43 = vadd.f32 %v38, %v42
  %v44 = vrot.slane %v43, 2
  %v45 = vadd.f32 %v43, %v44
  %v46 = vrot.slane %v45, 1
  %v47 = vadd.f32 %v45, %v46
  %v48 = vrcp.pop 8.0
  %v49 = vmul.f32 %v47, %v48
  %v50 = vmul.f32 %v38, %v38
  %v51 = vrot.slane %v50, 4
  %v52 = vadd.f32 %v50, %v51
  %v53 = vrot.slane %v52, 2
  %v54 = vadd.f32 %v52, %v53
  %v55 = vrot.slane %v54, 1
  %v56 = vadd.f32 %v54, %v55
  %v57 = vmul.f32 %v56, %v48
  %v58 = vmul.f32 %v49, %v49
  %v59 = vsub.f32 %v57, %v58
  %v60 = vsub.f32 %v38, %v49
  %v61 = vadd.f32 %v59, 1e-05
  %v62 = vrsqrt.pop %v61
  %v63 = vmul.f32 %v60, %v62
  %65 = vset.pattern.permute.xlu0 0
  %66 = vperm.xlu0 %65, %v39
  %v67 = vpop.permute.xlu0 %66
  %v69 = vmul.f32 %v63, %v67
  %71 = vset.pattern.permute.xlu0 0
  %72 = vperm.xlu0 %71, %v41
  %v73 = vpop.permute.xlu0 %72
  %v75 = vadd.f32 %v69, %v73
  %v76 = vld [vmem:[%s7] sm:$0xff]
  %v77 = vld [vmem:[%s7 + $0x8] sm:$0xff]
  %v78 = vld [vmem:[%s7 + $0x10] sm:$0xff]
  %v79 = vld [vmem:[%s7 + $0x18] sm:$0xff]
  %v80 = vld [vmem:[%s7 + $0x20] sm:$0xff]
  %v81 = vld [vmem:[%s7 + $0x28] sm:$0xff]
  %v82 = vld [vmem:[%s7 + $0x30] sm:$0xff]
  %v83 = vld [vmem:[%s7 + $0x38] sm:$0xff]
  %v84 = vld [vmem:[%s7 + $0x40] sm:$0xff]
  %v85 = vld [vmem:[%s7 + $0x48] sm:$0xff]
  %v86 = vld [vmem:[%s7 + $0x50] sm:$0xff]
  %v87 = vld [vmem:[%s7 + $0x58] sm:$0xff]
  %v88 = vld [vmem:[%s7 + $0x60] sm:$0xff]
  %v89 = vld [vmem:[%s7 + $0x68] sm:$0xff]
  %v90 = vld [vmem:[%s7 + $0x70] sm:$0xff]
  %v91 = vld [vmem:[%s7 + $0x78] sm:$0xff]
  %v92 = vmul.f32 %v75, %v75
  %v93 = vrot.slane %v92, 4
  %v94 = vadd.f32 %v92, %v93
  %v95 = vrot.slane %v94, 2
  %v96 = vadd.f32 %v94, %v95
  %v97 = vrot.slane %v96, 1
  %v98 = vadd.f32 %v96, %v97
  %v99 = vmul.f32 %v98, %v48
  %v100 = vadd.f32 %v99, 1e-05
  %v101 = vrsqrt.pop %v100
  %v102 = vmul.f32 %v75, %v101
  %104 = vset.pattern.permute.xlu0 0
  %105 = vperm.xlu0 %104, %v76
  %v106 = vpop.permute.xlu0 %105
  %v108 = vmul.f32 %v102, %v106
  %v109 = vld [vmem:[%s2] sm:$0xff]
  %v110 = vld [vmem:[%s2 + $0x8] sm:$0xff]
  %v111 = vld [vmem:[%s2 + $0x10] sm:$0xff]
  %v112 = vld [vmem:[%s2 + $0x18] sm:$0xff]
  %v113 = vld [vmem:[%s2 + $0x20] sm:$0xff]
  %v114 = vld [vmem:[%s2 + $0x28] sm:$0xff]
  %v115 = vld [vmem:[%s2 + $0x30] sm:$0xff]
  %v116 = vld [vmem:[%s2 + $0x38] sm:$0xff]
  %118 = vset.pattern.permute.xlu0 0
  %119 = vperm.xlu0 %118, %v77
  %v120 = vpop.permute.xlu0 %119
  %123 = vset.pattern.permute.xlu0 0
  %124 = vperm.xlu0 %123, %v78
  %v125 = vpop.permute.xlu0 %124
  %128 = vset.pattern.permute.xlu0 0
  %129 = vperm.xlu0 %128, %v79
  %v130 = vpop.permute.xlu0 %129
  %133 = vset.pattern.permute.xlu0 0
  %134 = vperm.xlu0 %133, %v80
  %v135 = vpop.permute.xlu0 %134
  %138 = vset.pattern.permute.xlu0 0
  %139 = vperm.xlu0 %138, %v81
  %v140 = vpop.permute.xlu0 %139
  %143 = vset.pattern.permute.xlu0 0
  %144 = vperm.xlu0 %143, %v82
  %v145 = vpop.permute.xlu0 %144
  %148 = vset.pattern.permute.xlu0 0
  %149 = vperm.xlu0 %148, %v83
  %v150 = vpop.permute.xlu0 %149
  %153 = vset.pattern.permute.xlu0 0
  %154 = vperm.xlu0 %153, %v84
  %v155 = vpop.permute.xlu0 %154
  %vm157 = vcmask 64512
  %v159 = vsel %vm157, %v109, 0
  %v162 = vsel %vm157, %v110, 0
  %v165 = vsel %vm157, %v111, 0
  %v168 = vsel %vm157, %v112, 0
  %v171 = vsel %vm157, %v113, 0
  %v174 = vsel %vm157, %v114, 0
  %v177 = vsel %vm157, %v115, 0
  %v180 = vsel %vm157, %v116, 0
  %182 = vmatprep.subr.mxu0 0.0
  %183 = vmatpush1.msra.mxu0 %v108
  %184 = vmatprep.subr.mxu0 0.0
  %185 = vmatpush1.msra.mxu0 0.0
  %186 = vmatprep.subr.mxu0 0.0
  %187 = vmatpush1.msra.mxu0 0.0
  %188 = vmatprep.subr.mxu0 0.0
  %189 = vmatpush1.msra.mxu0 0.0
  %190 = vmatprep.subr.mxu0 0.0
  %191 = vmatpush1.msra.mxu0 0.0
  %192 = vmatprep.subr.mxu0 0.0
  %193 = vmatpush1.msra.mxu0 0.0
  %194 = vmatprep.subr.mxu0 0.0
  %195 = vmatpush1.msra.mxu0 0.0
  %196 = vmatprep.subr.mxu0 0.0
  %197 = vmatpush1.msra.mxu0 0.0
  %198 = vmatprep.subr.mxu0 0.0
  %199 = vmatpush1.msra.mxu0 0.0
  %200 = vmatprep.subr.mxu0 0.0
  %201 = vmatpush1.msra.mxu0 0.0
  %202 = vmatprep.subr.mxu0 0.0
  %203 = vmatpush1.msra.mxu0 0.0
  %204 = vmatprep.subr.mxu0 0.0
  %205 = vmatpush1.msra.mxu0 0.0
  %206 = vmatprep.subr.mxu0 0.0
  %207 = vmatpush1.msra.mxu0 0.0
  %208 = vmatprep.subr.mxu0 0.0
  %209 = vmatpush1.msra.mxu0 0.0
  %210 = vmatprep.subr.mxu0 0.0
  %211 = vmatpush1.msra.mxu0 0.0
  %212 = vmatprep.subr.mxu0 0.0
  %213 = vmatpush1.msra.mxu0 0.0
  %214 = vmatprep.subr.mxu0 0.0
  %215 = vmatpush1.msra.mxu0 0.0
  %216 = vmatprep.subr.mxu0 0.0
  %217 = vmatpush1.msra.mxu0 0.0
  %218 = vmatprep.subr.mxu0 0.0
  %219 = vmatpush1.msra.mxu0 0.0
  %220 = vmatprep.subr.mxu0 0.0
  %221 = vmatpush1.msra.mxu0 0.0
  %222 = vmatprep.subr.mxu0 0.0
  %223 = vmatpush1.msra.mxu0 0.0
  %224 = vmatprep.subr.mxu0 0.0
  %225 = vmatpush1.msra.mxu0 0.0
  %226 = vmatprep.subr.mxu0 0.0
  %227 = vmatpush1.msra.mxu0 0.0
  %228 = vmatprep.subr.mxu0 0.0
  %229 = vmatpush1.msra.mxu0 0.0
  %230 = vmatprep.subr.mxu0 0.0
  %231 = vmatpush1.msra.mxu0 0.0
  %232 = vmatprep.subr.mxu0 0.0
  %233 = vmatpush1.msra.mxu0 0.0
  %234 = vmatprep.subr.mxu0 0.0
  %235 = vmatpush1.msra.mxu0 0.0
  %236 = vmatprep.subr.mxu0 0.0
  %237 = vmatpush1.msra.mxu0 0.0
  %238 = vmatprep.subr.mxu0 0.0
  %239 = vmatpush1.msra.mxu0 0.0
  %240 = vmatprep.subr.mxu0 0.0
  %241 = vmatpush1.msra.mxu0 0.0
  %242 = vmatprep.subr.mxu0 0.0
  %243 = vmatpush1.msra.mxu0 0.0
  %244 = vmatprep.subr.mxu0 0.0
  %245 = vmatpush1.msra.mxu0 0.0
  %246 = vmatprep.mubr.f32.mxu0 0.0
  %247 = vmatmul.mubr.f32.gmra.mrb[0].mxu0 %v159
  %v248 = vpop.f32.mrb[0].mxu0
  %v249 = vadd.f32 %v120, %v248
  %v250 = vpop.f32.mrb[0].mxu0
  %251 = vmatprep.mubr.f32.mxu0 0.0
  %252 = vmatmul.mubr.f32.gmra.mrb[0].mxu0 %v162
  %v253 = vpop.f32.mrb[0].mxu0
  %v254 = vadd.f32 %v125, %v253
  %v255 = vpop.f32.mrb[0].mxu0
  %256 = vmatprep.mubr.f32.mxu0 0.0
  %257 = vmatmul.mubr.f32.gmra.mrb[0].mxu0 %v165
  %v258 = vpop.f32.mrb[0].mxu0
  %v259 = vadd.f32 %v130, %v258
  %v260 = vpop.f32.mrb[0].mxu0
  %261 = vmatprep.mubr.f32.mxu0 0.0
  %262 = vmatmul.mubr.f32.gmra.mrb[0].mxu0 %v168
  %v263 = vpop.f32.mrb[0].mxu0
  %v264 = vadd.f32 %v135, %v263
  %v265 = vpop.f32.mrb[0].mxu0
  %266 = vmatprep.mubr.f32.mxu0 0.0
  %267 = vmatmul.mubr.f32.gmra.mrb[0].mxu0 %v171
  %v268 = vpop.f32.mrb[0].mxu0
  %v269 = vadd.f32 %v140, %v268
  %v270 = vpop.f32.mrb[0].mxu0
  %271 = vmatprep.mubr.f32.mxu0 0.0
  %272 = vmatmul.mubr.f32.gmra.mrb[0].mxu0 %v174
  %v273 = vpop.f32.mrb[0].mxu0
  %v274 = vadd.f32 %v145, %v273
  %v275 = vpop.f32.mrb[0].mxu0
  %276 = vmatprep.mubr.f32.mxu0 0.0
  %277 = vmatmul.mubr.f32.gmra.mrb[0].mxu0 %v177
  %v278 = vpop.f32.mrb[0].mxu0
  %v279 = vadd.f32 %v150, %v278
  %v280 = vpop.f32.mrb[0].mxu0
  %281 = vmatprep.mubr.f32.mxu0 0.0
  %282 = vmatmul.mubr.f32.gmra.mrb[0].mxu0 %v180
  %v283 = vpop.f32.mrb[0].mxu0
  %v284 = vadd.f32 %v155, %v283
  %v285 = vpop.f32.mrb[0].mxu0
  %286 = vdwg.mxu0
  %v287 = vld [vmem:[%s3] sm:$0xf]
  %v288 = vlaneseq
  %v289 = vshrl.u32 %v288, 7
  %v290 = vsub.s32 0, %v289
  %v291 = vrot.slane %v287, %v290
  %v292 = vmul.f32 %v291, %v259
  %v293 = vmul.f32 %v291, %v264
  %v294 = vlaneseq
  %v295 = vshrl.u32 %v294, 7
  %v296 = vsub.s32 1, %v295
  %v297 = vrot.slane %v287, %v296
  %v298 = vmul.f32 %v297, %v249
  %v299 = vmul.f32 %v297, %v254
  %v300 = vadd.f32 %v292, %v298
  %v301 = vadd.f32 %v293, %v299
  %v302 = vlaneseq
  %v303 = vshrl.u32 %v302, 7
  %v304 = vsub.s32 2, %v303
  %v305 = vrot.slane %v287, %v304
  %v306 = vmul.f32 %v305, %v269
  %v307 = vmul.f32 %v305, %v274
  %v308 = vadd.f32 %v300, %v306
  %v309 = vadd.f32 %v301, %v307
  %v310 = vlaneseq
  %v311 = vshrl.u32 %v310, 7
  %v312 = vsub.s32 3, %v311
  %v313 = vrot.slane %v287, %v312
  %v314 = vadd.f32 %v308, %v313
  %v315 = vadd.f32 %v309, %v313
  %v316 = vsub.f32 0.0, %v314
  %v317 = vsub.f32 0.0, %v315
  %v318 = vmul.f32 %v316, 1.442695
  %v319 = vpow.pop %v318
  %v320 = vmul.f32 %v317, 1.442695
  %v321 = vpow.pop %v320
  %v322 = vadd.f32 %v319, 1.0
  %v323 = vadd.f32 %v321, 1.0
  %v324 = vrcp.pop %v322
  %v325 = vmul.f32 1.0, %v324
  %v326 = vrcp.pop %v323
  %v327 = vmul.f32 1.0, %v326
  %v328 = vmul.f32 %v314, %v325
  %v329 = vmul.f32 %v315, %v327
  %v330 = vld [vmem:[%s4] sm:$0xff]
  %v331 = vld [vmem:[%s4 + $0x8] sm:$0xff]
  %333 = vset.pattern.permute.xlu0 0
  %334 = vperm.xlu0 %333, %v85
  %v335 = vpop.permute.xlu0 %334
  %338 = vset.pattern.permute.xlu0 0
  %339 = vperm.xlu0 %338, %v86
  %v340 = vpop.permute.xlu0 %339
  %vm342 = vcmask 130048
  %v344 = vsel %vm342, %v330, 0
  %v347 = vsel %vm342, %v331, 0
  %349 = vmatprep.subr.mxu0 0.0
  %350 = vmatpush1.msra.mxu0 %v328
  %351 = vmatprep.subr.mxu0 0.0
  %352 = vmatpush1.msra.mxu0 %v329
  %353 = vmatprep.subr.mxu0 0.0
  %354 = vmatpush1.msra.mxu0 0.0
  %355 = vmatprep.subr.mxu0 0.0
  %356 = vmatpush1.msra.mxu0 0.0
  %357 = vmatprep.subr.mxu0 0.0
  %358 = vmatpush1.msra.mxu0 0.0
  %359 = vmatprep.subr.mxu0 0.0
  %360 = vmatpush1.msra.mxu0 0.0
  %361 = vmatprep.subr.mxu0 0.0
  %362 = vmatpush1.msra.mxu0 0.0
  %363 = vmatprep.subr.mxu0 0.0
  %364 = vmatpush1.msra.mxu0 0.0
  %365 = vmatprep.subr.mxu0 0.0
  %366 = vmatpush1.msra.mxu0 0.0
  %367 = vmatprep.subr.mxu0 0.0
  %368 = vmatpush1.msra.mxu0 0.0
  %369 = vmatprep.subr.mxu0 0.0
  %370 = vmatpush1.msra.mxu0 0.0
  %371 = vmatprep.subr.mxu0 0.0
  %372 = vmatpush1.msra.mxu0 0.0
  %373 = vmatprep.subr.mxu0 0.0
  %374 = vmatpush1.msra.mxu0 0.0
  %375 = vmatprep.subr.mxu0 0.0
  %376 = vmatpush1.msra.mxu0 0.0
  %377 = vmatprep.subr.mxu0 0.0
  %378 = vmatpush1.msra.mxu0 0.0
  %379 = vmatprep.subr.mxu0 0.0
  %380 = vmatpush1.msra.mxu0 0.0
  %381 = vmatprep.subr.mxu0 0.0
  %382 = vmatpush1.msra.mxu0 0.0
  %383 = vmatprep.subr.mxu0 0.0
  %384 = vmatpush1.msra.mxu0 0.0
  %385 = vmatprep.subr.mxu0 0.0
  %386 = vmatpush1.msra.mxu0 0.0
  %387 = vmatprep.subr.mxu0 0.0
  %388 = vmatpush1.msra.mxu0 0.0
  %389 = vmatprep.subr.mxu0 0.0
  %390 = vmatpush1.msra.mxu0 0.0
  %391 = vmatprep.subr.mxu0 0.0
  %392 = vmatpush1.msra.mxu0 0.0
  %393 = vmatprep.subr.mxu0 0.0
  %394 = vmatpush1.msra.mxu0 0.0
  %395 = vmatprep.subr.mxu0 0.0
  %396 = vmatpush1.msra.mxu0 0.0
  %397 = vmatprep.subr.mxu0 0.0
  %398 = vmatpush1.msra.mxu0 0.0
  %399 = vmatprep.subr.mxu0 0.0
  %400 = vmatpush1.msra.mxu0 0.0
  %401 = vmatprep.subr.mxu0 0.0
  %402 = vmatpush1.msra.mxu0 0.0
  %403 = vmatprep.subr.mxu0 0.0
  %404 = vmatpush1.msra.mxu0 0.0
  %405 = vmatprep.subr.mxu0 0.0
  %406 = vmatpush1.msra.mxu0 0.0
  %407 = vmatprep.subr.mxu0 0.0
  %408 = vmatpush1.msra.mxu0 0.0
  %409 = vmatprep.subr.mxu0 0.0
  %410 = vmatpush1.msra.mxu0 0.0
  %411 = vmatprep.subr.mxu0 0.0
  %412 = vmatpush1.msra.mxu0 0.0
  %413 = vmatprep.mubr.f32.mxu0 0.0
  %414 = vmatmul.mubr.f32.gmra.mrb[0].mxu0 %v344
  %v415 = vpop.f32.mrb[0].mxu0
  %v416 = vadd.f32 %v335, %v415
  %v417 = vpop.f32.mrb[0].mxu0
  %418 = vmatprep.mubr.f32.mxu0 0.0
  %419 = vmatmul.mubr.f32.gmra.mrb[0].mxu0 %v347
  %v420 = vpop.f32.mrb[0].mxu0
  %v421 = vadd.f32 %v340, %v420
  %v422 = vpop.f32.mrb[0].mxu0
  %423 = vdwg.mxu0
  %v424 = vld [vmem:[%s5] sm:$0xff]
  %v425 = vld [vmem:[%s5 + $0x8] sm:$0xff]
  %v426 = vld [vmem:[%s5 + $0x10] sm:$0xff]
  %v427 = vld [vmem:[%s5 + $0x18] sm:$0xff]
  %429 = vset.pattern.permute.xlu0 0
  %430 = vperm.xlu0 %429, %v87
  %v431 = vpop.permute.xlu0 %430
  %434 = vset.pattern.permute.xlu0 0
  %435 = vperm.xlu0 %434, %v88
  %v436 = vpop.permute.xlu0 %435
  %439 = vset.pattern.permute.xlu0 0
  %440 = vperm.xlu0 %439, %v89
  %v441 = vpop.permute.xlu0 %440
  %444 = vset.pattern.permute.xlu0 0
  %445 = vperm.xlu0 %444, %v90
  %v446 = vpop.permute.xlu0 %445
  %v449 = vsel %vm342, %v424, 0
  %v452 = vsel %vm342, %v425, 0
  %v455 = vsel %vm342, %v426, 0
  %v458 = vsel %vm342, %v427, 0
  %460 = vmatprep.subr.mxu0 0.0
  %461 = vmatpush1.msra.mxu0 %v416
  %462 = vmatprep.subr.mxu0 0.0
  %463 = vmatpush1.msra.mxu0 %v421
  %464 = vmatprep.subr.mxu0 0.0
  %465 = vmatpush1.msra.mxu0 0.0
  %466 = vmatprep.subr.mxu0 0.0
  %467 = vmatpush1.msra.mxu0 0.0
  %468 = vmatprep.subr.mxu0 0.0
  %469 = vmatpush1.msra.mxu0 0.0
  %470 = vmatprep.subr.mxu0 0.0
  %471 = vmatpush1.msra.mxu0 0.0
  %472 = vmatprep.subr.mxu0 0.0
  %473 = vmatpush1.msra.mxu0 0.0
  %474 = vmatprep.subr.mxu0 0.0
  %475 = vmatpush1.msra.mxu0 0.0
  %476 = vmatprep.subr.mxu0 0.0
  %477 = vmatpush1.msra.mxu0 0.0
  %478 = vmatprep.subr.mxu0 0.0
  %479 = vmatpush1.msra.mxu0 0.0
  %480 = vmatprep.subr.mxu0 0.0
  %481 = vmatpush1.msra.mxu0 0.0
  %482 = vmatprep.subr.mxu0 0.0
  %483 = vmatpush1.msra.mxu0 0.0
  %484 = vmatprep.subr.mxu0 0.0
  %485 = vmatpush1.msra.mxu0 0.0
  %486 = vmatprep.subr.mxu0 0.0
  %487 = vmatpush1.msra.mxu0 0.0
  %488 = vmatprep.subr.mxu0 0.0
  %489 = vmatpush1.msra.mxu0 0.0
  %490 = vmatprep.subr.mxu0 0.0
  %491 = vmatpush1.msra.mxu0 0.0
  %492 = vmatprep.subr.mxu0 0.0
  %493 = vmatpush1.msra.mxu0 0.0
  %494 = vmatprep.subr.mxu0 0.0
  %495 = vmatpush1.msra.mxu0 0.0
  %496 = vmatprep.subr.mxu0 0.0
  %497 = vmatpush1.msra.mxu0 0.0
  %498 = vmatprep.subr.mxu0 0.0
  %499 = vmatpush1.msra.mxu0 0.0
  %500 = vmatprep.subr.mxu0 0.0
  %501 = vmatpush1.msra.mxu0 0.0
  %502 = vmatprep.subr.mxu0 0.0
  %503 = vmatpush1.msra.mxu0 0.0
  %504 = vmatprep.subr.mxu0 0.0
  %505 = vmatpush1.msra.mxu0 0.0
  %506 = vmatprep.subr.mxu0 0.0
  %507 = vmatpush1.msra.mxu0 0.0
  %508 = vmatprep.subr.mxu0 0.0
  %509 = vmatpush1.msra.mxu0 0.0
  %510 = vmatprep.subr.mxu0 0.0
  %511 = vmatpush1.msra.mxu0 0.0
  %512 = vmatprep.subr.mxu0 0.0
  %513 = vmatpush1.msra.mxu0 0.0
  %514 = vmatprep.subr.mxu0 0.0
  %515 = vmatpush1.msra.mxu0 0.0
  %516 = vmatprep.subr.mxu0 0.0
  %517 = vmatpush1.msra.mxu0 0.0
  %518 = vmatprep.subr.mxu0 0.0
  %519 = vmatpush1.msra.mxu0 0.0
  %520 = vmatprep.subr.mxu0 0.0
  %521 = vmatpush1.msra.mxu0 0.0
  %522 = vmatprep.subr.mxu0 0.0
  %523 = vmatpush1.msra.mxu0 0.0
  %524 = vmatprep.mubr.f32.mxu0 0.0
  %525 = vmatmul.mubr.f32.gmra.mrb[0].mxu0 %v449
  %v526 = vpop.f32.mrb[0].mxu0
  %v527 = vadd.f32 %v431, %v526
  %v528 = vpop.f32.mrb[0].mxu0
  %529 = vmatprep.mubr.f32.mxu0 0.0
  %530 = vmatmul.mubr.f32.gmra.mrb[0].mxu0 %v452
  %v531 = vpop.f32.mrb[0].mxu0
  %v532 = vadd.f32 %v436, %v531
  %v533 = vpop.f32.mrb[0].mxu0
  %534 = vmatprep.mubr.f32.mxu0 0.0
  %535 = vmatmul.mubr.f32.gmra.mrb[0].mxu0 %v455
  %v536 = vpop.f32.mrb[0].mxu0
  %v537 = vadd.f32 %v441, %v536
  %v538 = vpop.f32.mrb[0].mxu0
  %539 = vmatprep.mubr.f32.mxu0 0.0
  %540 = vmatmul.mubr.f32.gmra.mrb[0].mxu0 %v458
  %v541 = vpop.f32.mrb[0].mxu0
  %v542 = vadd.f32 %v446, %v541
  %v543 = vpop.f32.mrb[0].mxu0
  %544 = vdwg.mxu0
  %v545 = vmax.f32 %v527, 0.0
  %v546 = vmax.f32 %v532, 0.0
  %v547 = vand.u32 2147483647, %v527
  %v548 = vand.u32 2147483647, %v532
  %v549 = vsub.f32 0.0, %v547
  %v550 = vsub.f32 0.0, %v548
  %v551 = vmul.f32 %v549, 1.442695
  %v552 = vpow.pop %v551
  %v553 = vmul.f32 %v550, 1.442695
  %v554 = vpow.pop %v553
  %v555 = vadd.f32 %v552, 1.0
  %v556 = vadd.f32 %v554, 1.0
  %v557 = vlog2.pop %v555
  %v558 = vmul.f32 %v557, 0.6931472
  %v559 = vlog2.pop %v556
  %v560 = vmul.f32 %v559, 0.6931472
  %v561 = vadd.f32 %v545, %v558
  %v562 = vadd.f32 %v546, %v560
  %v563 = vmul.f32 %v416, %v561
  %v564 = vmul.f32 %v421, %v562
  %v565 = vmul.f32 %v537, %v542
  %v566 = vrot.slane %v565, 4
  %v567 = vadd.f32 %v565, %v566
  %v568 = vrot.slane %v567, 2
  %v569 = vadd.f32 %v567, %v568
  %v570 = vrot.slane %v569, 1
  %v571 = vadd.f32 %v569, %v570
  %v572 = vmul.f32 %v563, %v571
  %v573 = vmul.f32 %v564, %v571
  %v574 = vsub.f32 0.0, %v572
  %v575 = vsub.f32 0.0, %v573
  %v576 = vmul.f32 %v574, 1.442695
  %v577 = vpow.pop %v576
  %v578 = vmul.f32 %v575, 1.442695
  %v579 = vpow.pop %v578
  %v580 = vadd.f32 %v577, 1.0
  %v581 = vadd.f32 %v579, 1.0
  %v582 = vrcp.pop %v580
  %v583 = vmul.f32 1.0, %v582
  %v584 = vrcp.pop %v581
  %v585 = vmul.f32 1.0, %v584
  %v586 = vmul.f32 %v572, %v583
  %v587 = vmul.f32 %v573, %v585
  %v588 = vsub.f32 0.0, %v279
  %v589 = vsub.f32 0.0, %v284
  %v590 = vmul.f32 %v588, 1.442695
  %v591 = vpow.pop %v590
  %v592 = vmul.f32 %v589, 1.442695
  %v593 = vpow.pop %v592
  %v594 = vadd.f32 %v591, 1.0
  %v595 = vadd.f32 %v593, 1.0
  %v596 = vrcp.pop %v594
  %v597 = vmul.f32 1.0, %v596
  %v598 = vrcp.pop %v595
  %v599 = vmul.f32 1.0, %v598
  %v600 = vmul.f32 %v279, %v597
  %v601 = vmul.f32 %v284, %v599
  %v602 = vmul.f32 %v586, %v600
  %v603 = vmul.f32 %v587, %v601
  %v604 = vld [vmem:[%s6] sm:$0xff]
  %606 = vset.pattern.permute.xlu0 0
  %607 = vperm.xlu0 %606, %v91
  %v608 = vpop.permute.xlu0 %607
  %v611 = vsel %vm342, %v604, 0
  %613 = vmatprep.subr.mxu0 0.0
  %614 = vmatpush1.msra.mxu0 %v602
  %615 = vmatprep.subr.mxu0 0.0
  %616 = vmatpush1.msra.mxu0 %v603
  %617 = vmatprep.subr.mxu0 0.0
  %618 = vmatpush1.msra.mxu0 0.0
  %619 = vmatprep.subr.mxu0 0.0
  %620 = vmatpush1.msra.mxu0 0.0
  %621 = vmatprep.subr.mxu0 0.0
  %622 = vmatpush1.msra.mxu0 0.0
  %623 = vmatprep.subr.mxu0 0.0
  %624 = vmatpush1.msra.mxu0 0.0
  %625 = vmatprep.subr.mxu0 0.0
  %626 = vmatpush1.msra.mxu0 0.0
  %627 = vmatprep.subr.mxu0 0.0
  %628 = vmatpush1.msra.mxu0 0.0
  %629 = vmatprep.subr.mxu0 0.0
  %630 = vmatpush1.msra.mxu0 0.0
  %631 = vmatprep.subr.mxu0 0.0
  %632 = vmatpush1.msra.mxu0 0.0
  %633 = vmatprep.subr.mxu0 0.0
  %634 = vmatpush1.msra.mxu0 0.0
  %635 = vmatprep.subr.mxu0 0.0
  %636 = vmatpush1.msra.mxu0 0.0
  %637 = vmatprep.subr.mxu0 0.0
  %638 = vmatpush1.msra.mxu0 0.0
  %639 = vmatprep.subr.mxu0 0.0
  %640 = vmatpush1.msra.mxu0 0.0
  %641 = vmatprep.subr.mxu0 0.0
  %642 = vmatpush1.msra.mxu0 0.0
  %643 = vmatprep.subr.mxu0 0.0
  %644 = vmatpush1.msra.mxu0 0.0
  %645 = vmatprep.subr.mxu0 0.0
  %646 = vmatpush1.msra.mxu0 0.0
  %647 = vmatprep.subr.mxu0 0.0
  %648 = vmatpush1.msra.mxu0 0.0
  %649 = vmatprep.subr.mxu0 0.0
  %650 = vmatpush1.msra.mxu0 0.0
  %651 = vmatprep.subr.mxu0 0.0
  %652 = vmatpush1.msra.mxu0 0.0
  %653 = vmatprep.subr.mxu0 0.0
  %654 = vmatpush1.msra.mxu0 0.0
  %655 = vmatprep.subr.mxu0 0.0
  %656 = vmatpush1.msra.mxu0 0.0
  %657 = vmatprep.subr.mxu0 0.0
  %658 = vmatpush1.msra.mxu0 0.0
  %659 = vmatprep.subr.mxu0 0.0
  %660 = vmatpush1.msra.mxu0 0.0
  %661 = vmatprep.subr.mxu0 0.0
  %662 = vmatpush1.msra.mxu0 0.0
  %663 = vmatprep.subr.mxu0 0.0
  %664 = vmatpush1.msra.mxu0 0.0
  %665 = vmatprep.subr.mxu0 0.0
  %666 = vmatpush1.msra.mxu0 0.0
  %667 = vmatprep.subr.mxu0 0.0
  %668 = vmatpush1.msra.mxu0 0.0
  %669 = vmatprep.subr.mxu0 0.0
  %670 = vmatpush1.msra.mxu0 0.0
  %671 = vmatprep.subr.mxu0 0.0
  %672 = vmatpush1.msra.mxu0 0.0
  %673 = vmatprep.subr.mxu0 0.0
  %674 = vmatpush1.msra.mxu0 0.0
  %675 = vmatprep.subr.mxu0 0.0
  %676 = vmatpush1.msra.mxu0 0.0
  %677 = vmatprep.mubr.f32.mxu0 0.0
  %678 = vmatmul.mubr.f32.gmra.mrb[0].mxu0 %v611
  %v679 = vpop.f32.mrb[0].mxu0
  %v680 = vadd.f32 %v608, %v679
  %v681 = vpop.f32.mrb[0].mxu0
  %682 = vdwg.mxu0
  %s683 = scalar_lea.vmem %s7, 128
  %v684 = vld [vmem:[%s683] sm:$0xff]
  %v685 = vld [vmem:[%s683 + $0x8] sm:$0xff]
  %v686 = vld [vmem:[%s683 + $0x10] sm:$0xff]
  %v687 = vld [vmem:[%s683 + $0x18] sm:$0xff]
  %v688 = vld [vmem:[%s683 + $0x20] sm:$0xff]
  %v689 = vld [vmem:[%s683 + $0x28] sm:$0xff]
  %v690 = vld [vmem:[%s683 + $0x30] sm:$0xff]
  %v691 = vld [vmem:[%s683 + $0x38] sm:$0xff]
  %v692 = vld [vmem:[%s683 + $0x40] sm:$0xff]
  %v693 = vld [vmem:[%s683 + $0x48] sm:$0xff]
  %v694 = vld [vmem:[%s683 + $0x50] sm:$0xff]
  %v695 = vld [vmem:[%s683 + $0x58] sm:$0xff]
  %v696 = vld [vmem:[%s683 + $0x60] sm:$0xff]
  %v697 = vld [vmem:[%s683 + $0x68] sm:$0xff]
  %v698 = vld [vmem:[%s683 + $0x70] sm:$0xff]
  %v699 = vld [vmem:[%s683 + $0x78] sm:$0xff]
  %v700 = vmul.f32 %v680, %v680
  %v701 = vrot.slane %v700, 4
  %v702 = vadd.f32 %v700, %v701
  %v703 = vrot.slane %v702, 2
  %v704 = vadd.f32 %v702, %v703
  %v705 = vrot.slane %v704, 1
  %v706 = vadd.f32 %v704, %v705
  %v707 = vmul.f32 %v706, %v48
  %v708 = vadd.f32 %v707, 1e-05
  %v709 = vrsqrt.pop %v708
  %v710 = vmul.f32 %v680, %v709
  %712 = vset.pattern.permute.xlu0 0
  %713 = vperm.xlu0 %712, %v684
  %v714 = vpop.permute.xlu0 %713
  %v716 = vmul.f32 %v710, %v714
  %s717 = scalar_lea.vmem %s2, 64
  %v718 = vld [vmem:[%s717] sm:$0xff]
  %v719 = vld [vmem:[%s717 + $0x8] sm:$0xff]
  %v720 = vld [vmem:[%s717 + $0x10] sm:$0xff]
  %v721 = vld [vmem:[%s717 + $0x18] sm:$0xff]
  %v722 = vld [vmem:[%s717 + $0x20] sm:$0xff]
  %v723 = vld [vmem:[%s717 + $0x28] sm:$0xff]
  %v724 = vld [vmem:[%s717 + $0x30] sm:$0xff]
  %v725 = vld [vmem:[%s717 + $0x38] sm:$0xff]
  %727 = vset.pattern.permute.xlu0 0
  %728 = vperm.xlu0 %727, %v685
  %v729 = vpop.permute.xlu0 %728
  %732 = vset.pattern.permute.xlu0 0
  %733 = vperm.xlu0 %732, %v686
  %v734 = vpop.permute.xlu0 %733
  %737 = vset.pattern.permute.xlu0 0
  %738 = vperm.xlu0 %737, %v687
  %v739 = vpop.permute.xlu0 %738
  %742 = vset.pattern.permute.xlu0 0
  %743 = vperm.xlu0 %742, %v688
  %v744 = vpop.permute.xlu0 %743
  %747 = vset.pattern.permute.xlu0 0
  %748 = vperm.xlu0 %747, %v689
  %v749 = vpop.permute.xlu0 %748
  %752 = vset.pattern.permute.xlu0 0
  %753 = vperm.xlu0 %752, %v690
  %v754 = vpop.permute.xlu0 %753
  %757 = vset.pattern.permute.xlu0 0
  %758 = vperm.xlu0 %757, %v691
  %v759 = vpop.permute.xlu0 %758
  %762 = vset.pattern.permute.xlu0 0
  %763 = vperm.xlu0 %762, %v692
  %v764 = vpop.permute.xlu0 %763
  %v767 = vsel %vm157, %v718, 0
  %v770 = vsel %vm157, %v719, 0
  %v773 = vsel %vm157, %v720, 0
  %v776 = vsel %vm157, %v721, 0
  %v779 = vsel %vm157, %v722, 0
  %v782 = vsel %vm157, %v723, 0
  %v785 = vsel %vm157, %v724, 0
  %v788 = vsel %vm157, %v725, 0
  %790 = vmatprep.subr.mxu0 0.0
  %791 = vmatpush1.msra.mxu0 %v716
  %792 = vmatprep.subr.mxu0 0.0
  %793 = vmatpush1.msra.mxu0 0.0
  %794 = vmatprep.subr.mxu0 0.0
  %795 = vmatpush1.msra.mxu0 0.0
  %796 = vmatprep.subr.mxu0 0.0
  %797 = vmatpush1.msra.mxu0 0.0
  %798 = vmatprep.subr.mxu0 0.0
  %799 = vmatpush1.msra.mxu0 0.0
  %800 = vmatprep.subr.mxu0 0.0
  %801 = vmatpush1.msra.mxu0 0.0
  %802 = vmatprep.subr.mxu0 0.0
  %803 = vmatpush1.msra.mxu0 0.0
  %804 = vmatprep.subr.mxu0 0.0
  %805 = vmatpush1.msra.mxu0 0.0
  %806 = vmatprep.subr.mxu0 0.0
  %807 = vmatpush1.msra.mxu0 0.0
  %808 = vmatprep.subr.mxu0 0.0
  %809 = vmatpush1.msra.mxu0 0.0
  %810 = vmatprep.subr.mxu0 0.0
  %811 = vmatpush1.msra.mxu0 0.0
  %812 = vmatprep.subr.mxu0 0.0
  %813 = vmatpush1.msra.mxu0 0.0
  %814 = vmatprep.subr.mxu0 0.0
  %815 = vmatpush1.msra.mxu0 0.0
  %816 = vmatprep.subr.mxu0 0.0
  %817 = vmatpush1.msra.mxu0 0.0
  %818 = vmatprep.subr.mxu0 0.0
  %819 = vmatpush1.msra.mxu0 0.0
  %820 = vmatprep.subr.mxu0 0.0
  %821 = vmatpush1.msra.mxu0 0.0
  %822 = vmatprep.subr.mxu0 0.0
  %823 = vmatpush1.msra.mxu0 0.0
  %824 = vmatprep.subr.mxu0 0.0
  %825 = vmatpush1.msra.mxu0 0.0
  %826 = vmatprep.subr.mxu0 0.0
  %827 = vmatpush1.msra.mxu0 0.0
  %828 = vmatprep.subr.mxu0 0.0
  %829 = vmatpush1.msra.mxu0 0.0
  %830 = vmatprep.subr.mxu0 0.0
  %831 = vmatpush1.msra.mxu0 0.0
  %832 = vmatprep.subr.mxu0 0.0
  %833 = vmatpush1.msra.mxu0 0.0
  %834 = vmatprep.subr.mxu0 0.0
  %835 = vmatpush1.msra.mxu0 0.0
  %836 = vmatprep.subr.mxu0 0.0
  %837 = vmatpush1.msra.mxu0 0.0
  %838 = vmatprep.subr.mxu0 0.0
  %839 = vmatpush1.msra.mxu0 0.0
  %840 = vmatprep.subr.mxu0 0.0
  %841 = vmatpush1.msra.mxu0 0.0
  %842 = vmatprep.subr.mxu0 0.0
  %843 = vmatpush1.msra.mxu0 0.0
  %844 = vmatprep.subr.mxu0 0.0
  %845 = vmatpush1.msra.mxu0 0.0
  %846 = vmatprep.subr.mxu0 0.0
  %847 = vmatpush1.msra.mxu0 0.0
  %848 = vmatprep.subr.mxu0 0.0
  %849 = vmatpush1.msra.mxu0 0.0
  %850 = vmatprep.subr.mxu0 0.0
  %851 = vmatpush1.msra.mxu0 0.0
  %852 = vmatprep.subr.mxu0 0.0
  %853 = vmatpush1.msra.mxu0 0.0
  %854 = vmatprep.mubr.f32.mxu0 0.0
  %855 = vmatmul.mubr.f32.gmra.mrb[0].mxu0 %v767
  %v856 = vpop.f32.mrb[0].mxu0
  %v857 = vadd.f32 %v729, %v856
  %v858 = vpop.f32.mrb[0].mxu0
  %859 = vmatprep.mubr.f32.mxu0 0.0
  %860 = vmatmul.mubr.f32.gmra.mrb[0].mxu0 %v770
  %v861 = vpop.f32.mrb[0].mxu0
  %v862 = vadd.f32 %v734, %v861
  %v863 = vpop.f32.mrb[0].mxu0
  %864 = vmatprep.mubr.f32.mxu0 0.0
  %865 = vmatmul.mubr.f32.gmra.mrb[0].mxu0 %v773
  %v866 = vpop.f32.mrb[0].mxu0
  %v867 = vadd.f32 %v739, %v866
  %v868 = vpop.f32.mrb[0].mxu0
  %869 = vmatprep.mubr.f32.mxu0 0.0
  %870 = vmatmul.mubr.f32.gmra.mrb[0].mxu0 %v776
  %v871 = vpop.f32.mrb[0].mxu0
  %v872 = vadd.f32 %v744, %v871
  %v873 = vpop.f32.mrb[0].mxu0
  %874 = vmatprep.mubr.f32.mxu0 0.0
  %875 = vmatmul.mubr.f32.gmra.mrb[0].mxu0 %v779
  %v876 = vpop.f32.mrb[0].mxu0
  %v877 = vadd.f32 %v749, %v876
  %v878 = vpop.f32.mrb[0].mxu0
  %879 = vmatprep.mubr.f32.mxu0 0.0
  %880 = vmatmul.mubr.f32.gmra.mrb[0].mxu0 %v782
  %v881 = vpop.f32.mrb[0].mxu0
  %v882 = vadd.f32 %v754, %v881
  %v883 = vpop.f32.mrb[0].mxu0
  %884 = vmatprep.mubr.f32.mxu0 0.0
  %885 = vmatmul.mubr.f32.gmra.mrb[0].mxu0 %v785
  %v886 = vpop.f32.mrb[0].mxu0
  %v887 = vadd.f32 %v759, %v886
  %v888 = vpop.f32.mrb[0].mxu0
  %889 = vmatprep.mubr.f32.mxu0 0.0
  %890 = vmatmul.mubr.f32.gmra.mrb[0].mxu0 %v788
  %v891 = vpop.f32.mrb[0].mxu0
  %v892 = vadd.f32 %v764, %v891
  %v893 = vpop.f32.mrb[0].mxu0
  %894 = vdwg.mxu0
  %s895 = scalar_lea.vmem %s3, 4
  %v896 = vld [vmem:[%s895] sm:$0xf]
  %v897 = vlaneseq
  %v898 = vshrl.u32 %v897, 7
  %v899 = vsub.s32 0, %v898
  %v900 = vrot.slane %v896, %v899
  %v901 = vmul.f32 %v900, %v867
  %v902 = vmul.f32 %v900, %v872
  %v903 = vlaneseq
  %v904 = vshrl.u32 %v903, 7
  %v905 = vsub.s32 1, %v904
  %v906 = vrot.slane %v896, %v905
  %v907 = vmul.f32 %v906, %v857
  %v908 = vmul.f32 %v906, %v862
  %v909 = vadd.f32 %v901, %v907
  %v910 = vadd.f32 %v902, %v908
  %v911 = vlaneseq
  %v912 = vshrl.u32 %v911, 7
  %v913 = vsub.s32 2, %v912
  %v914 = vrot.slane %v896, %v913
  %v915 = vmul.f32 %v914, %v877
  %v916 = vmul.f32 %v914, %v882
  %v917 = vadd.f32 %v909, %v915
  %v918 = vadd.f32 %v910, %v916
  %v919 = vlaneseq
  %v920 = vshrl.u32 %v919, 7
  %v921 = vsub.s32 3, %v920
  %v922 = vrot.slane %v896, %v921
  %v923 = vadd.f32 %v917, %v922
  %v924 = vadd.f32 %v918, %v922
  %v925 = vsub.f32 0.0, %v923
  %v926 = vsub.f32 0.0, %v924
  %v927 = vmul.f32 %v925, 1.442695
  %v928 = vpow.pop %v927
  %v929 = vmul.f32 %v926, 1.442695
  %v930 = vpow.pop %v929
  %v931 = vadd.f32 %v928, 1.0
  %v932 = vadd.f32 %v930, 1.0
  %v933 = vrcp.pop %v931
  %v934 = vmul.f32 1.0, %v933
  %v935 = vrcp.pop %v932
  %v936 = vmul.f32 1.0, %v935
  %v937 = vmul.f32 %v923, %v934
  %v938 = vmul.f32 %v924, %v936
  %s939 = scalar_lea.vmem %s4, 16
  %v940 = vld [vmem:[%s939] sm:$0xff]
  %v941 = vld [vmem:[%s939 + $0x8] sm:$0xff]
  %943 = vset.pattern.permute.xlu0 0
  %944 = vperm.xlu0 %943, %v693
  %v945 = vpop.permute.xlu0 %944
  %948 = vset.pattern.permute.xlu0 0
  %949 = vperm.xlu0 %948, %v694
  %v950 = vpop.permute.xlu0 %949
  %v953 = vsel %vm342, %v940, 0
  %v956 = vsel %vm342, %v941, 0
  %958 = vmatprep.subr.mxu0 0.0
  %959 = vmatpush1.msra.mxu0 %v937
  %960 = vmatprep.subr.mxu0 0.0
  %961 = vmatpush1.msra.mxu0 %v938
  %962 = vmatprep.subr.mxu0 0.0
  %963 = vmatpush1.msra.mxu0 0.0
  %964 = vmatprep.subr.mxu0 0.0
  %965 = vmatpush1.msra.mxu0 0.0
  %966 = vmatprep.subr.mxu0 0.0
  %967 = vmatpush1.msra.mxu0 0.0
  %968 = vmatprep.subr.mxu0 0.0
  %969 = vmatpush1.msra.mxu0 0.0
  %970 = vmatprep.subr.mxu0 0.0
  %971 = vmatpush1.msra.mxu0 0.0
  %972 = vmatprep.subr.mxu0 0.0
  %973 = vmatpush1.msra.mxu0 0.0
  %974 = vmatprep.subr.mxu0 0.0
  %975 = vmatpush1.msra.mxu0 0.0
  %976 = vmatprep.subr.mxu0 0.0
  %977 = vmatpush1.msra.mxu0 0.0
  %978 = vmatprep.subr.mxu0 0.0
  %979 = vmatpush1.msra.mxu0 0.0
  %980 = vmatprep.subr.mxu0 0.0
  %981 = vmatpush1.msra.mxu0 0.0
  %982 = vmatprep.subr.mxu0 0.0
  %983 = vmatpush1.msra.mxu0 0.0
  %984 = vmatprep.subr.mxu0 0.0
  %985 = vmatpush1.msra.mxu0 0.0
  %986 = vmatprep.subr.mxu0 0.0
  %987 = vmatpush1.msra.mxu0 0.0
  %988 = vmatprep.subr.mxu0 0.0
  %989 = vmatpush1.msra.mxu0 0.0
  %990 = vmatprep.subr.mxu0 0.0
  %991 = vmatpush1.msra.mxu0 0.0
  %992 = vmatprep.subr.mxu0 0.0
  %993 = vmatpush1.msra.mxu0 0.0
  %994 = vmatprep.subr.mxu0 0.0
  %995 = vmatpush1.msra.mxu0 0.0
  %996 = vmatprep.subr.mxu0 0.0
  %997 = vmatpush1.msra.mxu0 0.0
  %998 = vmatprep.subr.mxu0 0.0
  %999 = vmatpush1.msra.mxu0 0.0
  %1000 = vmatprep.subr.mxu0 0.0
  %1001 = vmatpush1.msra.mxu0 0.0
  %1002 = vmatprep.subr.mxu0 0.0
  %1003 = vmatpush1.msra.mxu0 0.0
  %1004 = vmatprep.subr.mxu0 0.0
  %1005 = vmatpush1.msra.mxu0 0.0
  %1006 = vmatprep.subr.mxu0 0.0
  %1007 = vmatpush1.msra.mxu0 0.0
  %1008 = vmatprep.subr.mxu0 0.0
  %1009 = vmatpush1.msra.mxu0 0.0
  %1010 = vmatprep.subr.mxu0 0.0
  %1011 = vmatpush1.msra.mxu0 0.0
  %1012 = vmatprep.subr.mxu0 0.0
  %1013 = vmatpush1.msra.mxu0 0.0
  %1014 = vmatprep.subr.mxu0 0.0
  %1015 = vmatpush1.msra.mxu0 0.0
  %1016 = vmatprep.subr.mxu0 0.0
  %1017 = vmatpush1.msra.mxu0 0.0
  %1018 = vmatprep.subr.mxu0 0.0
  %1019 = vmatpush1.msra.mxu0 0.0
  %1020 = vmatprep.subr.mxu0 0.0
  %1021 = vmatpush1.msra.mxu0 0.0
  %1022 = vmatprep.mubr.f32.mxu0 0.0
  %1023 = vmatmul.mubr.f32.gmra.mrb[0].mxu0 %v953
  %v1024 = vpop.f32.mrb[0].mxu0
  %v1025 = vadd.f32 %v945, %v1024
  %v1026 = vpop.f32.mrb[0].mxu0
  %1027 = vmatprep.mubr.f32.mxu0 0.0
  %1028 = vmatmul.mubr.f32.gmra.mrb[0].mxu0 %v956
  %v1029 = vpop.f32.mrb[0].mxu0
  %v1030 = vadd.f32 %v950, %v1029
  %v1031 = vpop.f32.mrb[0].mxu0
  %1032 = vdwg.mxu0
  %s1033 = scalar_lea.vmem %s5, 32
  %v1034 = vld [vmem:[%s1033] sm:$0xff]
  %v1035 = vld [vmem:[%s1033 + $0x8] sm:$0xff]
  %v1036 = vld [vmem:[%s1033 + $0x10] sm:$0xff]
  %v1037 = vld [vmem:[%s1033 + $0x18] sm:$0xff]
  %1039 = vset.pattern.permute.xlu0 0
  %1040 = vperm.xlu0 %1039, %v695
  %v1041 = vpop.permute.xlu0 %1040
  %1044 = vset.pattern.permute.xlu0 0
  %1045 = vperm.xlu0 %1044, %v696
  %v1046 = vpop.permute.xlu0 %1045
  %1049 = vset.pattern.permute.xlu0 0
  %1050 = vperm.xlu0 %1049, %v697
  %v1051 = vpop.permute.xlu0 %1050
  %1054 = vset.pattern.permute.xlu0 0
  %1055 = vperm.xlu0 %1054, %v698
  %v1056 = vpop.permute.xlu0 %1055
  %v1059 = vsel %vm342, %v1034, 0
  %v1062 = vsel %vm342, %v1035, 0
  %v1065 = vsel %vm342, %v1036, 0
  %v1068 = vsel %vm342, %v1037, 0
  %1070 = vmatprep.subr.mxu0 0.0
  %1071 = vmatpush1.msra.mxu0 %v1025
  %1072 = vmatprep.subr.mxu0 0.0
  %1073 = vmatpush1.msra.mxu0 %v1030
  %1074 = vmatprep.subr.mxu0 0.0
  %1075 = vmatpush1.msra.mxu0 0.0
  %1076 = vmatprep.subr.mxu0 0.0
  %1077 = vmatpush1.msra.mxu0 0.0
  %1078 = vmatprep.subr.mxu0 0.0
  %1079 = vmatpush1.msra.mxu0 0.0
  %1080 = vmatprep.subr.mxu0 0.0
  %1081 = vmatpush1.msra.mxu0 0.0
  %1082 = vmatprep.subr.mxu0 0.0
  %1083 = vmatpush1.msra.mxu0 0.0
  %1084 = vmatprep.subr.mxu0 0.0
  %1085 = vmatpush1.msra.mxu0 0.0
  %1086 = vmatprep.subr.mxu0 0.0
  %1087 = vmatpush1.msra.mxu0 0.0
  %1088 = vmatprep.subr.mxu0 0.0
  %1089 = vmatpush1.msra.mxu0 0.0
  %1090 = vmatprep.subr.mxu0 0.0
  %1091 = vmatpush1.msra.mxu0 0.0
  %1092 = vmatprep.subr.mxu0 0.0
  %1093 = vmatpush1.msra.mxu0 0.0
  %1094 = vmatprep.subr.mxu0 0.0
  %1095 = vmatpush1.msra.mxu0 0.0
  %1096 = vmatprep.subr.mxu0 0.0
  %1097 = vmatpush1.msra.mxu0 0.0
  %1098 = vmatprep.subr.mxu0 0.0
  %1099 = vmatpush1.msra.mxu0 0.0
  %1100 = vmatprep.subr.mxu0 0.0
  %1101 = vmatpush1.msra.mxu0 0.0
  %1102 = vmatprep.subr.mxu0 0.0
  %1103 = vmatpush1.msra.mxu0 0.0
  %1104 = vmatprep.subr.mxu0 0.0
  %1105 = vmatpush1.msra.mxu0 0.0
  %1106 = vmatprep.subr.mxu0 0.0
  %1107 = vmatpush1.msra.mxu0 0.0
  %1108 = vmatprep.subr.mxu0 0.0
  %1109 = vmatpush1.msra.mxu0 0.0
  %1110 = vmatprep.subr.mxu0 0.0
  %1111 = vmatpush1.msra.mxu0 0.0
  %1112 = vmatprep.subr.mxu0 0.0
  %1113 = vmatpush1.msra.mxu0 0.0
  %1114 = vmatprep.subr.mxu0 0.0
  %1115 = vmatpush1.msra.mxu0 0.0
  %1116 = vmatprep.subr.mxu0 0.0
  %1117 = vmatpush1.msra.mxu0 0.0
  %1118 = vmatprep.subr.mxu0 0.0
  %1119 = vmatpush1.msra.mxu0 0.0
  %1120 = vmatprep.subr.mxu0 0.0
  %1121 = vmatpush1.msra.mxu0 0.0
  %1122 = vmatprep.subr.mxu0 0.0
  %1123 = vmatpush1.msra.mxu0 0.0
  %1124 = vmatprep.subr.mxu0 0.0
  %1125 = vmatpush1.msra.mxu0 0.0
  %1126 = vmatprep.subr.mxu0 0.0
  %1127 = vmatpush1.msra.mxu0 0.0
  %1128 = vmatprep.subr.mxu0 0.0
  %1129 = vmatpush1.msra.mxu0 0.0
  %1130 = vmatprep.subr.mxu0 0.0
  %1131 = vmatpush1.msra.mxu0 0.0
  %1132 = vmatprep.subr.mxu0 0.0
  %1133 = vmatpush1.msra.mxu0 0.0
  %1134 = vmatprep.mubr.f32.mxu0 0.0
  %1135 = vmatmul.mubr.f32.gmra.mrb[0].mxu0 %v1059
  %v1136 = vpop.f32.mrb[0].mxu0
  %v1137 = vadd.f32 %v1041, %v1136
  %v1138 = vpop.f32.mrb[0].mxu0
  %1139 = vmatprep.mubr.f32.mxu0 0.0
  %1140 = vmatmul.mubr.f32.gmra.mrb[0].mxu0 %v1062
  %v1141 = vpop.f32.mrb[0].mxu0
  %v1142 = vadd.f32 %v1046, %v1141
  %v1143 = vpop.f32.mrb[0].mxu0
  %1144 = vmatprep.mubr.f32.mxu0 0.0
  %1145 = vmatmul.mubr.f32.gmra.mrb[0].mxu0 %v1065
  %v1146 = vpop.f32.mrb[0].mxu0
  %v1147 = vadd.f32 %v1051, %v1146
  %v1148 = vpop.f32.mrb[0].mxu0
  %1149 = vmatprep.mubr.f32.mxu0 0.0
  %1150 = vmatmul.mubr.f32.gmra.mrb[0].mxu0 %v1068
  %v1151 = vpop.f32.mrb[0].mxu0
  %v1152 = vadd.f32 %v1056, %v1151
  %v1153 = vpop.f32.mrb[0].mxu0
  %1154 = vdwg.mxu0
  %v1155 = vmax.f32 %v1137, 0.0
  %v1156 = vmax.f32 %v1142, 0.0
  %v1157 = vand.u32 2147483647, %v1137
  %v1158 = vand.u32 2147483647, %v1142
  %v1159 = vsub.f32 0.0, %v1157
  %v1160 = vsub.f32 0.0, %v1158
  %v1161 = vmul.f32 %v1159, 1.442695
  %v1162 = vpow.pop %v1161
  %v1163 = vmul.f32 %v1160, 1.442695
  %v1164 = vpow.pop %v1163
  %v1165 = vadd.f32 %v1162, 1.0
  %v1166 = vadd.f32 %v1164, 1.0
  %v1167 = vlog2.pop %v1165
  %v1168 = vmul.f32 %v1167, 0.6931472
  %v1169 = vlog2.pop %v1166
  %v1170 = vmul.f32 %v1169, 0.6931472
  %v1171 = vadd.f32 %v1155, %v1168
  %v1172 = vadd.f32 %v1156, %v1170
  %v1173 = vmul.f32 %v1025, %v1171
  %v1174 = vmul.f32 %v1030, %v1172
  %v1175 = vmul.f32 %v1147, %v1152
  %v1176 = vrot.slane %v1175, 4
  %v1177 = vadd.f32 %v1175, %v1176
  %v1178 = vrot.slane %v1177, 2
  %v1179 = vadd.f32 %v1177, %v1178
  %v1180 = vrot.slane %v1179, 1
  %v1181 = vadd.f32 %v1179, %v1180
  %v1182 = vmul.f32 %v1173, %v1181
  %v1183 = vmul.f32 %v1174, %v1181
  %v1184 = vsub.f32 0.0, %v1182
  %v1185 = vsub.f32 0.0, %v1183
  %v1186 = vmul.f32 %v1184, 1.442695
  %v1187 = vpow.pop %v1186
  %v1188 = vmul.f32 %v1185, 1.442695
  %v1189 = vpow.pop %v1188
  %v1190 = vadd.f32 %v1187, 1.0
  %v1191 = vadd.f32 %v1189, 1.0
  %v1192 = vrcp.pop %v1190
  %v1193 = vmul.f32 1.0, %v1192
  %v1194 = vrcp.pop %v1191
  %v1195 = vmul.f32 1.0, %v1194
  %v1196 = vmul.f32 %v1182, %v1193
  %v1197 = vmul.f32 %v1183, %v1195
  %v1198 = vsub.f32 0.0, %v887
  %v1199 = vsub.f32 0.0, %v892
  %v1200 = vmul.f32 %v1198, 1.442695
  %v1201 = vpow.pop %v1200
  %v1202 = vmul.f32 %v1199, 1.442695
  %v1203 = vpow.pop %v1202
  %v1204 = vadd.f32 %v1201, 1.0
  %v1205 = vadd.f32 %v1203, 1.0
  %v1206 = vrcp.pop %v1204
  %v1207 = vmul.f32 1.0, %v1206
  %v1208 = vrcp.pop %v1205
  %v1209 = vmul.f32 1.0, %v1208
  %v1210 = vmul.f32 %v887, %v1207
  %v1211 = vmul.f32 %v892, %v1209
  %v1212 = vmul.f32 %v1196, %v1210
  %v1213 = vmul.f32 %v1197, %v1211
  %s1214 = scalar_lea.vmem %s6, 8
  %v1215 = vld [vmem:[%s1214] sm:$0xff]
  %1217 = vset.pattern.permute.xlu0 0
  %1218 = vperm.xlu0 %1217, %v699
  %v1219 = vpop.permute.xlu0 %1218
  %v1222 = vsel %vm342, %v1215, 0
  %1224 = vmatprep.subr.mxu0 0.0
  %1225 = vmatpush1.msra.mxu0 %v1212
  %1226 = vmatprep.subr.mxu0 0.0
  %1227 = vmatpush1.msra.mxu0 %v1213
  %1228 = vmatprep.subr.mxu0 0.0
  %1229 = vmatpush1.msra.mxu0 0.0
  %1230 = vmatprep.subr.mxu0 0.0
  %1231 = vmatpush1.msra.mxu0 0.0
  %1232 = vmatprep.subr.mxu0 0.0
  %1233 = vmatpush1.msra.mxu0 0.0
  %1234 = vmatprep.subr.mxu0 0.0
  %1235 = vmatpush1.msra.mxu0 0.0
  %1236 = vmatprep.subr.mxu0 0.0
  %1237 = vmatpush1.msra.mxu0 0.0
  %1238 = vmatprep.subr.mxu0 0.0
  %1239 = vmatpush1.msra.mxu0 0.0
  %1240 = vmatprep.subr.mxu0 0.0
  %1241 = vmatpush1.msra.mxu0 0.0
  %1242 = vmatprep.subr.mxu0 0.0
  %1243 = vmatpush1.msra.mxu0 0.0
  %1244 = vmatprep.subr.mxu0 0.0
  %1245 = vmatpush1.msra.mxu0 0.0
  %1246 = vmatprep.subr.mxu0 0.0
  %1247 = vmatpush1.msra.mxu0 0.0
  %1248 = vmatprep.subr.mxu0 0.0
  %1249 = vmatpush1.msra.mxu0 0.0
  %1250 = vmatprep.subr.mxu0 0.0
  %1251 = vmatpush1.msra.mxu0 0.0
  %1252 = vmatprep.subr.mxu0 0.0
  %1253 = vmatpush1.msra.mxu0 0.0
  %1254 = vmatprep.subr.mxu0 0.0
  %1255 = vmatpush1.msra.mxu0 0.0
  %1256 = vmatprep.subr.mxu0 0.0
  %1257 = vmatpush1.msra.mxu0 0.0
  %1258 = vmatprep.subr.mxu0 0.0
  %1259 = vmatpush1.msra.mxu0 0.0
  %1260 = vmatprep.subr.mxu0 0.0
  %1261 = vmatpush1.msra.mxu0 0.0
  %1262 = vmatprep.subr.mxu0 0.0
  %1263 = vmatpush1.msra.mxu0 0.0
  %1264 = vmatprep.subr.mxu0 0.0
  %1265 = vmatpush1.msra.mxu0 0.0
  %1266 = vmatprep.subr.mxu0 0.0
  %1267 = vmatpush1.msra.mxu0 0.0
  %1268 = vmatprep.subr.mxu0 0.0
  %1269 = vmatpush1.msra.mxu0 0.0
  %1270 = vmatprep.subr.mxu0 0.0
  %1271 = vmatpush1.msra.mxu0 0.0
  %1272 = vmatprep.subr.mxu0 0.0
  %1273 = vmatpush1.msra.mxu0 0.0
  %1274 = vmatprep.subr.mxu0 0.0
  %1275 = vmatpush1.msra.mxu0 0.0
  %1276 = vmatprep.subr.mxu0 0.0
  %1277 = vmatpush1.msra.mxu0 0.0
  %1278 = vmatprep.subr.mxu0 0.0
  %1279 = vmatpush1.msra.mxu0 0.0
  %1280 = vmatprep.subr.mxu0 0.0
  %1281 = vmatpush1.msra.mxu0 0.0
  %1282 = vmatprep.subr.mxu0 0.0
  %1283 = vmatpush1.msra.mxu0 0.0
  %1284 = vmatprep.subr.mxu0 0.0
  %1285 = vmatpush1.msra.mxu0 0.0
  %1286 = vmatprep.subr.mxu0 0.0
  %1287 = vmatpush1.msra.mxu0 0.0
  %1288 = vmatprep.mubr.f32.mxu0 0.0
  %1289 = vmatmul.mubr.f32.gmra.mrb[0].mxu0 %v1222
  %v1290 = vpop.f32.mrb[0].mxu0
  %v1291 = vadd.f32 %v1219, %v1290
  %v1292 = vpop.f32.mrb[0].mxu0
  %1293 = vdwg.mxu0
  %s1294 = scalar_lea.vmem %s7, 256
  %v1295 = vld [vmem:[%s1294] sm:$0xff]
  %v1296 = vld [vmem:[%s1294 + $0x8] sm:$0xff]
  %v1297 = vld [vmem:[%s1294 + $0x10] sm:$0xff]
  %v1298 = vld [vmem:[%s1294 + $0x18] sm:$0xff]
  %v1299 = vld [vmem:[%s1294 + $0x20] sm:$0xff]
  %v1300 = vld [vmem:[%s1294 + $0x28] sm:$0xff]
  %v1301 = vld [vmem:[%s1294 + $0x30] sm:$0xff]
  %v1302 = vld [vmem:[%s1294 + $0x38] sm:$0xff]
  %v1303 = vld [vmem:[%s1294 + $0x40] sm:$0xff]
  %v1304 = vld [vmem:[%s1294 + $0x48] sm:$0xff]
  %v1305 = vld [vmem:[%s1294 + $0x50] sm:$0xff]
  %v1306 = vld [vmem:[%s1294 + $0x58] sm:$0xff]
  %v1307 = vld [vmem:[%s1294 + $0x60] sm:$0xff]
  %v1308 = vld [vmem:[%s1294 + $0x68] sm:$0xff]
  %v1309 = vld [vmem:[%s1294 + $0x70] sm:$0xff]
  %v1310 = vld [vmem:[%s1294 + $0x78] sm:$0xff]
  %v1311 = vmul.f32 %v1291, %v1291
  %v1312 = vrot.slane %v1311, 4
  %v1313 = vadd.f32 %v1311, %v1312
  %v1314 = vrot.slane %v1313, 2
  %v1315 = vadd.f32 %v1313, %v1314
  %v1316 = vrot.slane %v1315, 1
  %v1317 = vadd.f32 %v1315, %v1316
  %v1318 = vmul.f32 %v1317, %v48
  %v1319 = vadd.f32 %v1318, 1e-05
  %v1320 = vrsqrt.pop %v1319
  %v1321 = vmul.f32 %v1291, %v1320
  %1323 = vset.pattern.permute.xlu0 0
  %1324 = vperm.xlu0 %1323, %v1295
  %v1325 = vpop.permute.xlu0 %1324
  %v1327 = vmul.f32 %v1321, %v1325
  %s1328 = scalar_lea.vmem %s2, 128
  %v1329 = vld [vmem:[%s1328] sm:$0xff]
  %v1330 = vld [vmem:[%s1328 + $0x8] sm:$0xff]
  %v1331 = vld [vmem:[%s1328 + $0x10] sm:$0xff]
  %v1332 = vld [vmem:[%s1328 + $0x18] sm:$0xff]
  %v1333 = vld [vmem:[%s1328 + $0x20] sm:$0xff]
  %v1334 = vld [vmem:[%s1328 + $0x28] sm:$0xff]
  %v1335 = vld [vmem:[%s1328 + $0x30] sm:$0xff]
  %v1336 = vld [vmem:[%s1328 + $0x38] sm:$0xff]
  %1338 = vset.pattern.permute.xlu0 0
  %1339 = vperm.xlu0 %1338, %v1296
  %v1340 = vpop.permute.xlu0 %1339
  %1343 = vset.pattern.permute.xlu0 0
  %1344 = vperm.xlu0 %1343, %v1297
  %v1345 = vpop.permute.xlu0 %1344
  %1348 = vset.pattern.permute.xlu0 0
  %1349 = vperm.xlu0 %1348, %v1298
  %v1350 = vpop.permute.xlu0 %1349
  %1353 = vset.pattern.permute.xlu0 0
  %1354 = vperm.xlu0 %1353, %v1299
  %v1355 = vpop.permute.xlu0 %1354
  %1358 = vset.pattern.permute.xlu0 0
  %1359 = vperm.xlu0 %1358, %v1300
  %v1360 = vpop.permute.xlu0 %1359
  %1363 = vset.pattern.permute.xlu0 0
  %1364 = vperm.xlu0 %1363, %v1301
  %v1365 = vpop.permute.xlu0 %1364
  %1368 = vset.pattern.permute.xlu0 0
  %1369 = vperm.xlu0 %1368, %v1302
  %v1370 = vpop.permute.xlu0 %1369
  %1373 = vset.pattern.permute.xlu0 0
  %1374 = vperm.xlu0 %1373, %v1303
  %v1375 = vpop.permute.xlu0 %1374
  %v1378 = vsel %vm157, %v1329, 0
  %v1381 = vsel %vm157, %v1330, 0
  %v1384 = vsel %vm157, %v1331, 0
  %v1387 = vsel %vm157, %v1332, 0
  %v1390 = vsel %vm157, %v1333, 0
  %v1393 = vsel %vm157, %v1334, 0
  %v1396 = vsel %vm157, %v1335, 0
  %v1399 = vsel %vm157, %v1336, 0
  %1401 = vmatprep.subr.mxu0 0.0
  %1402 = vmatpush1.msra.mxu0 %v1327
  %1403 = vmatprep.subr.mxu0 0.0
  %1404 = vmatpush1.msra.mxu0 0.0
  %1405 = vmatprep.subr.mxu0 0.0
  %1406 = vmatpush1.msra.mxu0 0.0
  %1407 = vmatprep.subr.mxu0 0.0
  %1408 = vmatpush1.msra.mxu0 0.0
  %1409 = vmatprep.subr.mxu0 0.0
  %1410 = vmatpush1.msra.mxu0 0.0
  %1411 = vmatprep.subr.mxu0 0.0
  %1412 = vmatpush1.msra.mxu0 0.0
  %1413 = vmatprep.subr.mxu0 0.0
  %1414 = vmatpush1.msra.mxu0 0.0
  %1415 = vmatprep.subr.mxu0 0.0
  %1416 = vmatpush1.msra.mxu0 0.0
  %1417 = vmatprep.subr.mxu0 0.0
  %1418 = vmatpush1.msra.mxu0 0.0
  %1419 = vmatprep.subr.mxu0 0.0
  %1420 = vmatpush1.msra.mxu0 0.0
  %1421 = vmatprep.subr.mxu0 0.0
  %1422 = vmatpush1.msra.mxu0 0.0
  %1423 = vmatprep.subr.mxu0 0.0
  %1424 = vmatpush1.msra.mxu0 0.0
  %1425 = vmatprep.subr.mxu0 0.0
  %1426 = vmatpush1.msra.mxu0 0.0
  %1427 = vmatprep.subr.mxu0 0.0
  %1428 = vmatpush1.msra.mxu0 0.0
  %1429 = vmatprep.subr.mxu0 0.0
  %1430 = vmatpush1.msra.mxu0 0.0
  %1431 = vmatprep.subr.mxu0 0.0
  %1432 = vmatpush1.msra.mxu0 0.0
  %1433 = vmatprep.subr.mxu0 0.0
  %1434 = vmatpush1.msra.mxu0 0.0
  %1435 = vmatprep.subr.mxu0 0.0
  %1436 = vmatpush1.msra.mxu0 0.0
  %1437 = vmatprep.subr.mxu0 0.0
  %1438 = vmatpush1.msra.mxu0 0.0
  %1439 = vmatprep.subr.mxu0 0.0
  %1440 = vmatpush1.msra.mxu0 0.0
  %1441 = vmatprep.subr.mxu0 0.0
  %1442 = vmatpush1.msra.mxu0 0.0
  %1443 = vmatprep.subr.mxu0 0.0
  %1444 = vmatpush1.msra.mxu0 0.0
  %1445 = vmatprep.subr.mxu0 0.0
  %1446 = vmatpush1.msra.mxu0 0.0
  %1447 = vmatprep.subr.mxu0 0.0
  %1448 = vmatpush1.msra.mxu0 0.0
  %1449 = vmatprep.subr.mxu0 0.0
  %1450 = vmatpush1.msra.mxu0 0.0
  %1451 = vmatprep.subr.mxu0 0.0
  %1452 = vmatpush1.msra.mxu0 0.0
  %1453 = vmatprep.subr.mxu0 0.0
  %1454 = vmatpush1.msra.mxu0 0.0
  %1455 = vmatprep.subr.mxu0 0.0
  %1456 = vmatpush1.msra.mxu0 0.0
  %1457 = vmatprep.subr.mxu0 0.0
  %1458 = vmatpush1.msra.mxu0 0.0
  %1459 = vmatprep.subr.mxu0 0.0
  %1460 = vmatpush1.msra.mxu0 0.0
  %1461 = vmatprep.subr.mxu0 0.0
  %1462 = vmatpush1.msra.mxu0 0.0
  %1463 = vmatprep.subr.mxu0 0.0
  %1464 = vmatpush1.msra.mxu0 0.0
  %1465 = vmatprep.mubr.f32.mxu0 0.0
  %1466 = vmatmul.mubr.f32.gmra.mrb[0].mxu0 %v1378
  %v1467 = vpop.f32.mrb[0].mxu0
  %v1468 = vadd.f32 %v1340, %v1467
  %v1469 = vpop.f32.mrb[0].mxu0
  %1470 = vmatprep.mubr.f32.mxu0 0.0
  %1471 = vmatmul.mubr.f32.gmra.mrb[0].mxu0 %v1381
  %v1472 = vpop.f32.mrb[0].mxu0
  %v1473 = vadd.f32 %v1345, %v1472
  %v1474 = vpop.f32.mrb[0].mxu0
  %1475 = vmatprep.mubr.f32.mxu0 0.0
  %1476 = vmatmul.mubr.f32.gmra.mrb[0].mxu0 %v1384
  %v1477 = vpop.f32.mrb[0].mxu0
  %v1478 = vadd.f32 %v1350, %v1477
  %v1479 = vpop.f32.mrb[0].mxu0
  %1480 = vmatprep.mubr.f32.mxu0 0.0
  %1481 = vmatmul.mubr.f32.gmra.mrb[0].mxu0 %v1387
  %v1482 = vpop.f32.mrb[0].mxu0
  %v1483 = vadd.f32 %v1355, %v1482
  %v1484 = vpop.f32.mrb[0].mxu0
  %1485 = vmatprep.mubr.f32.mxu0 0.0
  %1486 = vmatmul.mubr.f32.gmra.mrb[0].mxu0 %v1390
  %v1487 = vpop.f32.mrb[0].mxu0
  %v1488 = vadd.f32 %v1360, %v1487
  %v1489 = vpop.f32.mrb[0].mxu0
  %1490 = vmatprep.mubr.f32.mxu0 0.0
  %1491 = vmatmul.mubr.f32.gmra.mrb[0].mxu0 %v1393
  %v1492 = vpop.f32.mrb[0].mxu0
  %v1493 = vadd.f32 %v1365, %v1492
  %v1494 = vpop.f32.mrb[0].mxu0
  %1495 = vmatprep.mubr.f32.mxu0 0.0
  %1496 = vmatmul.mubr.f32.gmra.mrb[0].mxu0 %v1396
  %v1497 = vpop.f32.mrb[0].mxu0
  %v1498 = vadd.f32 %v1370, %v1497
  %v1499 = vpop.f32.mrb[0].mxu0
  %1500 = vmatprep.mubr.f32.mxu0 0.0
  %1501 = vmatmul.mubr.f32.gmra.mrb[0].mxu0 %v1399
  %v1502 = vpop.f32.mrb[0].mxu0
  %v1503 = vadd.f32 %v1375, %v1502
  %v1504 = vpop.f32.mrb[0].mxu0
  %1505 = vdwg.mxu0
  %s1506 = scalar_lea.vmem %s3, 8
  %v1507 = vld [vmem:[%s1506] sm:$0xf]
  %v1508 = vlaneseq
  %v1509 = vshrl.u32 %v1508, 7
  %v1510 = vsub.s32 0, %v1509
  %v1511 = vrot.slane %v1507, %v1510
  %v1512 = vmul.f32 %v1511, %v1478
  %v1513 = vmul.f32 %v1511, %v1483
  %v1514 = vlaneseq
  %v1515 = vshrl.u32 %v1514, 7
  %v1516 = vsub.s32 1, %v1515
  %v1517 = vrot.slane %v1507, %v1516
  %v1518 = vmul.f32 %v1517, %v1468
  %v1519 = vmul.f32 %v1517, %v1473
  %v1520 = vadd.f32 %v1512, %v1518
  %v1521 = vadd.f32 %v1513, %v1519
  %v1522 = vlaneseq
  %v1523 = vshrl.u32 %v1522, 7
  %v1524 = vsub.s32 2, %v1523
  %v1525 = vrot.slane %v1507, %v1524
  %v1526 = vmul.f32 %v1525, %v1488
  %v1527 = vmul.f32 %v1525, %v1493
  %v1528 = vadd.f32 %v1520, %v1526
  %v1529 = vadd.f32 %v1521, %v1527
  %v1530 = vlaneseq
  %v1531 = vshrl.u32 %v1530, 7
  %v1532 = vsub.s32 3, %v1531
  %v1533 = vrot.slane %v1507, %v1532
  %v1534 = vadd.f32 %v1528, %v1533
  %v1535 = vadd.f32 %v1529, %v1533
  %v1536 = vsub.f32 0.0, %v1534
  %v1537 = vsub.f32 0.0, %v1535
  %v1538 = vmul.f32 %v1536, 1.442695
  %v1539 = vpow.pop %v1538
  %v1540 = vmul.f32 %v1537, 1.442695
  %v1541 = vpow.pop %v1540
  %v1542 = vadd.f32 %v1539, 1.0
  %v1543 = vadd.f32 %v1541, 1.0
  %v1544 = vrcp.pop %v1542
  %v1545 = vmul.f32 1.0, %v1544
  %v1546 = vrcp.pop %v1543
  %v1547 = vmul.f32 1.0, %v1546
  %v1548 = vmul.f32 %v1534, %v1545
  %v1549 = vmul.f32 %v1535, %v1547
  %s1550 = scalar_lea.vmem %s4, 32
  %v1551 = vld [vmem:[%s1550] sm:$0xff]
  %v1552 = vld [vmem:[%s1550 + $0x8] sm:$0xff]
  %1554 = vset.pattern.permute.xlu0 0
  %1555 = vperm.xlu0 %1554, %v1304
  %v1556 = vpop.permute.xlu0 %1555
  %1559 = vset.pattern.permute.xlu0 0
  %1560 = vperm.xlu0 %1559, %v1305
  %v1561 = vpop.permute.xlu0 %1560
  %v1564 = vsel %vm342, %v1551, 0
  %v1567 = vsel %vm342, %v1552, 0
  %1569 = vmatprep.subr.mxu0 0.0
  %1570 = vmatpush1.msra.mxu0 %v1548
  %1571 = vmatprep.subr.mxu0 0.0
  %1572 = vmatpush1.msra.mxu0 %v1549
  %1573 = vmatprep.subr.mxu0 0.0
  %1574 = vmatpush1.msra.mxu0 0.0
  %1575 = vmatprep.subr.mxu0 0.0
  %1576 = vmatpush1.msra.mxu0 0.0
  %1577 = vmatprep.subr.mxu0 0.0
  %1578 = vmatpush1.msra.mxu0 0.0
  %1579 = vmatprep.subr.mxu0 0.0
  %1580 = vmatpush1.msra.mxu0 0.0
  %1581 = vmatprep.subr.mxu0 0.0
  %1582 = vmatpush1.msra.mxu0 0.0
  %1583 = vmatprep.subr.mxu0 0.0
  %1584 = vmatpush1.msra.mxu0 0.0
  %1585 = vmatprep.subr.mxu0 0.0
  %1586 = vmatpush1.msra.mxu0 0.0
  %1587 = vmatprep.subr.mxu0 0.0
  %1588 = vmatpush1.msra.mxu0 0.0
  %1589 = vmatprep.subr.mxu0 0.0
  %1590 = vmatpush1.msra.mxu0 0.0
  %1591 = vmatprep.subr.mxu0 0.0
  %1592 = vmatpush1.msra.mxu0 0.0
  %1593 = vmatprep.subr.mxu0 0.0
  %1594 = vmatpush1.msra.mxu0 0.0
  %1595 = vmatprep.subr.mxu0 0.0
  %1596 = vmatpush1.msra.mxu0 0.0
  %1597 = vmatprep.subr.mxu0 0.0
  %1598 = vmatpush1.msra.mxu0 0.0
  %1599 = vmatprep.subr.mxu0 0.0
  %1600 = vmatpush1.msra.mxu0 0.0
  %1601 = vmatprep.subr.mxu0 0.0
  %1602 = vmatpush1.msra.mxu0 0.0
  %1603 = vmatprep.subr.mxu0 0.0
  %1604 = vmatpush1.msra.mxu0 0.0
  %1605 = vmatprep.subr.mxu0 0.0
  %1606 = vmatpush1.msra.mxu0 0.0
  %1607 = vmatprep.subr.mxu0 0.0
  %1608 = vmatpush1.msra.mxu0 0.0
  %1609 = vmatprep.subr.mxu0 0.0
  %1610 = vmatpush1.msra.mxu0 0.0
  %1611 = vmatprep.subr.mxu0 0.0
  %1612 = vmatpush1.msra.mxu0 0.0
  %1613 = vmatprep.subr.mxu0 0.0
  %1614 = vmatpush1.msra.mxu0 0.0
  %1615 = vmatprep.subr.mxu0 0.0
  %1616 = vmatpush1.msra.mxu0 0.0
  %1617 = vmatprep.subr.mxu0 0.0
  %1618 = vmatpush1.msra.mxu0 0.0
  %1619 = vmatprep.subr.mxu0 0.0
  %1620 = vmatpush1.msra.mxu0 0.0
  %1621 = vmatprep.subr.mxu0 0.0
  %1622 = vmatpush1.msra.mxu0 0.0
  %1623 = vmatprep.subr.mxu0 0.0
  %1624 = vmatpush1.msra.mxu0 0.0
  %1625 = vmatprep.subr.mxu0 0.0
  %1626 = vmatpush1.msra.mxu0 0.0
  %1627 = vmatprep.subr.mxu0 0.0
  %1628 = vmatpush1.msra.mxu0 0.0
  %1629 = vmatprep.subr.mxu0 0.0
  %1630 = vmatpush1.msra.mxu0 0.0
  %1631 = vmatprep.subr.mxu0 0.0
  %1632 = vmatpush1.msra.mxu0 0.0
  %1633 = vmatprep.mubr.f32.mxu0 0.0
  %1634 = vmatmul.mubr.f32.gmra.mrb[0].mxu0 %v1564
  %v1635 = vpop.f32.mrb[0].mxu0
  %v1636 = vadd.f32 %v1556, %v1635
  %v1637 = vpop.f32.mrb[0].mxu0
  %1638 = vmatprep.mubr.f32.mxu0 0.0
  %1639 = vmatmul.mubr.f32.gmra.mrb[0].mxu0 %v1567
  %v1640 = vpop.f32.mrb[0].mxu0
  %v1641 = vadd.f32 %v1561, %v1640
  %v1642 = vpop.f32.mrb[0].mxu0
  %1643 = vdwg.mxu0
  %s1644 = scalar_lea.vmem %s5, 64
  %v1645 = vld [vmem:[%s1644] sm:$0xff]
  %v1646 = vld [vmem:[%s1644 + $0x8] sm:$0xff]
  %v1647 = vld [vmem:[%s1644 + $0x10] sm:$0xff]
  %v1648 = vld [vmem:[%s1644 + $0x18] sm:$0xff]
  %1650 = vset.pattern.permute.xlu0 0
  %1651 = vperm.xlu0 %1650, %v1306
  %v1652 = vpop.permute.xlu0 %1651
  %1655 = vset.pattern.permute.xlu0 0
  %1656 = vperm.xlu0 %1655, %v1307
  %v1657 = vpop.permute.xlu0 %1656
  %1660 = vset.pattern.permute.xlu0 0
  %1661 = vperm.xlu0 %1660, %v1308
  %v1662 = vpop.permute.xlu0 %1661
  %1665 = vset.pattern.permute.xlu0 0
  %1666 = vperm.xlu0 %1665, %v1309
  %v1667 = vpop.permute.xlu0 %1666
  %v1670 = vsel %vm342, %v1645, 0
  %v1673 = vsel %vm342, %v1646, 0
  %v1676 = vsel %vm342, %v1647, 0
  %v1679 = vsel %vm342, %v1648, 0
  %1681 = vmatprep.subr.mxu0 0.0
  %1682 = vmatpush1.msra.mxu0 %v1636
  %1683 = vmatprep.subr.mxu0 0.0
  %1684 = vmatpush1.msra.mxu0 %v1641
  %1685 = vmatprep.subr.mxu0 0.0
  %1686 = vmatpush1.msra.mxu0 0.0
  %1687 = vmatprep.subr.mxu0 0.0
  %1688 = vmatpush1.msra.mxu0 0.0
  %1689 = vmatprep.subr.mxu0 0.0
  %1690 = vmatpush1.msra.mxu0 0.0
  %1691 = vmatprep.subr.mxu0 0.0
  %1692 = vmatpush1.msra.mxu0 0.0
  %1693 = vmatprep.subr.mxu0 0.0
  %1694 = vmatpush1.msra.mxu0 0.0
  %1695 = vmatprep.subr.mxu0 0.0
  %1696 = vmatpush1.msra.mxu0 0.0
  %1697 = vmatprep.subr.mxu0 0.0
  %1698 = vmatpush1.msra.mxu0 0.0
  %1699 = vmatprep.subr.mxu0 0.0
  %1700 = vmatpush1.msra.mxu0 0.0
  %1701 = vmatprep.subr.mxu0 0.0
  %1702 = vmatpush1.msra.mxu0 0.0
  %1703 = vmatprep.subr.mxu0 0.0
  %1704 = vmatpush1.msra.mxu0 0.0
  %1705 = vmatprep.subr.mxu0 0.0
  %1706 = vmatpush1.msra.mxu0 0.0
  %1707 = vmatprep.subr.mxu0 0.0
  %1708 = vmatpush1.msra.mxu0 0.0
  %1709 = vmatprep.subr.mxu0 0.0
  %1710 = vmatpush1.msra.mxu0 0.0
  %1711 = vmatprep.subr.mxu0 0.0
  %1712 = vmatpush1.msra.mxu0 0.0
  %1713 = vmatprep.subr.mxu0 0.0
  %1714 = vmatpush1.msra.mxu0 0.0
  %1715 = vmatprep.subr.mxu0 0.0
  %1716 = vmatpush1.msra.mxu0 0.0
  %1717 = vmatprep.subr.mxu0 0.0
  %1718 = vmatpush1.msra.mxu0 0.0
  %1719 = vmatprep.subr.mxu0 0.0
  %1720 = vmatpush1.msra.mxu0 0.0
  %1721 = vmatprep.subr.mxu0 0.0
  %1722 = vmatpush1.msra.mxu0 0.0
  %1723 = vmatprep.subr.mxu0 0.0
  %1724 = vmatpush1.msra.mxu0 0.0
  %1725 = vmatprep.subr.mxu0 0.0
  %1726 = vmatpush1.msra.mxu0 0.0
  %1727 = vmatprep.subr.mxu0 0.0
  %1728 = vmatpush1.msra.mxu0 0.0
  %1729 = vmatprep.subr.mxu0 0.0
  %1730 = vmatpush1.msra.mxu0 0.0
  %1731 = vmatprep.subr.mxu0 0.0
  %1732 = vmatpush1.msra.mxu0 0.0
  %1733 = vmatprep.subr.mxu0 0.0
  %1734 = vmatpush1.msra.mxu0 0.0
  %1735 = vmatprep.subr.mxu0 0.0
  %1736 = vmatpush1.msra.mxu0 0.0
  %1737 = vmatprep.subr.mxu0 0.0
  %1738 = vmatpush1.msra.mxu0 0.0
  %1739 = vmatprep.subr.mxu0 0.0
  %1740 = vmatpush1.msra.mxu0 0.0
  %1741 = vmatprep.subr.mxu0 0.0
  %1742 = vmatpush1.msra.mxu0 0.0
  %1743 = vmatprep.subr.mxu0 0.0
  %1744 = vmatpush1.msra.mxu0 0.0
  %1745 = vmatprep.mubr.f32.mxu0 0.0
  %1746 = vmatmul.mubr.f32.gmra.mrb[0].mxu0 %v1670
  %v1747 = vpop.f32.mrb[0].mxu0
  %v1748 = vadd.f32 %v1652, %v1747
  %v1749 = vpop.f32.mrb[0].mxu0
  %1750 = vmatprep.mubr.f32.mxu0 0.0
  %1751 = vmatmul.mubr.f32.gmra.mrb[0].mxu0 %v1673
  %v1752 = vpop.f32.mrb[0].mxu0
  %v1753 = vadd.f32 %v1657, %v1752
  %v1754 = vpop.f32.mrb[0].mxu0
  %1755 = vmatprep.mubr.f32.mxu0 0.0
  %1756 = vmatmul.mubr.f32.gmra.mrb[0].mxu0 %v1676
  %v1757 = vpop.f32.mrb[0].mxu0
  %v1758 = vadd.f32 %v1662, %v1757
  %v1759 = vpop.f32.mrb[0].mxu0
  %1760 = vmatprep.mubr.f32.mxu0 0.0
  %1761 = vmatmul.mubr.f32.gmra.mrb[0].mxu0 %v1679
  %v1762 = vpop.f32.mrb[0].mxu0
  %v1763 = vadd.f32 %v1667, %v1762
  %v1764 = vpop.f32.mrb[0].mxu0
  %1765 = vdwg.mxu0
  %v1766 = vmax.f32 %v1748, 0.0
  %v1767 = vmax.f32 %v1753, 0.0
  %v1768 = vand.u32 2147483647, %v1748
  %v1769 = vand.u32 2147483647, %v1753
  %v1770 = vsub.f32 0.0, %v1768
  %v1771 = vsub.f32 0.0, %v1769
  %v1772 = vmul.f32 %v1770, 1.442695
  %v1773 = vpow.pop %v1772
  %v1774 = vmul.f32 %v1771, 1.442695
  %v1775 = vpow.pop %v1774
  %v1776 = vadd.f32 %v1773, 1.0
  %v1777 = vadd.f32 %v1775, 1.0
  %v1778 = vlog2.pop %v1776
  %v1779 = vmul.f32 %v1778, 0.6931472
  %v1780 = vlog2.pop %v1777
  %v1781 = vmul.f32 %v1780, 0.6931472
  %v1782 = vadd.f32 %v1766, %v1779
  %v1783 = vadd.f32 %v1767, %v1781
  %v1784 = vmul.f32 %v1636, %v1782
  %v1785 = vmul.f32 %v1641, %v1783
  %v1786 = vmul.f32 %v1758, %v1763
  %v1787 = vrot.slane %v1786, 4
  %v1788 = vadd.f32 %v1786, %v1787
  %v1789 = vrot.slane %v1788, 2
  %v1790 = vadd.f32 %v1788, %v1789
  %v1791 = vrot.slane %v1790, 1
  %v1792 = vadd.f32 %v1790, %v1791
  %v1793 = vmul.f32 %v1784, %v1792
  %v1794 = vmul.f32 %v1785, %v1792
  %v1795 = vsub.f32 0.0, %v1793
  %v1796 = vsub.f32 0.0, %v1794
  %v1797 = vmul.f32 %v1795, 1.442695
  %v1798 = vpow.pop %v1797
  %v1799 = vmul.f32 %v1796, 1.442695
  %v1800 = vpow.pop %v1799
  %v1801 = vadd.f32 %v1798, 1.0
  %v1802 = vadd.f32 %v1800, 1.0
  %v1803 = vrcp.pop %v1801
  %v1804 = vmul.f32 1.0, %v1803
  %v1805 = vrcp.pop %v1802
  %v1806 = vmul.f32 1.0, %v1805
  %v1807 = vmul.f32 %v1793, %v1804
  %v1808 = vmul.f32 %v1794, %v1806
  %v1809 = vsub.f32 0.0, %v1498
  %v1810 = vsub.f32 0.0, %v1503
  %v1811 = vmul.f32 %v1809, 1.442695
  %v1812 = vpow.pop %v1811
  %v1813 = vmul.f32 %v1810, 1.442695
  %v1814 = vpow.pop %v1813
  %v1815 = vadd.f32 %v1812, 1.0
  %v1816 = vadd.f32 %v1814, 1.0
  %v1817 = vrcp.pop %v1815
  %v1818 = vmul.f32 1.0, %v1817
  %v1819 = vrcp.pop %v1816
  %v1820 = vmul.f32 1.0, %v1819
  %v1821 = vmul.f32 %v1498, %v1818
  %v1822 = vmul.f32 %v1503, %v1820
  %v1823 = vmul.f32 %v1807, %v1821
  %v1824 = vmul.f32 %v1808, %v1822
  %s1825 = scalar_lea.vmem %s6, 16
  %v1826 = vld [vmem:[%s1825] sm:$0xff]
  %1828 = vset.pattern.permute.xlu0 0
  %1829 = vperm.xlu0 %1828, %v1310
  %v1830 = vpop.permute.xlu0 %1829
  %v1833 = vsel %vm342, %v1826, 0
  %1835 = vmatprep.subr.mxu0 0.0
  %1836 = vmatpush1.msra.mxu0 %v1823
  %1837 = vmatprep.subr.mxu0 0.0
  %1838 = vmatpush1.msra.mxu0 %v1824
  %1839 = vmatprep.subr.mxu0 0.0
  %1840 = vmatpush1.msra.mxu0 0.0
  %1841 = vmatprep.subr.mxu0 0.0
  %1842 = vmatpush1.msra.mxu0 0.0
  %1843 = vmatprep.subr.mxu0 0.0
  %1844 = vmatpush1.msra.mxu0 0.0
  %1845 = vmatprep.subr.mxu0 0.0
  %1846 = vmatpush1.msra.mxu0 0.0
  %1847 = vmatprep.subr.mxu0 0.0
  %1848 = vmatpush1.msra.mxu0 0.0
  %1849 = vmatprep.subr.mxu0 0.0
  %1850 = vmatpush1.msra.mxu0 0.0
  %1851 = vmatprep.subr.mxu0 0.0
  %1852 = vmatpush1.msra.mxu0 0.0
  %1853 = vmatprep.subr.mxu0 0.0
  %1854 = vmatpush1.msra.mxu0 0.0
  %1855 = vmatprep.subr.mxu0 0.0
  %1856 = vmatpush1.msra.mxu0 0.0
  %1857 = vmatprep.subr.mxu0 0.0
  %1858 = vmatpush1.msra.mxu0 0.0
  %1859 = vmatprep.subr.mxu0 0.0
  %1860 = vmatpush1.msra.mxu0 0.0
  %1861 = vmatprep.subr.mxu0 0.0
  %1862 = vmatpush1.msra.mxu0 0.0
  %1863 = vmatprep.subr.mxu0 0.0
  %1864 = vmatpush1.msra.mxu0 0.0
  %1865 = vmatprep.subr.mxu0 0.0
  %1866 = vmatpush1.msra.mxu0 0.0
  %1867 = vmatprep.subr.mxu0 0.0
  %1868 = vmatpush1.msra.mxu0 0.0
  %1869 = vmatprep.subr.mxu0 0.0
  %1870 = vmatpush1.msra.mxu0 0.0
  %1871 = vmatprep.subr.mxu0 0.0
  %1872 = vmatpush1.msra.mxu0 0.0
  %1873 = vmatprep.subr.mxu0 0.0
  %1874 = vmatpush1.msra.mxu0 0.0
  %1875 = vmatprep.subr.mxu0 0.0
  %1876 = vmatpush1.msra.mxu0 0.0
  %1877 = vmatprep.subr.mxu0 0.0
  %1878 = vmatpush1.msra.mxu0 0.0
  %1879 = vmatprep.subr.mxu0 0.0
  %1880 = vmatpush1.msra.mxu0 0.0
  %1881 = vmatprep.subr.mxu0 0.0
  %1882 = vmatpush1.msra.mxu0 0.0
  %1883 = vmatprep.subr.mxu0 0.0
  %1884 = vmatpush1.msra.mxu0 0.0
  %1885 = vmatprep.subr.mxu0 0.0
  %1886 = vmatpush1.msra.mxu0 0.0
  %1887 = vmatprep.subr.mxu0 0.0
  %1888 = vmatpush1.msra.mxu0 0.0
  %1889 = vmatprep.subr.mxu0 0.0
  %1890 = vmatpush1.msra.mxu0 0.0
  %1891 = vmatprep.subr.mxu0 0.0
  %1892 = vmatpush1.msra.mxu0 0.0
  %1893 = vmatprep.subr.mxu0 0.0
  %1894 = vmatpush1.msra.mxu0 0.0
  %1895 = vmatprep.subr.mxu0 0.0
  %1896 = vmatpush1.msra.mxu0 0.0
  %1897 = vmatprep.subr.mxu0 0.0
  %1898 = vmatpush1.msra.mxu0 0.0
  %1899 = vmatprep.mubr.f32.mxu0 0.0
  %1900 = vmatmul.mubr.f32.gmra.mrb[0].mxu0 %v1833
  %v1901 = vpop.f32.mrb[0].mxu0
  %v1902 = vadd.f32 %v1830, %v1901
  %v1903 = vpop.f32.mrb[0].mxu0
  %1904 = vdwg.mxu0
  %v1905 = vld [vmem:[%s10] sm:$0xff]
  %v1906 = vld [vmem:[%s10 + $0x8] sm:$0xff]
  %v1907 = vld [vmem:[%s10 + $0x10] sm:$0xff]
  %v1908 = vld [vmem:[%s10 + $0x18] sm:$0xff]
  %v1909 = vld [vmem:[%s10 + $0x20] sm:$0xff]
  %s1910 = scalar_lea.vmem %s1, 16
  %v1911 = vld [vmem:[%s1910] sm:$0xff]
  %s1912 = scalar_lea.vmem %s1, 24
  %v1913 = vld [vmem:[%s1912] sm:$0xff]
  %v1914 = vrot.slane %v1902, 4
  %v1915 = vadd.f32 %v1902, %v1914
  %v1916 = vrot.slane %v1915, 2
  %v1917 = vadd.f32 %v1915, %v1916
  %v1918 = vrot.slane %v1917, 1
  %v1919 = vadd.f32 %v1917, %v1918
  %v1920 = vmul.f32 %v1919, %v48
  %v1921 = vmul.f32 %v1902, %v1902
  %v1922 = vrot.slane %v1921, 4
  %v1923 = vadd.f32 %v1921, %v1922
  %v1924 = vrot.slane %v1923, 2
  %v1925 = vadd.f32 %v1923, %v1924
  %v1926 = vrot.slane %v1925, 1
  %v1927 = vadd.f32 %v1925, %v1926
  %v1928 = vmul.f32 %v1927, %v48
  %v1929 = vmul.f32 %v1920, %v1920
  %v1930 = vsub.f32 %v1928, %v1929
  %v1931 = vsub.f32 %v1902, %v1920
  %v1932 = vadd.f32 %v1930, 1e-05
  %v1933 = vrsqrt.pop %v1932
  %v1934 = vmul.f32 %v1931, %v1933
  %1936 = vset.pattern.permute.xlu0 0
  %1937 = vperm.xlu0 %1936, %v1911
  %v1938 = vpop.permute.xlu0 %1937
  %v1940 = vmul.f32 %v1934, %v1938
  %1942 = vset.pattern.permute.xlu0 0
  %1943 = vperm.xlu0 %1942, %v1913
  %v1944 = vpop.permute.xlu0 %1943
  %v1946 = vadd.f32 %v1940, %v1944
  %v1947 = vadd.f32 %v38, %v1946
  %v1948 = vld [vmem:[%s8] sm:$0xff]
  %v1949 = vld [vmem:[%s8 + $0x8] sm:$0xff]
  %v1950 = vld [vmem:[%s8 + $0x10] sm:$0xff]
  %v1951 = vld [vmem:[%s8 + $0x18] sm:$0xff]
  %1953 = vset.pattern.permute.xlu0 0
  %1954 = vperm.xlu0 %1953, %v1905
  %v1955 = vpop.permute.xlu0 %1954
  %1958 = vset.pattern.permute.xlu0 0
  %1959 = vperm.xlu0 %1958, %v1906
  %v1960 = vpop.permute.xlu0 %1959
  %1963 = vset.pattern.permute.xlu0 0
  %1964 = vperm.xlu0 %1963, %v1907
  %v1965 = vpop.permute.xlu0 %1964
  %1968 = vset.pattern.permute.xlu0 0
  %1969 = vperm.xlu0 %1968, %v1908
  %v1970 = vpop.permute.xlu0 %1969
  %v1973 = vsel %vm157, %v1948, 0
  %v1976 = vsel %vm157, %v1949, 0
  %v1979 = vsel %vm157, %v1950, 0
  %v1982 = vsel %vm157, %v1951, 0
  %1984 = vmatprep.subr.mxu0 0.0
  %1985 = vmatpush1.msra.mxu0 %v1947
  %1986 = vmatprep.subr.mxu0 0.0
  %1987 = vmatpush1.msra.mxu0 0.0
  %1988 = vmatprep.subr.mxu0 0.0
  %1989 = vmatpush1.msra.mxu0 0.0
  %1990 = vmatprep.subr.mxu0 0.0
  %1991 = vmatpush1.msra.mxu0 0.0
  %1992 = vmatprep.subr.mxu0 0.0
  %1993 = vmatpush1.msra.mxu0 0.0
  %1994 = vmatprep.subr.mxu0 0.0
  %1995 = vmatpush1.msra.mxu0 0.0
  %1996 = vmatprep.subr.mxu0 0.0
  %1997 = vmatpush1.msra.mxu0 0.0
  %1998 = vmatprep.subr.mxu0 0.0
  %1999 = vmatpush1.msra.mxu0 0.0
  %2000 = vmatprep.subr.mxu0 0.0
  %2001 = vmatpush1.msra.mxu0 0.0
  %2002 = vmatprep.subr.mxu0 0.0
  %2003 = vmatpush1.msra.mxu0 0.0
  %2004 = vmatprep.subr.mxu0 0.0
  %2005 = vmatpush1.msra.mxu0 0.0
  %2006 = vmatprep.subr.mxu0 0.0
  %2007 = vmatpush1.msra.mxu0 0.0
  %2008 = vmatprep.subr.mxu0 0.0
  %2009 = vmatpush1.msra.mxu0 0.0
  %2010 = vmatprep.subr.mxu0 0.0
  %2011 = vmatpush1.msra.mxu0 0.0
  %2012 = vmatprep.subr.mxu0 0.0
  %2013 = vmatpush1.msra.mxu0 0.0
  %2014 = vmatprep.subr.mxu0 0.0
  %2015 = vmatpush1.msra.mxu0 0.0
  %2016 = vmatprep.subr.mxu0 0.0
  %2017 = vmatpush1.msra.mxu0 0.0
  %2018 = vmatprep.subr.mxu0 0.0
  %2019 = vmatpush1.msra.mxu0 0.0
  %2020 = vmatprep.subr.mxu0 0.0
  %2021 = vmatpush1.msra.mxu0 0.0
  %2022 = vmatprep.subr.mxu0 0.0
  %2023 = vmatpush1.msra.mxu0 0.0
  %2024 = vmatprep.subr.mxu0 0.0
  %2025 = vmatpush1.msra.mxu0 0.0
  %2026 = vmatprep.subr.mxu0 0.0
  %2027 = vmatpush1.msra.mxu0 0.0
  %2028 = vmatprep.subr.mxu0 0.0
  %2029 = vmatpush1.msra.mxu0 0.0
  %2030 = vmatprep.subr.mxu0 0.0
  %2031 = vmatpush1.msra.mxu0 0.0
  %2032 = vmatprep.subr.mxu0 0.0
  %2033 = vmatpush1.msra.mxu0 0.0
  %2034 = vmatprep.subr.mxu0 0.0
  %2035 = vmatpush1.msra.mxu0 0.0
  %2036 = vmatprep.subr.mxu0 0.0
  %2037 = vmatpush1.msra.mxu0 0.0
  %2038 = vmatprep.subr.mxu0 0.0
  %2039 = vmatpush1.msra.mxu0 0.0
  %2040 = vmatprep.subr.mxu0 0.0
  %2041 = vmatpush1.msra.mxu0 0.0
  %2042 = vmatprep.subr.mxu0 0.0
  %2043 = vmatpush1.msra.mxu0 0.0
  %2044 = vmatprep.subr.mxu0 0.0
  %2045 = vmatpush1.msra.mxu0 0.0
  %2046 = vmatprep.subr.mxu0 0.0
  %2047 = vmatpush1.msra.mxu0 0.0
  %2048 = vmatprep.mubr.f32.mxu0 0.0
  %2049 = vmatmul.mubr.f32.gmra.mrb[0].mxu0 %v1973
  %v2050 = vpop.f32.mrb[0].mxu0
  %v2051 = vadd.f32 %v1955, %v2050
  %v2052 = vpop.f32.mrb[0].mxu0
  %2053 = vmatprep.mubr.f32.mxu0 0.0
  %2054 = vmatmul.mubr.f32.gmra.mrb[0].mxu0 %v1976
  %v2055 = vpop.f32.mrb[0].mxu0
  %v2056 = vadd.f32 %v1960, %v2055
  %v2057 = vpop.f32.mrb[0].mxu0
  %2058 = vmatprep.mubr.f32.mxu0 0.0
  %2059 = vmatmul.mubr.f32.gmra.mrb[0].mxu0 %v1979
  %v2060 = vpop.f32.mrb[0].mxu0
  %v2061 = vadd.f32 %v1965, %v2060
  %v2062 = vpop.f32.mrb[0].mxu0
  %2063 = vmatprep.mubr.f32.mxu0 0.0
  %2064 = vmatmul.mubr.f32.gmra.mrb[0].mxu0 %v1982
  %v2065 = vpop.f32.mrb[0].mxu0
  %v2066 = vadd.f32 %v1970, %v2065
  %v2067 = vpop.f32.mrb[0].mxu0
  %2068 = vdwg.mxu0
  %v2069 = vmul.f32 %v2051, 0.5
  %v2070 = vmul.f32 %v2056, 0.5
  %v2071 = vmul.f32 %v2061, 0.5
  %v2072 = vmul.f32 %v2066, 0.5
  %v2073 = vmul.f32 %v2051, 0.70710677
  %v2074 = vmul.f32 %v2056, 0.70710677
  %v2075 = vmul.f32 %v2061, 0.70710677
  %v2076 = vmul.f32 %v2066, 0.70710677
  %v2077 = vand.u32 2147483647, %v2073
  %v2078 = vand.u32 2147483647, %v2074
  %v2079 = vand.u32 2147483647, %v2075
  %v2080 = vand.u32 2147483647, %v2076
  %v2081 = vmul.f32 %v2077, 0.3275911
  %v2082 = vmul.f32 %v2078, 0.3275911
  %v2083 = vmul.f32 %v2079, 0.3275911
  %v2084 = vmul.f32 %v2080, 0.3275911
  %v2085 = vadd.f32 %v2081, 1.0
  %v2086 = vadd.f32 %v2082, 1.0
  %v2087 = vadd.f32 %v2083, 1.0
  %v2088 = vadd.f32 %v2084, 1.0
  %v2089 = vrcp.pop %v2085
  %v2090 = vmul.f32 1.0, %v2089
  %v2091 = vrcp.pop %v2086
  %v2092 = vmul.f32 1.0, %v2091
  %v2093 = vrcp.pop %v2087
  %v2094 = vmul.f32 1.0, %v2093
  %v2095 = vrcp.pop %v2088
  %v2096 = vmul.f32 1.0, %v2095
  %v2097 = vmul.f32 %v2090, 1.0614054
  %v2098 = vmul.f32 %v2092, 1.0614054
  %v2099 = vmul.f32 %v2094, 1.0614054
  %v2100 = vmul.f32 %v2096, 1.0614054
  %v2101 = vadd.f32 %v2097, -1.4531521
  %v2102 = vadd.f32 %v2098, -1.4531521
  %v2103 = vadd.f32 %v2099, -1.4531521
  %v2104 = vadd.f32 %v2100, -1.4531521
  %v2105 = vmul.f32 %v2101, %v2090
  %v2106 = vmul.f32 %v2102, %v2092
  %v2107 = vmul.f32 %v2103, %v2094
  %v2108 = vmul.f32 %v2104, %v2096
  %v2109 = vadd.f32 %v2105, 1.4214138
  %v2110 = vadd.f32 %v2106, 1.4214138
  %v2111 = vadd.f32 %v2107, 1.4214138
  %v2112 = vadd.f32 %v2108, 1.4214138
  %v2113 = vmul.f32 %v2109, %v2090
  %v2114 = vmul.f32 %v2110, %v2092
  %v2115 = vmul.f32 %v2111, %v2094
  %v2116 = vmul.f32 %v2112, %v2096
  %v2117 = vadd.f32 %v2113, -0.28449672
  %v2118 = vadd.f32 %v2114, -0.28449672
  %v2119 = vadd.f32 %v2115, -0.28449672
  %v2120 = vadd.f32 %v2116, -0.28449672
  %v2121 = vmul.f32 %v2117, %v2090
  %v2122 = vmul.f32 %v2118, %v2092
  %v2123 = vmul.f32 %v2119, %v2094
  %v2124 = vmul.f32 %v2120, %v2096
  %v2125 = vadd.f32 %v2121, 0.2548296
  %v2126 = vadd.f32 %v2122, 0.2548296
  %v2127 = vadd.f32 %v2123, 0.2548296
  %v2128 = vadd.f32 %v2124, 0.2548296
  %v2129 = vmul.f32 %v2125, %v2090
  %v2130 = vmul.f32 %v2126, %v2092
  %v2131 = vmul.f32 %v2127, %v2094
  %v2132 = vmul.f32 %v2128, %v2096
  %v2133 = vmul.f32 %v2073, %v2073
  %v2134 = vmul.f32 %v2074, %v2074
  %v2135 = vmul.f32 %v2075, %v2075
  %v2136 = vmul.f32 %v2076, %v2076
  %v2137 = vsub.f32 0.0, %v2133
  %v2138 = vsub.f32 0.0, %v2134
  %v2139 = vsub.f32 0.0, %v2135
  %v2140 = vsub.f32 0.0, %v2136
  %v2141 = vmul.f32 %v2137, 1.442695
  %v2142 = vpow.pop %v2141
  %v2143 = vmul.f32 %v2138, 1.442695
  %v2144 = vpow.pop %v2143
  %v2145 = vmul.f32 %v2139, 1.442695
  %v2146 = vpow.pop %v2145
  %v2147 = vmul.f32 %v2140, 1.442695
  %v2148 = vpow.pop %v2147
  %v2149 = vmul.f32 %v2129, %v2142
  %v2150 = vmul.f32 %v2130, %v2144
  %v2151 = vmul.f32 %v2131, %v2146
  %v2152 = vmul.f32 %v2132, %v2148
  %v2153 = vsub.f32 1.0, %v2149
  %v2154 = vsub.f32 1.0, %v2150
  %v2155 = vsub.f32 1.0, %v2151
  %v2156 = vsub.f32 1.0, %v2152
  %vm2157 = vcmp.ge.f32.partialorder %v2073, 0.0
  %vm2158 = vcmp.ge.f32.partialorder %v2074, 0.0
  %vm2159 = vcmp.ge.f32.partialorder %v2075, 0.0
  %vm2160 = vcmp.ge.f32.partialorder %v2076, 0.0
  %v2161 = vsub.f32 0.0, %v2153
  %v2162 = vsub.f32 0.0, %v2154
  %v2163 = vsub.f32 0.0, %v2155
  %v2164 = vsub.f32 0.0, %v2156
  %v2165 = vsel %vm2157, %v2153, %v2161
  %v2166 = vsel %vm2158, %v2154, %v2162
  %v2167 = vsel %vm2159, %v2155, %v2163
  %v2168 = vsel %vm2160, %v2156, %v2164
  %v2169 = vadd.f32 %v2165, 1.0
  %v2170 = vadd.f32 %v2166, 1.0
  %v2171 = vadd.f32 %v2167, 1.0
  %v2172 = vadd.f32 %v2168, 1.0
  %v2173 = vmul.f32 %v2069, %v2169
  %v2174 = vmul.f32 %v2070, %v2170
  %v2175 = vmul.f32 %v2071, %v2171
  %v2176 = vmul.f32 %v2072, %v2172
  %v2177 = vld [vmem:[%s9] sm:$0xff]
  %vm2178 = vcmask 261120
  %v2180 = vsel %vm2178, %v2177, 0
  %2182 = vmatprep.subr.mxu0 0.0
  %2183 = vmatpush1.msra.mxu0 %v2173
  %2184 = vmatprep.subr.mxu0 0.0
  %2185 = vmatpush1.msra.mxu0 %v2174
  %2186 = vmatprep.subr.mxu0 0.0
  %2187 = vmatpush1.msra.mxu0 %v2175
  %2188 = vmatprep.subr.mxu0 0.0
  %2189 = vmatpush1.msra.mxu0 %v2176
  %2190 = vmatprep.subr.mxu0 0.0
  %2191 = vmatpush1.msra.mxu0 0.0
  %2192 = vmatprep.subr.mxu0 0.0
  %2193 = vmatpush1.msra.mxu0 0.0
  %2194 = vmatprep.subr.mxu0 0.0
  %2195 = vmatpush1.msra.mxu0 0.0
  %2196 = vmatprep.subr.mxu0 0.0
  %2197 = vmatpush1.msra.mxu0 0.0
  %2198 = vmatprep.subr.mxu0 0.0
  %2199 = vmatpush1.msra.mxu0 0.0
  %2200 = vmatprep.subr.mxu0 0.0
  %2201 = vmatpush1.msra.mxu0 0.0
  %2202 = vmatprep.subr.mxu0 0.0
  %2203 = vmatpush1.msra.mxu0 0.0
  %2204 = vmatprep.subr.mxu0 0.0
  %2205 = vmatpush1.msra.mxu0 0.0
  %2206 = vmatprep.subr.mxu0 0.0
  %2207 = vmatpush1.msra.mxu0 0.0
  %2208 = vmatprep.subr.mxu0 0.0
  %2209 = vmatpush1.msra.mxu0 0.0
  %2210 = vmatprep.subr.mxu0 0.0
  %2211 = vmatpush1.msra.mxu0 0.0
  %2212 = vmatprep.subr.mxu0 0.0
  %2213 = vmatpush1.msra.mxu0 0.0
  %2214 = vmatprep.subr.mxu0 0.0
  %2215 = vmatpush1.msra.mxu0 0.0
  %2216 = vmatprep.subr.mxu0 0.0
  %2217 = vmatpush1.msra.mxu0 0.0
  %2218 = vmatprep.subr.mxu0 0.0
  %2219 = vmatpush1.msra.mxu0 0.0
  %2220 = vmatprep.subr.mxu0 0.0
  %2221 = vmatpush1.msra.mxu0 0.0
  %2222 = vmatprep.subr.mxu0 0.0
  %2223 = vmatpush1.msra.mxu0 0.0
  %2224 = vmatprep.subr.mxu0 0.0
  %2225 = vmatpush1.msra.mxu0 0.0
  %2226 = vmatprep.subr.mxu0 0.0
  %2227 = vmatpush1.msra.mxu0 0.0
  %2228 = vmatprep.subr.mxu0 0.0
  %2229 = vmatpush1.msra.mxu0 0.0
  %2230 = vmatprep.subr.mxu0 0.0
  %2231 = vmatpush1.msra.mxu0 0.0
  %2232 = vmatprep.subr.mxu0 0.0
  %2233 = vmatpush1.msra.mxu0 0.0
  %2234 = vmatprep.subr.mxu0 0.0
  %2235 = vmatpush1.msra.mxu0 0.0
  %2236 = vmatprep.subr.mxu0 0.0
  %2237 = vmatpush1.msra.mxu0 0.0
  %2238 = vmatprep.subr.mxu0 0.0
  %2239 = vmatpush1.msra.mxu0 0.0
  %2240 = vmatprep.subr.mxu0 0.0
  %2241 = vmatpush1.msra.mxu0 0.0
  %2242 = vmatprep.subr.mxu0 0.0
  %2243 = vmatpush1.msra.mxu0 0.0
  %2244 = vmatprep.subr.mxu0 0.0
  %2245 = vmatpush1.msra.mxu0 0.0
  %2246 = vmatprep.mubr.f32.mxu0 0.0
  %2247 = vmatmul.mubr.f32.gmra.mrb[0].mxu0 %v2180
  %v2248 = vpop.f32.mrb[0].mxu0
  %v2249 = vadd.f32 0.0, %v2248
  %v2250 = vpop.f32.mrb[0].mxu0
  %2251 = vdwg.mxu0
  %v2252 = vadd.f32 %v1947, %v2249
  %2254 = vset.pattern.permute.xlu0 0
  %2255 = vperm.xlu0 %2254, %v1909
  %v2256 = vpop.permute.xlu0 %2255
  %v2258 = vadd.f32 %v2252, %v2256
  %2259 = vst [vmem:[%s11] sm:$0xff] %v2258
  // Predicated region
  $region46: #{ssmamba_forward.1} parent=0 // pred_check
    _
  $region47: #{ssmamba_forward.1} parent=0 // pred_check_branch
    %2261 = sbr.rel (0) target = $region49
  $region48: #{ssmamba_forward.1} parent=0 // pred_region
    _
  $region49: #{ssmamba_forward.1} parent=0 // pred_fallthru
    _
  // Predicated region
  $region50: #{ssmamba_forward.1} parent=0 // pred_check
    _
  $region51: #{ssmamba_forward.1} parent=0 // pred_check_branch
    %2263 = sbr.rel (0) target = $region53
  $region52: #{ssmamba_forward.1} parent=0 // pred_region
    _
  $region53: #{ssmamba_forward.1} parent=0 // pred_fallthru
    _

</llo_original>
